<compile_context>
chip_gen: v6e
topology: v6e:2x2x1
jax: 0.10.0
libtpu: 0.0.40
codegen_flags: <defaults>
</compile_context>

<pallas_src>
import math

import jax
import jax.numpy as jnp
from jax.experimental import pallas as pl
from jax.experimental.pallas import tpu as pltpu

# ----------------------------- config (small) -----------------------------
B = 2            # batch
S = 8            # sequence length
H = 32           # hidden size
NUM_HEADS = 4
HEAD_DIM = H // NUM_HEADS
FFN = 64         # intermediate size
OUT_DIM = 4      # output_dim of the fc head
NUM_LAYERS = 2
LN_EPS = 1e-12
INIT_SCALE = 0.02


# ----------------------------- kernel helpers -----------------------------
def _layer_norm(x, g, b):
    mu = jnp.mean(x, axis=-1, keepdims=True)
    var = jnp.mean((x - mu) ** 2, axis=-1, keepdims=True)
    return (x - mu) * jax.lax.rsqrt(var + LN_EPS) * g + b


# ----------------------------- fused Pallas kernel -----------------------------
def fused_transformer_kernel(
        x_ref, pos_ref, emb_g_ref, emb_b_ref,
        wqkv_ref, bqkv_ref, wo_ref, bo_ref, g1_ref, be1_ref,
        w1_ref, b1_ref, w2_ref, b2_ref, g2_ref, be2_ref,
        fc_w_ref, fc_b_ref,
        out_ref):
    # ---- embeddings: add position embedding + LayerNorm ----
    x3 = x_ref[...] + pos_ref[...]                                   # [B,S,H]
    x = _layer_norm(x3, emb_g_ref[...], emb_b_ref[...]).reshape(B * S, H)

    # ---- encoder layers (statically unrolled; weights indexed with Python ints) ----
    for l in range(NUM_LAYERS):
        wqkv = wqkv_ref[l]          # [H, 3H]  (attention scale folded into wq)
        bqkv = bqkv_ref[l]          # [1, 3H]
        wo = wo_ref[l]              # [H, H]
        bo = bo_ref[l]              # [1, H]
        g1, be1 = g1_ref[l], be1_ref[l]
        w1, b1 = w1_ref[l], b1_ref[l]
        w2, b2 = w2_ref[l], b2_ref[l]
        g2, be2 = g2_ref[l], be2_ref[l]

        # fused QKV projection over the whole [B*S, H] slab
        qkv = jnp.dot(x, wqkv, preferred_element_type=jnp.float32) + bqkv  # [B*S, 3H]
        q = qkv[:, 0 * H:1 * H].reshape(B, S, H)
        k = qkv[:, 1 * H:2 * H].reshape(B, S, H)
        v = qkv[:, 2 * H:3 * H].reshape(B, S, H)

        # multi-head attention; heads statically unrolled, each head batched
        # over B; the head concat is folded into the output projection.
        attn = jnp.zeros((B * S, H), jnp.float32)
        for h in range(NUM_HEADS):
            sl = slice(h * HEAD_DIM, (h + 1) * HEAD_DIM)
            qh = q[:, :, sl]                                        # [B,S,D]
            kh = k[:, :, sl]
            vh = v[:, :, sl]
            # 1/sqrt(HEAD_DIM) already folded into wq/bq at init time.
            scores = jnp.einsum('bqd,bkd->bqk', qh, kh,
                                preferred_element_type=jnp.float32)  # [B,S,S]
            probs = jax.nn.softmax(scores, axis=-1)
            ctx = jnp.einsum('bqk,bkd->bqd', probs, vh,
                             preferred_element_type=jnp.float32)     # [B,S,D]
            attn = attn + jnp.dot(ctx.reshape(B * S, HEAD_DIM), wo[sl, :],
                                  preferred_element_type=jnp.float32)

        h1 = _layer_norm(x + attn + bo, g1, be1)                     # [B*S, H]

        # GELU FFN (tanh approximation, as in the synthetic reference config)
        ffn = jnp.dot(h1, w1, preferred_element_type=jnp.float32) + b1
        ffn = jax.nn.gelu(ffn, approximate=True)
        ffn = jnp.dot(ffn, w2, preferred_element_type=jnp.float32) + b2
        x = _layer_norm(h1 + ffn, g2, be2)

    # ---- classification head: fc(tanh(cls_hidden)) ----
    cls = x.reshape(B, S, H)[:, 0, :]                                # [B, H]
    out_ref[...] = (jnp.dot(jnp.tanh(cls), fc_w_ref[...],
                            preferred_element_type=jnp.float32)
                    + fc_b_ref[...])


# ----------------------------- pallas_call wrapper -----------------------------
def transformer_forward(embs, params):
    # embs: [B, 1, S, H] -> squeeze(dim=1) -> [B, S, H]
    x = jnp.squeeze(embs, axis=1)
    flat_inputs = [
        x, params["pos"], params["emb_g"], params["emb_b"],
        params["wqkv"], params["bqkv"], params["wo"], params["bo"],
        params["g1"], params["be1"], params["w1"], params["b1"],
        params["w2"], params["b2"], params["g2"], params["be2"],
        params["fc_w"], params["fc_b"],
    ]
    in_specs = [pl.BlockSpec(memory_space=pltpu.MemorySpace.VMEM)
                for _ in flat_inputs]
    return pl.pallas_call(
        fused_transformer_kernel,
        in_specs=in_specs,
        out_specs=pl.BlockSpec(memory_space=pltpu.MemorySpace.VMEM),
        out_shape=jax.ShapeDtypeStruct((B, OUT_DIM), jnp.float32),
    )(*flat_inputs)


# ----------------------------- parameter init -----------------------------
def init_params(key):
    keys = iter(jax.random.split(key, 2 + NUM_LAYERS * 6))

    def nrm(k, shape):
        return (INIT_SCALE * jax.random.normal(k, shape)).astype(jnp.float32)

    params = {
        "pos": nrm(next(keys), (S, H)),
        "emb_g": jnp.ones((1, H), jnp.float32),
        "emb_b": jnp.zeros((1, H), jnp.float32),
    }

    scale = 1.0 / math.sqrt(HEAD_DIM)
    names = ["wqkv", "bqkv", "wo", "bo", "g1", "be1",
             "w1", "b1", "w2", "b2", "g2", "be2"]
    stacked = {n: [] for n in names}
    for _ in range(NUM_LAYERS):
        # fold the 1/sqrt(head_dim) attention scale into wq / bq
        wq = nrm(next(keys), (H, H)) * scale
        bq = jnp.zeros((1, H), jnp.float32) * scale
        wk = nrm(next(keys), (H, H))
        bk = jnp.zeros((1, H), jnp.float32)
        wv = nrm(next(keys), (H, H))
        bv = jnp.zeros((1, H), jnp.float32)
        stacked["wqkv"].append(jnp.concatenate([wq, wk, wv], axis=1))   # [H, 3H]
        stacked["bqkv"].append(jnp.concatenate([bq, bk, bv], axis=1))   # [1, 3H]
        stacked["wo"].append(nrm(next(keys), (H, H)))
        stacked["bo"].append(jnp.zeros((1, H), jnp.float32))
        stacked["g1"].append(jnp.ones((1, H), jnp.float32))
        stacked["be1"].append(jnp.zeros((1, H), jnp.float32))
        stacked["w1"].append(nrm(next(keys), (H, FFN)))
        stacked["b1"].append(jnp.zeros((1, FFN), jnp.float32))
        stacked["w2"].append(nrm(next(keys), (FFN, H)))
        stacked["b2"].append(jnp.zeros((1, H), jnp.float32))
        stacked["g2"].append(jnp.ones((1, H), jnp.float32))
        stacked["be2"].append(jnp.zeros((1, H), jnp.float32))
    for n in names:
        params[n] = jnp.stack(stacked[n], axis=0)   # [NUM_LAYERS, ...]

    params["fc_w"] = nrm(next(keys), (H, OUT_DIM))
    params["fc_b"] = jnp.zeros((1, OUT_DIM), jnp.float32)
    return params


if __name__ == "__main__":
    key = jax.random.PRNGKey(0)
    embs = jax.random.normal(key, (B, 1, S, H), dtype=jnp.float32)
    params = init_params(jax.random.PRNGKey(42))

    pred = transformer_forward(embs, params)
    jax.block_until_ready(pred)
    assert pred.shape == (B, OUT_DIM)
    print("KERNEL_OK")
</pallas_src>

<mosaic_0001>
module attributes {stable_mosaic.version = 11 : i64} {
  func.func @fused_transformer_kernel(%arg0: memref<2x8x32xf32, #tpu.memory_space<vmem>>, %arg1: memref<8x32xf32, #tpu.memory_space<vmem>>, %arg2: memref<1x32xf32, #tpu.memory_space<vmem>>, %arg3: memref<1x32xf32, #tpu.memory_space<vmem>>, %arg4: memref<2x32x96xf32, #tpu.memory_space<vmem>>, %arg5: memref<2x1x96xf32, #tpu.memory_space<vmem>>, %arg6: memref<2x32x32xf32, #tpu.memory_space<vmem>>, %arg7: memref<2x1x32xf32, #tpu.memory_space<vmem>>, %arg8: memref<2x1x32xf32, #tpu.memory_space<vmem>>, %arg9: memref<2x1x32xf32, #tpu.memory_space<vmem>>, %arg10: memref<2x32x64xf32, #tpu.memory_space<vmem>>, %arg11: memref<2x1x64xf32, #tpu.memory_space<vmem>>, %arg12: memref<2x64x32xf32, #tpu.memory_space<vmem>>, %arg13: memref<2x1x32xf32, #tpu.memory_space<vmem>>, %arg14: memref<2x1x32xf32, #tpu.memory_space<vmem>>, %arg15: memref<2x1x32xf32, #tpu.memory_space<vmem>>, %arg16: memref<32x4xf32, #tpu.memory_space<vmem>>, %arg17: memref<1x4xf32, #tpu.memory_space<vmem>>, %arg18: memref<2x4xf32, #tpu.memory_space<vmem>>) attributes {dimension_semantics = [], scalar_prefetch = 0 : i64, scratch_operands = 0 : i64, tpu.core_type = #tpu.core_type<tc>} {
    %c0 = arith.constant 0 : index
    %c0_0 = arith.constant 0 : index
    %c0_1 = arith.constant 0 : index
    %0 = vector.load %arg0[%c0, %c0_0, %c0_1] : memref<2x8x32xf32, #tpu.memory_space<vmem>>, vector<2x8x32xf32>
    %c0_2 = arith.constant 0 : index
    %c0_3 = arith.constant 0 : index
    %1 = vector.load %arg1[%c0_2, %c0_3] : memref<8x32xf32, #tpu.memory_space<vmem>>, vector<8x32xf32>
    %2 = vector.shape_cast %1 : vector<8x32xf32> to vector<1x8x32xf32>
    %3 = vector.broadcast %2 : vector<1x8x32xf32> to vector<2x8x32xf32>
    %4 = arith.addf %0, %3 : vector<2x8x32xf32>
    %c0_4 = arith.constant 0 : index
    %c0_5 = arith.constant 0 : index
    %5 = vector.load %arg2[%c0_4, %c0_5] : memref<1x32xf32, #tpu.memory_space<vmem>>, vector<1x32xf32>
    %c0_6 = arith.constant 0 : index
    %c0_7 = arith.constant 0 : index
    %6 = vector.load %arg3[%c0_6, %c0_7] : memref<1x32xf32, #tpu.memory_space<vmem>>, vector<1x32xf32>
    %cst = arith.constant dense<0.000000e+00> : vector<2x8xf32>
    %7 = vector.multi_reduction <add>, %4, %cst [2] : vector<2x8x32xf32> to vector<2x8xf32>
    %8 = vector.shape_cast %7 : vector<2x8xf32> to vector<2x8x1xf32>
    %cst_8 = arith.constant 3.200000e+01 : f32
    %9 = vector.broadcast %cst_8 : f32 to vector<2x8x1xf32>
    %10 = arith.divf %8, %9 : vector<2x8x1xf32>
    %11 = vector.broadcast %10 : vector<2x8x1xf32> to vector<2x8x32xf32>
    %12 = arith.subf %4, %11 : vector<2x8x32xf32>
    %13 = arith.mulf %12, %12 : vector<2x8x32xf32>
    %cst_9 = arith.constant dense<0.000000e+00> : vector<2x8xf32>
    %14 = vector.multi_reduction <add>, %13, %cst_9 [2] : vector<2x8x32xf32> to vector<2x8xf32>
    %15 = vector.shape_cast %14 : vector<2x8xf32> to vector<2x8x1xf32>
    %cst_10 = arith.constant 3.200000e+01 : f32
    %16 = vector.broadcast %cst_10 : f32 to vector<2x8x1xf32>
    %17 = arith.divf %15, %16 : vector<2x8x1xf32>
    %18 = vector.broadcast %10 : vector<2x8x1xf32> to vector<2x8x32xf32>
    %19 = arith.subf %4, %18 : vector<2x8x32xf32>
    %cst_11 = arith.constant 9.99999996E-13 : f32
    %20 = vector.broadcast %cst_11 : f32 to vector<2x8x1xf32>
    %21 = arith.addf %17, %20 : vector<2x8x1xf32>
    %22 = math.rsqrt %21 : vector<2x8x1xf32>
    %23 = vector.broadcast %22 : vector<2x8x1xf32> to vector<2x8x32xf32>
    %24 = arith.mulf %19, %23 : vector<2x8x32xf32>
    %25 = vector.shape_cast %5 : vector<1x32xf32> to vector<1x1x32xf32>
    %26 = vector.broadcast %25 : vector<1x1x32xf32> to vector<2x8x32xf32>
    %27 = arith.mulf %24, %26 : vector<2x8x32xf32>
    %28 = vector.shape_cast %6 : vector<1x32xf32> to vector<1x1x32xf32>
    %29 = vector.broadcast %28 : vector<1x1x32xf32> to vector<2x8x32xf32>
    %30 = arith.addf %27, %29 : vector<2x8x32xf32>
    %31 = vector.shape_cast %30 : vector<2x8x32xf32> to vector<16x32xf32>
    %c0_12 = arith.constant 0 : index
    %c0_13 = arith.constant 0 : index
    %c0_14 = arith.constant 0 : index
    %32 = vector.load %arg4[%c0_12, %c0_13, %c0_14] : memref<2x32x96xf32, #tpu.memory_space<vmem>>, vector<1x32x96xf32>
    %33 = vector.shape_cast %32 : vector<1x32x96xf32> to vector<32x96xf32>
    %c0_15 = arith.constant 0 : index
    %c0_16 = arith.constant 0 : index
    %c0_17 = arith.constant 0 : index
    %34 = vector.load %arg5[%c0_15, %c0_16, %c0_17] : memref<2x1x96xf32, #tpu.memory_space<vmem>>, vector<1x1x96xf32>
    %35 = vector.shape_cast %34 : vector<1x1x96xf32> to vector<1x96xf32>
    %c0_18 = arith.constant 0 : index
    %c0_19 = arith.constant 0 : index
    %c0_20 = arith.constant 0 : index
    %36 = vector.load %arg6[%c0_18, %c0_19, %c0_20] : memref<2x32x32xf32, #tpu.memory_space<vmem>>, vector<1x32x32xf32>
    %37 = vector.shape_cast %36 : vector<1x32x32xf32> to vector<32x32xf32>
    %c0_21 = arith.constant 0 : index
    %c0_22 = arith.constant 0 : index
    %c0_23 = arith.constant 0 : index
    %38 = vector.load %arg7[%c0_21, %c0_22, %c0_23] : memref<2x1x32xf32, #tpu.memory_space<vmem>>, vector<1x1x32xf32>
    %39 = vector.shape_cast %38 : vector<1x1x32xf32> to vector<1x32xf32>
    %c0_24 = arith.constant 0 : index
    %c0_25 = arith.constant 0 : index
    %c0_26 = arith.constant 0 : index
    %40 = vector.load %arg8[%c0_24, %c0_25, %c0_26] : memref<2x1x32xf32, #tpu.memory_space<vmem>>, vector<1x1x32xf32>
    %41 = vector.shape_cast %40 : vector<1x1x32xf32> to vector<1x32xf32>
    %c0_27 = arith.constant 0 : index
    %c0_28 = arith.constant 0 : index
    %c0_29 = arith.constant 0 : index
    %42 = vector.load %arg9[%c0_27, %c0_28, %c0_29] : memref<2x1x32xf32, #tpu.memory_space<vmem>>, vector<1x1x32xf32>
    %43 = vector.shape_cast %42 : vector<1x1x32xf32> to vector<1x32xf32>
    %c0_30 = arith.constant 0 : index
    %c0_31 = arith.constant 0 : index
    %c0_32 = arith.constant 0 : index
    %44 = vector.load %arg10[%c0_30, %c0_31, %c0_32] : memref<2x32x64xf32, #tpu.memory_space<vmem>>, vector<1x32x64xf32>
    %45 = vector.shape_cast %44 : vector<1x32x64xf32> to vector<32x64xf32>
    %c0_33 = arith.constant 0 : index
    %c0_34 = arith.constant 0 : index
    %c0_35 = arith.constant 0 : index
    %46 = vector.load %arg11[%c0_33, %c0_34, %c0_35] : memref<2x1x64xf32, #tpu.memory_space<vmem>>, vector<1x1x64xf32>
    %47 = vector.shape_cast %46 : vector<1x1x64xf32> to vector<1x64xf32>
    %c0_36 = arith.constant 0 : index
    %c0_37 = arith.constant 0 : index
    %c0_38 = arith.constant 0 : index
    %48 = vector.load %arg12[%c0_36, %c0_37, %c0_38] : memref<2x64x32xf32, #tpu.memory_space<vmem>>, vector<1x64x32xf32>
    %49 = vector.shape_cast %48 : vector<1x64x32xf32> to vector<64x32xf32>
    %c0_39 = arith.constant 0 : index
    %c0_40 = arith.constant 0 : index
    %c0_41 = arith.constant 0 : index
    %50 = vector.load %arg13[%c0_39, %c0_40, %c0_41] : memref<2x1x32xf32, #tpu.memory_space<vmem>>, vector<1x1x32xf32>
    %51 = vector.shape_cast %50 : vector<1x1x32xf32> to vector<1x32xf32>
    %c0_42 = arith.constant 0 : index
    %c0_43 = arith.constant 0 : index
    %c0_44 = arith.constant 0 : index
    %52 = vector.load %arg14[%c0_42, %c0_43, %c0_44] : memref<2x1x32xf32, #tpu.memory_space<vmem>>, vector<1x1x32xf32>
    %53 = vector.shape_cast %52 : vector<1x1x32xf32> to vector<1x32xf32>
    %c0_45 = arith.constant 0 : index
    %c0_46 = arith.constant 0 : index
    %c0_47 = arith.constant 0 : index
    %54 = vector.load %arg15[%c0_45, %c0_46, %c0_47] : memref<2x1x32xf32, #tpu.memory_space<vmem>>, vector<1x1x32xf32>
    %55 = vector.shape_cast %54 : vector<1x1x32xf32> to vector<1x32xf32>
    %cst_48 = arith.constant dense<0.000000e+00> : vector<16x96xf32>
    %56 = tpu.matmul %31, %33, %cst_48 {dimension_numbers = #tpu.dot_dimension_numbers<[1], [0], [0], [1], [0, 0, 1, 1], [], []>} : vector<16x32xf32>, vector<32x96xf32>, vector<16x96xf32> -> vector<16x96xf32>
    %57 = vector.broadcast %35 : vector<1x96xf32> to vector<16x96xf32>
    %58 = arith.addf %56, %57 : vector<16x96xf32>
    %59 = vector.extract_strided_slice %58 {offsets = [0, 0], sizes = [16, 32], strides = [1, 1]} : vector<16x96xf32> to vector<16x32xf32>
    %60 = vector.shape_cast %59 : vector<16x32xf32> to vector<2x8x32xf32>
    %61 = vector.extract_strided_slice %58 {offsets = [0, 32], sizes = [16, 32], strides = [1, 1]} : vector<16x96xf32> to vector<16x32xf32>
    %62 = vector.shape_cast %61 : vector<16x32xf32> to vector<2x8x32xf32>
    %63 = vector.extract_strided_slice %58 {offsets = [0, 64], sizes = [16, 32], strides = [1, 1]} : vector<16x96xf32> to vector<16x32xf32>
    %64 = vector.shape_cast %63 : vector<16x32xf32> to vector<2x8x32xf32>
    %cst_49 = arith.constant 0.000000e+00 : f32
    %65 = vector.broadcast %cst_49 : f32 to vector<16x32xf32>
    %66 = vector.extract_strided_slice %60 {offsets = [0, 0, 0], sizes = [2, 8, 8], strides = [1, 1, 1]} : vector<2x8x32xf32> to vector<2x8x8xf32>
    %67 = vector.extract_strided_slice %62 {offsets = [0, 0, 0], sizes = [2, 8, 8], strides = [1, 1, 1]} : vector<2x8x32xf32> to vector<2x8x8xf32>
    %68 = vector.extract_strided_slice %64 {offsets = [0, 0, 0], sizes = [2, 8, 8], strides = [1, 1, 1]} : vector<2x8x32xf32> to vector<2x8x8xf32>
    "tpu.trace_start"() <{level = 10 : i32, message = "bqd,bkd->bqk"}> : () -> ()
    %cst_50 = arith.constant dense<0.000000e+00> : vector<2x8x8xf32>
    %69 = tpu.matmul %66, %67, %cst_50 {dimension_numbers = #tpu.dot_dimension_numbers<[2], [2], [1], [1], [0, 0, 0, 1, 1, 1], [0], [0]>} : vector<2x8x8xf32>, vector<2x8x8xf32>, vector<2x8x8xf32> -> vector<2x8x8xf32>
    "tpu.trace_stop"() : () -> ()
    %cst_51 = arith.constant dense<0xFF800000> : vector<2x8xf32>
    %70 = vector.multi_reduction <maximumf>, %69, %cst_51 [2] : vector<2x8x8xf32> to vector<2x8xf32>
    %cst_52 = arith.constant 0xFF800000 : f32
    %71 = vector.broadcast %cst_52 : f32 to vector<2x8xf32>
    %72 = arith.maximumf %71, %70 : vector<2x8xf32>
    %73 = vector.shape_cast %72 : vector<2x8xf32> to vector<2x8x1xf32>
    %74 = vector.broadcast %73 : vector<2x8x1xf32> to vector<2x8x8xf32>
    %75 = arith.subf %69, %74 : vector<2x8x8xf32>
    %76 = math.exp %75 : vector<2x8x8xf32>
    %cst_53 = arith.constant dense<0.000000e+00> : vector<2x8xf32>
    %77 = vector.multi_reduction <add>, %76, %cst_53 [2] : vector<2x8x8xf32> to vector<2x8xf32>
    %78 = vector.shape_cast %77 : vector<2x8xf32> to vector<2x8x1xf32>
    %79 = vector.broadcast %78 : vector<2x8x1xf32> to vector<2x8x8xf32>
    %80 = arith.divf %76, %79 : vector<2x8x8xf32>
    "tpu.trace_start"() <{level = 10 : i32, message = "bqk,bkd->bqd"}> : () -> ()
    %cst_54 = arith.constant dense<0.000000e+00> : vector<2x8x8xf32>
    %81 = tpu.matmul %80, %68, %cst_54 {dimension_numbers = #tpu.dot_dimension_numbers<[2], [1], [1], [2], [0, 0, 0, 1, 1, 2], [0], [0]>} : vector<2x8x8xf32>, vector<2x8x8xf32>, vector<2x8x8xf32> -> vector<2x8x8xf32>
    "tpu.trace_stop"() : () -> ()
    %82 = vector.shape_cast %81 : vector<2x8x8xf32> to vector<16x8xf32>
    %83 = vector.extract_strided_slice %37 {offsets = [0, 0], sizes = [8, 32], strides = [1, 1]} : vector<32x32xf32> to vector<8x32xf32>
    %cst_55 = arith.constant dense<0.000000e+00> : vector<16x32xf32>
    %84 = tpu.matmul %82, %83, %cst_55 {dimension_numbers = #tpu.dot_dimension_numbers<[1], [0], [0], [1], [0, 0, 1, 1], [], []>} : vector<16x8xf32>, vector<8x32xf32>, vector<16x32xf32> -> vector<16x32xf32>
    %85 = arith.addf %65, %84 : vector<16x32xf32>
    %86 = vector.extract_strided_slice %60 {offsets = [0, 0, 8], sizes = [2, 8, 8], strides = [1, 1, 1]} : vector<2x8x32xf32> to vector<2x8x8xf32>
    %87 = vector.extract_strided_slice %62 {offsets = [0, 0, 8], sizes = [2, 8, 8], strides = [1, 1, 1]} : vector<2x8x32xf32> to vector<2x8x8xf32>
    %88 = vector.extract_strided_slice %64 {offsets = [0, 0, 8], sizes = [2, 8, 8], strides = [1, 1, 1]} : vector<2x8x32xf32> to vector<2x8x8xf32>
    "tpu.trace_start"() <{level = 10 : i32, message = "bqd,bkd->bqk"}> : () -> ()
    %cst_56 = arith.constant dense<0.000000e+00> : vector<2x8x8xf32>
    %89 = tpu.matmul %86, %87, %cst_56 {dimension_numbers = #tpu.dot_dimension_numbers<[2], [2], [1], [1], [0, 0, 0, 1, 1, 1], [0], [0]>} : vector<2x8x8xf32>, vector<2x8x8xf32>, vector<2x8x8xf32> -> vector<2x8x8xf32>
    "tpu.trace_stop"() : () -> ()
    %cst_57 = arith.constant dense<0xFF800000> : vector<2x8xf32>
    %90 = vector.multi_reduction <maximumf>, %89, %cst_57 [2] : vector<2x8x8xf32> to vector<2x8xf32>
    %cst_58 = arith.constant 0xFF800000 : f32
    %91 = vector.broadcast %cst_58 : f32 to vector<2x8xf32>
    %92 = arith.maximumf %91, %90 : vector<2x8xf32>
    %93 = vector.shape_cast %92 : vector<2x8xf32> to vector<2x8x1xf32>
    %94 = vector.broadcast %93 : vector<2x8x1xf32> to vector<2x8x8xf32>
    %95 = arith.subf %89, %94 : vector<2x8x8xf32>
    %96 = math.exp %95 : vector<2x8x8xf32>
    %cst_59 = arith.constant dense<0.000000e+00> : vector<2x8xf32>
    %97 = vector.multi_reduction <add>, %96, %cst_59 [2] : vector<2x8x8xf32> to vector<2x8xf32>
    %98 = vector.shape_cast %97 : vector<2x8xf32> to vector<2x8x1xf32>
    %99 = vector.broadcast %98 : vector<2x8x1xf32> to vector<2x8x8xf32>
    %100 = arith.divf %96, %99 : vector<2x8x8xf32>
    "tpu.trace_start"() <{level = 10 : i32, message = "bqk,bkd->bqd"}> : () -> ()
    %cst_60 = arith.constant dense<0.000000e+00> : vector<2x8x8xf32>
    %101 = tpu.matmul %100, %88, %cst_60 {dimension_numbers = #tpu.dot_dimension_numbers<[2], [1], [1], [2], [0, 0, 0, 1, 1, 2], [0], [0]>} : vector<2x8x8xf32>, vector<2x8x8xf32>, vector<2x8x8xf32> -> vector<2x8x8xf32>
    "tpu.trace_stop"() : () -> ()
    %102 = vector.shape_cast %101 : vector<2x8x8xf32> to vector<16x8xf32>
    %103 = vector.extract_strided_slice %37 {offsets = [8, 0], sizes = [8, 32], strides = [1, 1]} : vector<32x32xf32> to vector<8x32xf32>
    %cst_61 = arith.constant dense<0.000000e+00> : vector<16x32xf32>
    %104 = tpu.matmul %102, %103, %cst_61 {dimension_numbers = #tpu.dot_dimension_numbers<[1], [0], [0], [1], [0, 0, 1, 1], [], []>} : vector<16x8xf32>, vector<8x32xf32>, vector<16x32xf32> -> vector<16x32xf32>
    %105 = arith.addf %85, %104 : vector<16x32xf32>
    %106 = vector.extract_strided_slice %60 {offsets = [0, 0, 16], sizes = [2, 8, 8], strides = [1, 1, 1]} : vector<2x8x32xf32> to vector<2x8x8xf32>
    %107 = vector.extract_strided_slice %62 {offsets = [0, 0, 16], sizes = [2, 8, 8], strides = [1, 1, 1]} : vector<2x8x32xf32> to vector<2x8x8xf32>
    %108 = vector.extract_strided_slice %64 {offsets = [0, 0, 16], sizes = [2, 8, 8], strides = [1, 1, 1]} : vector<2x8x32xf32> to vector<2x8x8xf32>
    "tpu.trace_start"() <{level = 10 : i32, message = "bqd,bkd->bqk"}> : () -> ()
    %cst_62 = arith.constant dense<0.000000e+00> : vector<2x8x8xf32>
    %109 = tpu.matmul %106, %107, %cst_62 {dimension_numbers = #tpu.dot_dimension_numbers<[2], [2], [1], [1], [0, 0, 0, 1, 1, 1], [0], [0]>} : vector<2x8x8xf32>, vector<2x8x8xf32>, vector<2x8x8xf32> -> vector<2x8x8xf32>
    "tpu.trace_stop"() : () -> ()
    %cst_63 = arith.constant dense<0xFF800000> : vector<2x8xf32>
    %110 = vector.multi_reduction <maximumf>, %109, %cst_63 [2] : vector<2x8x8xf32> to vector<2x8xf32>
    %cst_64 = arith.constant 0xFF800000 : f32
    %111 = vector.broadcast %cst_64 : f32 to vector<2x8xf32>
    %112 = arith.maximumf %111, %110 : vector<2x8xf32>
    %113 = vector.shape_cast %112 : vector<2x8xf32> to vector<2x8x1xf32>
    %114 = vector.broadcast %113 : vector<2x8x1xf32> to vector<2x8x8xf32>
    %115 = arith.subf %109, %114 : vector<2x8x8xf32>
    %116 = math.exp %115 : vector<2x8x8xf32>
    %cst_65 = arith.constant dense<0.000000e+00> : vector<2x8xf32>
    %117 = vector.multi_reduction <add>, %116, %cst_65 [2] : vector<2x8x8xf32> to vector<2x8xf32>
    %118 = vector.shape_cast %117 : vector<2x8xf32> to vector<2x8x1xf32>
    %119 = vector.broadcast %118 : vector<2x8x1xf32> to vector<2x8x8xf32>
    %120 = arith.divf %116, %119 : vector<2x8x8xf32>
    "tpu.trace_start"() <{level = 10 : i32, message = "bqk,bkd->bqd"}> : () -> ()
    %cst_66 = arith.constant dense<0.000000e+00> : vector<2x8x8xf32>
    %121 = tpu.matmul %120, %108, %cst_66 {dimension_numbers = #tpu.dot_dimension_numbers<[2], [1], [1], [2], [0, 0, 0, 1, 1, 2], [0], [0]>} : vector<2x8x8xf32>, vector<2x8x8xf32>, vector<2x8x8xf32> -> vector<2x8x8xf32>
    "tpu.trace_stop"() : () -> ()
    %122 = vector.shape_cast %121 : vector<2x8x8xf32> to vector<16x8xf32>
    %123 = vector.extract_strided_slice %37 {offsets = [16, 0], sizes = [8, 32], strides = [1, 1]} : vector<32x32xf32> to vector<8x32xf32>
    %cst_67 = arith.constant dense<0.000000e+00> : vector<16x32xf32>
    %124 = tpu.matmul %122, %123, %cst_67 {dimension_numbers = #tpu.dot_dimension_numbers<[1], [0], [0], [1], [0, 0, 1, 1], [], []>} : vector<16x8xf32>, vector<8x32xf32>, vector<16x32xf32> -> vector<16x32xf32>
    %125 = arith.addf %105, %124 : vector<16x32xf32>
    %126 = vector.extract_strided_slice %60 {offsets = [0, 0, 24], sizes = [2, 8, 8], strides = [1, 1, 1]} : vector<2x8x32xf32> to vector<2x8x8xf32>
    %127 = vector.extract_strided_slice %62 {offsets = [0, 0, 24], sizes = [2, 8, 8], strides = [1, 1, 1]} : vector<2x8x32xf32> to vector<2x8x8xf32>
    %128 = vector.extract_strided_slice %64 {offsets = [0, 0, 24], sizes = [2, 8, 8], strides = [1, 1, 1]} : vector<2x8x32xf32> to vector<2x8x8xf32>
    "tpu.trace_start"() <{level = 10 : i32, message = "bqd,bkd->bqk"}> : () -> ()
    %cst_68 = arith.constant dense<0.000000e+00> : vector<2x8x8xf32>
    %129 = tpu.matmul %126, %127, %cst_68 {dimension_numbers = #tpu.dot_dimension_numbers<[2], [2], [1], [1], [0, 0, 0, 1, 1, 1], [0], [0]>} : vector<2x8x8xf32>, vector<2x8x8xf32>, vector<2x8x8xf32> -> vector<2x8x8xf32>
    "tpu.trace_stop"() : () -> ()
    %cst_69 = arith.constant dense<0xFF800000> : vector<2x8xf32>
    %130 = vector.multi_reduction <maximumf>, %129, %cst_69 [2] : vector<2x8x8xf32> to vector<2x8xf32>
    %cst_70 = arith.constant 0xFF800000 : f32
    %131 = vector.broadcast %cst_70 : f32 to vector<2x8xf32>
    %132 = arith.maximumf %131, %130 : vector<2x8xf32>
    %133 = vector.shape_cast %132 : vector<2x8xf32> to vector<2x8x1xf32>
    %134 = vector.broadcast %133 : vector<2x8x1xf32> to vector<2x8x8xf32>
    %135 = arith.subf %129, %134 : vector<2x8x8xf32>
    %136 = math.exp %135 : vector<2x8x8xf32>
    %cst_71 = arith.constant dense<0.000000e+00> : vector<2x8xf32>
    %137 = vector.multi_reduction <add>, %136, %cst_71 [2] : vector<2x8x8xf32> to vector<2x8xf32>
    %138 = vector.shape_cast %137 : vector<2x8xf32> to vector<2x8x1xf32>
    %139 = vector.broadcast %138 : vector<2x8x1xf32> to vector<2x8x8xf32>
    %140 = arith.divf %136, %139 : vector<2x8x8xf32>
    "tpu.trace_start"() <{level = 10 : i32, message = "bqk,bkd->bqd"}> : () -> ()
    %cst_72 = arith.constant dense<0.000000e+00> : vector<2x8x8xf32>
    %141 = tpu.matmul %140, %128, %cst_72 {dimension_numbers = #tpu.dot_dimension_numbers<[2], [1], [1], [2], [0, 0, 0, 1, 1, 2], [0], [0]>} : vector<2x8x8xf32>, vector<2x8x8xf32>, vector<2x8x8xf32> -> vector<2x8x8xf32>
    "tpu.trace_stop"() : () -> ()
    %142 = vector.shape_cast %141 : vector<2x8x8xf32> to vector<16x8xf32>
    %143 = vector.extract_strided_slice %37 {offsets = [24, 0], sizes = [8, 32], strides = [1, 1]} : vector<32x32xf32> to vector<8x32xf32>
    %cst_73 = arith.constant dense<0.000000e+00> : vector<16x32xf32>
    %144 = tpu.matmul %142, %143, %cst_73 {dimension_numbers = #tpu.dot_dimension_numbers<[1], [0], [0], [1], [0, 0, 1, 1], [], []>} : vector<16x8xf32>, vector<8x32xf32>, vector<16x32xf32> -> vector<16x32xf32>
    %145 = arith.addf %125, %144 : vector<16x32xf32>
    %146 = arith.addf %31, %145 : vector<16x32xf32>
    %147 = vector.broadcast %39 : vector<1x32xf32> to vector<16x32xf32>
    %148 = arith.addf %146, %147 : vector<16x32xf32>
    %cst_74 = arith.constant dense<0.000000e+00> : vector<16xf32>
    %149 = vector.multi_reduction <add>, %148, %cst_74 [1] : vector<16x32xf32> to vector<16xf32>
    %150 = vector.shape_cast %149 : vector<16xf32> to vector<16x1xf32>
    %cst_75 = arith.constant 3.200000e+01 : f32
    %151 = vector.broadcast %cst_75 : f32 to vector<16x1xf32>
    %152 = arith.divf %150, %151 : vector<16x1xf32>
    %153 = vector.broadcast %152 : vector<16x1xf32> to vector<16x32xf32>
    %154 = arith.subf %148, %153 : vector<16x32xf32>
    %155 = arith.mulf %154, %154 : vector<16x32xf32>
    %cst_76 = arith.constant dense<0.000000e+00> : vector<16xf32>
    %156 = vector.multi_reduction <add>, %155, %cst_76 [1] : vector<16x32xf32> to vector<16xf32>
    %157 = vector.shape_cast %156 : vector<16xf32> to vector<16x1xf32>
    %cst_77 = arith.constant 3.200000e+01 : f32
    %158 = vector.broadcast %cst_77 : f32 to vector<16x1xf32>
    %159 = arith.divf %157, %158 : vector<16x1xf32>
    %160 = vector.broadcast %152 : vector<16x1xf32> to vector<16x32xf32>
    %161 = arith.subf %148, %160 : vector<16x32xf32>
    %cst_78 = arith.constant 9.99999996E-13 : f32
    %162 = vector.broadcast %cst_78 : f32 to vector<16x1xf32>
    %163 = arith.addf %159, %162 : vector<16x1xf32>
    %164 = math.rsqrt %163 : vector<16x1xf32>
    %165 = vector.broadcast %164 : vector<16x1xf32> to vector<16x32xf32>
    %166 = arith.mulf %161, %165 : vector<16x32xf32>
    %167 = vector.broadcast %41 : vector<1x32xf32> to vector<16x32xf32>
    %168 = arith.mulf %166, %167 : vector<16x32xf32>
    %169 = vector.broadcast %43 : vector<1x32xf32> to vector<16x32xf32>
    %170 = arith.addf %168, %169 : vector<16x32xf32>
    %cst_79 = arith.constant dense<0.000000e+00> : vector<16x64xf32>
    %171 = tpu.matmul %170, %45, %cst_79 {dimension_numbers = #tpu.dot_dimension_numbers<[1], [0], [0], [1], [0, 0, 1, 1], [], []>} : vector<16x32xf32>, vector<32x64xf32>, vector<16x64xf32> -> vector<16x64xf32>
    %172 = vector.broadcast %47 : vector<1x64xf32> to vector<16x64xf32>
    %173 = arith.addf %171, %172 : vector<16x64xf32>
    %174 = arith.mulf %173, %173 : vector<16x64xf32>
    %175 = arith.mulf %173, %174 : vector<16x64xf32>
    %cst_80 = arith.constant 4.471500e-02 : f32
    %176 = vector.broadcast %cst_80 : f32 to vector<16x64xf32>
    %177 = arith.mulf %176, %175 : vector<16x64xf32>
    %178 = arith.addf %173, %177 : vector<16x64xf32>
    %cst_81 = arith.constant 0.797884583 : f32
    %179 = vector.broadcast %cst_81 : f32 to vector<16x64xf32>
    %180 = arith.mulf %179, %178 : vector<16x64xf32>
    %181 = math.tanh %180 : vector<16x64xf32>
    %cst_82 = arith.constant 1.000000e+00 : f32
    %182 = vector.broadcast %cst_82 : f32 to vector<16x64xf32>
    %183 = arith.addf %182, %181 : vector<16x64xf32>
    %cst_83 = arith.constant 5.000000e-01 : f32
    %184 = vector.broadcast %cst_83 : f32 to vector<16x64xf32>
    %185 = arith.mulf %184, %183 : vector<16x64xf32>
    %186 = arith.mulf %173, %185 : vector<16x64xf32>
    %cst_84 = arith.constant dense<0.000000e+00> : vector<16x32xf32>
    %187 = tpu.matmul %186, %49, %cst_84 {dimension_numbers = #tpu.dot_dimension_numbers<[1], [0], [0], [1], [0, 0, 1, 1], [], []>} : vector<16x64xf32>, vector<64x32xf32>, vector<16x32xf32> -> vector<16x32xf32>
    %188 = vector.broadcast %51 : vector<1x32xf32> to vector<16x32xf32>
    %189 = arith.addf %187, %188 : vector<16x32xf32>
    %190 = arith.addf %170, %189 : vector<16x32xf32>
    %cst_85 = arith.constant dense<0.000000e+00> : vector<16xf32>
    %191 = vector.multi_reduction <add>, %190, %cst_85 [1] : vector<16x32xf32> to vector<16xf32>
    %192 = vector.shape_cast %191 : vector<16xf32> to vector<16x1xf32>
    %cst_86 = arith.constant 3.200000e+01 : f32
    %193 = vector.broadcast %cst_86 : f32 to vector<16x1xf32>
    %194 = arith.divf %192, %193 : vector<16x1xf32>
    %195 = vector.broadcast %194 : vector<16x1xf32> to vector<16x32xf32>
    %196 = arith.subf %190, %195 : vector<16x32xf32>
    %197 = arith.mulf %196, %196 : vector<16x32xf32>
    %cst_87 = arith.constant dense<0.000000e+00> : vector<16xf32>
    %198 = vector.multi_reduction <add>, %197, %cst_87 [1] : vector<16x32xf32> to vector<16xf32>
    %199 = vector.shape_cast %198 : vector<16xf32> to vector<16x1xf32>
    %cst_88 = arith.constant 3.200000e+01 : f32
    %200 = vector.broadcast %cst_88 : f32 to vector<16x1xf32>
    %201 = arith.divf %199, %200 : vector<16x1xf32>
    %202 = vector.broadcast %194 : vector<16x1xf32> to vector<16x32xf32>
    %203 = arith.subf %190, %202 : vector<16x32xf32>
    %cst_89 = arith.constant 9.99999996E-13 : f32
    %204 = vector.broadcast %cst_89 : f32 to vector<16x1xf32>
    %205 = arith.addf %201, %204 : vector<16x1xf32>
    %206 = math.rsqrt %205 : vector<16x1xf32>
    %207 = vector.broadcast %206 : vector<16x1xf32> to vector<16x32xf32>
    %208 = arith.mulf %203, %207 : vector<16x32xf32>
    %209 = vector.broadcast %53 : vector<1x32xf32> to vector<16x32xf32>
    %210 = arith.mulf %208, %209 : vector<16x32xf32>
    %211 = vector.broadcast %55 : vector<1x32xf32> to vector<16x32xf32>
    %212 = arith.addf %210, %211 : vector<16x32xf32>
    %c1 = arith.constant 1 : index
    %c0_90 = arith.constant 0 : index
    %c0_91 = arith.constant 0 : index
    %213 = vector.load %arg4[%c1, %c0_90, %c0_91] : memref<2x32x96xf32, #tpu.memory_space<vmem>>, vector<1x32x96xf32>
    %214 = vector.shape_cast %213 : vector<1x32x96xf32> to vector<32x96xf32>
    %c1_92 = arith.constant 1 : index
    %c0_93 = arith.constant 0 : index
    %c0_94 = arith.constant 0 : index
    %215 = vector.load %arg5[%c1_92, %c0_93, %c0_94] : memref<2x1x96xf32, #tpu.memory_space<vmem>>, vector<1x1x96xf32>
    %216 = vector.shape_cast %215 : vector<1x1x96xf32> to vector<1x96xf32>
    %c1_95 = arith.constant 1 : index
    %c0_96 = arith.constant 0 : index
    %c0_97 = arith.constant 0 : index
    %217 = vector.load %arg6[%c1_95, %c0_96, %c0_97] : memref<2x32x32xf32, #tpu.memory_space<vmem>>, vector<1x32x32xf32>
    %218 = vector.shape_cast %217 : vector<1x32x32xf32> to vector<32x32xf32>
    %c1_98 = arith.constant 1 : index
    %c0_99 = arith.constant 0 : index
    %c0_100 = arith.constant 0 : index
    %219 = vector.load %arg7[%c1_98, %c0_99, %c0_100] : memref<2x1x32xf32, #tpu.memory_space<vmem>>, vector<1x1x32xf32>
    %220 = vector.shape_cast %219 : vector<1x1x32xf32> to vector<1x32xf32>
    %c1_101 = arith.constant 1 : index
    %c0_102 = arith.constant 0 : index
    %c0_103 = arith.constant 0 : index
    %221 = vector.load %arg8[%c1_101, %c0_102, %c0_103] : memref<2x1x32xf32, #tpu.memory_space<vmem>>, vector<1x1x32xf32>
    %222 = vector.shape_cast %221 : vector<1x1x32xf32> to vector<1x32xf32>
    %c1_104 = arith.constant 1 : index
    %c0_105 = arith.constant 0 : index
    %c0_106 = arith.constant 0 : index
    %223 = vector.load %arg9[%c1_104, %c0_105, %c0_106] : memref<2x1x32xf32, #tpu.memory_space<vmem>>, vector<1x1x32xf32>
    %224 = vector.shape_cast %223 : vector<1x1x32xf32> to vector<1x32xf32>
    %c1_107 = arith.constant 1 : index
    %c0_108 = arith.constant 0 : index
    %c0_109 = arith.constant 0 : index
    %225 = vector.load %arg10[%c1_107, %c0_108, %c0_109] : memref<2x32x64xf32, #tpu.memory_space<vmem>>, vector<1x32x64xf32>
    %226 = vector.shape_cast %225 : vector<1x32x64xf32> to vector<32x64xf32>
    %c1_110 = arith.constant 1 : index
    %c0_111 = arith.constant 0 : index
    %c0_112 = arith.constant 0 : index
    %227 = vector.load %arg11[%c1_110, %c0_111, %c0_112] : memref<2x1x64xf32, #tpu.memory_space<vmem>>, vector<1x1x64xf32>
    %228 = vector.shape_cast %227 : vector<1x1x64xf32> to vector<1x64xf32>
    %c1_113 = arith.constant 1 : index
    %c0_114 = arith.constant 0 : index
    %c0_115 = arith.constant 0 : index
    %229 = vector.load %arg12[%c1_113, %c0_114, %c0_115] : memref<2x64x32xf32, #tpu.memory_space<vmem>>, vector<1x64x32xf32>
    %230 = vector.shape_cast %229 : vector<1x64x32xf32> to vector<64x32xf32>
    %c1_116 = arith.constant 1 : index
    %c0_117 = arith.constant 0 : index
    %c0_118 = arith.constant 0 : index
    %231 = vector.load %arg13[%c1_116, %c0_117, %c0_118] : memref<2x1x32xf32, #tpu.memory_space<vmem>>, vector<1x1x32xf32>
    %232 = vector.shape_cast %231 : vector<1x1x32xf32> to vector<1x32xf32>
    %c1_119 = arith.constant 1 : index
    %c0_120 = arith.constant 0 : index
    %c0_121 = arith.constant 0 : index
    %233 = vector.load %arg14[%c1_119, %c0_120, %c0_121] : memref<2x1x32xf32, #tpu.memory_space<vmem>>, vector<1x1x32xf32>
    %234 = vector.shape_cast %233 : vector<1x1x32xf32> to vector<1x32xf32>
    %c1_122 = arith.constant 1 : index
    %c0_123 = arith.constant 0 : index
    %c0_124 = arith.constant 0 : index
    %235 = vector.load %arg15[%c1_122, %c0_123, %c0_124] : memref<2x1x32xf32, #tpu.memory_space<vmem>>, vector<1x1x32xf32>
    %236 = vector.shape_cast %235 : vector<1x1x32xf32> to vector<1x32xf32>
    %cst_125 = arith.constant dense<0.000000e+00> : vector<16x96xf32>
    %237 = tpu.matmul %212, %214, %cst_125 {dimension_numbers = #tpu.dot_dimension_numbers<[1], [0], [0], [1], [0, 0, 1, 1], [], []>} : vector<16x32xf32>, vector<32x96xf32>, vector<16x96xf32> -> vector<16x96xf32>
    %238 = vector.broadcast %216 : vector<1x96xf32> to vector<16x96xf32>
    %239 = arith.addf %237, %238 : vector<16x96xf32>
    %240 = vector.extract_strided_slice %239 {offsets = [0, 0], sizes = [16, 32], strides = [1, 1]} : vector<16x96xf32> to vector<16x32xf32>
    %241 = vector.shape_cast %240 : vector<16x32xf32> to vector<2x8x32xf32>
    %242 = vector.extract_strided_slice %239 {offsets = [0, 32], sizes = [16, 32], strides = [1, 1]} : vector<16x96xf32> to vector<16x32xf32>
    %243 = vector.shape_cast %242 : vector<16x32xf32> to vector<2x8x32xf32>
    %244 = vector.extract_strided_slice %239 {offsets = [0, 64], sizes = [16, 32], strides = [1, 1]} : vector<16x96xf32> to vector<16x32xf32>
    %245 = vector.shape_cast %244 : vector<16x32xf32> to vector<2x8x32xf32>
    %cst_126 = arith.constant 0.000000e+00 : f32
    %246 = vector.broadcast %cst_126 : f32 to vector<16x32xf32>
    %247 = vector.extract_strided_slice %241 {offsets = [0, 0, 0], sizes = [2, 8, 8], strides = [1, 1, 1]} : vector<2x8x32xf32> to vector<2x8x8xf32>
    %248 = vector.extract_strided_slice %243 {offsets = [0, 0, 0], sizes = [2, 8, 8], strides = [1, 1, 1]} : vector<2x8x32xf32> to vector<2x8x8xf32>
    %249 = vector.extract_strided_slice %245 {offsets = [0, 0, 0], sizes = [2, 8, 8], strides = [1, 1, 1]} : vector<2x8x32xf32> to vector<2x8x8xf32>
    "tpu.trace_start"() <{level = 10 : i32, message = "bqd,bkd->bqk"}> : () -> ()
    %cst_127 = arith.constant dense<0.000000e+00> : vector<2x8x8xf32>
    %250 = tpu.matmul %247, %248, %cst_127 {dimension_numbers = #tpu.dot_dimension_numbers<[2], [2], [1], [1], [0, 0, 0, 1, 1, 1], [0], [0]>} : vector<2x8x8xf32>, vector<2x8x8xf32>, vector<2x8x8xf32> -> vector<2x8x8xf32>
    "tpu.trace_stop"() : () -> ()
    %cst_128 = arith.constant dense<0xFF800000> : vector<2x8xf32>
    %251 = vector.multi_reduction <maximumf>, %250, %cst_128 [2] : vector<2x8x8xf32> to vector<2x8xf32>
    %cst_129 = arith.constant 0xFF800000 : f32
    %252 = vector.broadcast %cst_129 : f32 to vector<2x8xf32>
    %253 = arith.maximumf %252, %251 : vector<2x8xf32>
    %254 = vector.shape_cast %253 : vector<2x8xf32> to vector<2x8x1xf32>
    %255 = vector.broadcast %254 : vector<2x8x1xf32> to vector<2x8x8xf32>
    %256 = arith.subf %250, %255 : vector<2x8x8xf32>
    %257 = math.exp %256 : vector<2x8x8xf32>
    %cst_130 = arith.constant dense<0.000000e+00> : vector<2x8xf32>
    %258 = vector.multi_reduction <add>, %257, %cst_130 [2] : vector<2x8x8xf32> to vector<2x8xf32>
    %259 = vector.shape_cast %258 : vector<2x8xf32> to vector<2x8x1xf32>
    %260 = vector.broadcast %259 : vector<2x8x1xf32> to vector<2x8x8xf32>
    %261 = arith.divf %257, %260 : vector<2x8x8xf32>
    "tpu.trace_start"() <{level = 10 : i32, message = "bqk,bkd->bqd"}> : () -> ()
    %cst_131 = arith.constant dense<0.000000e+00> : vector<2x8x8xf32>
    %262 = tpu.matmul %261, %249, %cst_131 {dimension_numbers = #tpu.dot_dimension_numbers<[2], [1], [1], [2], [0, 0, 0, 1, 1, 2], [0], [0]>} : vector<2x8x8xf32>, vector<2x8x8xf32>, vector<2x8x8xf32> -> vector<2x8x8xf32>
    "tpu.trace_stop"() : () -> ()
    %263 = vector.shape_cast %262 : vector<2x8x8xf32> to vector<16x8xf32>
    %264 = vector.extract_strided_slice %218 {offsets = [0, 0], sizes = [8, 32], strides = [1, 1]} : vector<32x32xf32> to vector<8x32xf32>
    %cst_132 = arith.constant dense<0.000000e+00> : vector<16x32xf32>
    %265 = tpu.matmul %263, %264, %cst_132 {dimension_numbers = #tpu.dot_dimension_numbers<[1], [0], [0], [1], [0, 0, 1, 1], [], []>} : vector<16x8xf32>, vector<8x32xf32>, vector<16x32xf32> -> vector<16x32xf32>
    %266 = arith.addf %246, %265 : vector<16x32xf32>
    %267 = vector.extract_strided_slice %241 {offsets = [0, 0, 8], sizes = [2, 8, 8], strides = [1, 1, 1]} : vector<2x8x32xf32> to vector<2x8x8xf32>
    %268 = vector.extract_strided_slice %243 {offsets = [0, 0, 8], sizes = [2, 8, 8], strides = [1, 1, 1]} : vector<2x8x32xf32> to vector<2x8x8xf32>
    %269 = vector.extract_strided_slice %245 {offsets = [0, 0, 8], sizes = [2, 8, 8], strides = [1, 1, 1]} : vector<2x8x32xf32> to vector<2x8x8xf32>
    "tpu.trace_start"() <{level = 10 : i32, message = "bqd,bkd->bqk"}> : () -> ()
    %cst_133 = arith.constant dense<0.000000e+00> : vector<2x8x8xf32>
    %270 = tpu.matmul %267, %268, %cst_133 {dimension_numbers = #tpu.dot_dimension_numbers<[2], [2], [1], [1], [0, 0, 0, 1, 1, 1], [0], [0]>} : vector<2x8x8xf32>, vector<2x8x8xf32>, vector<2x8x8xf32> -> vector<2x8x8xf32>
    "tpu.trace_stop"() : () -> ()
    %cst_134 = arith.constant dense<0xFF800000> : vector<2x8xf32>
    %271 = vector.multi_reduction <maximumf>, %270, %cst_134 [2] : vector<2x8x8xf32> to vector<2x8xf32>
    %cst_135 = arith.constant 0xFF800000 : f32
    %272 = vector.broadcast %cst_135 : f32 to vector<2x8xf32>
    %273 = arith.maximumf %272, %271 : vector<2x8xf32>
    %274 = vector.shape_cast %273 : vector<2x8xf32> to vector<2x8x1xf32>
    %275 = vector.broadcast %274 : vector<2x8x1xf32> to vector<2x8x8xf32>
    %276 = arith.subf %270, %275 : vector<2x8x8xf32>
    %277 = math.exp %276 : vector<2x8x8xf32>
    %cst_136 = arith.constant dense<0.000000e+00> : vector<2x8xf32>
    %278 = vector.multi_reduction <add>, %277, %cst_136 [2] : vector<2x8x8xf32> to vector<2x8xf32>
    %279 = vector.shape_cast %278 : vector<2x8xf32> to vector<2x8x1xf32>
    %280 = vector.broadcast %279 : vector<2x8x1xf32> to vector<2x8x8xf32>
    %281 = arith.divf %277, %280 : vector<2x8x8xf32>
    "tpu.trace_start"() <{level = 10 : i32, message = "bqk,bkd->bqd"}> : () -> ()
    %cst_137 = arith.constant dense<0.000000e+00> : vector<2x8x8xf32>
    %282 = tpu.matmul %281, %269, %cst_137 {dimension_numbers = #tpu.dot_dimension_numbers<[2], [1], [1], [2], [0, 0, 0, 1, 1, 2], [0], [0]>} : vector<2x8x8xf32>, vector<2x8x8xf32>, vector<2x8x8xf32> -> vector<2x8x8xf32>
    "tpu.trace_stop"() : () -> ()
    %283 = vector.shape_cast %282 : vector<2x8x8xf32> to vector<16x8xf32>
    %284 = vector.extract_strided_slice %218 {offsets = [8, 0], sizes = [8, 32], strides = [1, 1]} : vector<32x32xf32> to vector<8x32xf32>
    %cst_138 = arith.constant dense<0.000000e+00> : vector<16x32xf32>
    %285 = tpu.matmul %283, %284, %cst_138 {dimension_numbers = #tpu.dot_dimension_numbers<[1], [0], [0], [1], [0, 0, 1, 1], [], []>} : vector<16x8xf32>, vector<8x32xf32>, vector<16x32xf32> -> vector<16x32xf32>
    %286 = arith.addf %266, %285 : vector<16x32xf32>
    %287 = vector.extract_strided_slice %241 {offsets = [0, 0, 16], sizes = [2, 8, 8], strides = [1, 1, 1]} : vector<2x8x32xf32> to vector<2x8x8xf32>
    %288 = vector.extract_strided_slice %243 {offsets = [0, 0, 16], sizes = [2, 8, 8], strides = [1, 1, 1]} : vector<2x8x32xf32> to vector<2x8x8xf32>
    %289 = vector.extract_strided_slice %245 {offsets = [0, 0, 16], sizes = [2, 8, 8], strides = [1, 1, 1]} : vector<2x8x32xf32> to vector<2x8x8xf32>
    "tpu.trace_start"() <{level = 10 : i32, message = "bqd,bkd->bqk"}> : () -> ()
    %cst_139 = arith.constant dense<0.000000e+00> : vector<2x8x8xf32>
    %290 = tpu.matmul %287, %288, %cst_139 {dimension_numbers = #tpu.dot_dimension_numbers<[2], [2], [1], [1], [0, 0, 0, 1, 1, 1], [0], [0]>} : vector<2x8x8xf32>, vector<2x8x8xf32>, vector<2x8x8xf32> -> vector<2x8x8xf32>
    "tpu.trace_stop"() : () -> ()
    %cst_140 = arith.constant dense<0xFF800000> : vector<2x8xf32>
    %291 = vector.multi_reduction <maximumf>, %290, %cst_140 [2] : vector<2x8x8xf32> to vector<2x8xf32>
    %cst_141 = arith.constant 0xFF800000 : f32
    %292 = vector.broadcast %cst_141 : f32 to vector<2x8xf32>
    %293 = arith.maximumf %292, %291 : vector<2x8xf32>
    %294 = vector.shape_cast %293 : vector<2x8xf32> to vector<2x8x1xf32>
    %295 = vector.broadcast %294 : vector<2x8x1xf32> to vector<2x8x8xf32>
    %296 = arith.subf %290, %295 : vector<2x8x8xf32>
    %297 = math.exp %296 : vector<2x8x8xf32>
    %cst_142 = arith.constant dense<0.000000e+00> : vector<2x8xf32>
    %298 = vector.multi_reduction <add>, %297, %cst_142 [2] : vector<2x8x8xf32> to vector<2x8xf32>
    %299 = vector.shape_cast %298 : vector<2x8xf32> to vector<2x8x1xf32>
    %300 = vector.broadcast %299 : vector<2x8x1xf32> to vector<2x8x8xf32>
    %301 = arith.divf %297, %300 : vector<2x8x8xf32>
    "tpu.trace_start"() <{level = 10 : i32, message = "bqk,bkd->bqd"}> : () -> ()
    %cst_143 = arith.constant dense<0.000000e+00> : vector<2x8x8xf32>
    %302 = tpu.matmul %301, %289, %cst_143 {dimension_numbers = #tpu.dot_dimension_numbers<[2], [1], [1], [2], [0, 0, 0, 1, 1, 2], [0], [0]>} : vector<2x8x8xf32>, vector<2x8x8xf32>, vector<2x8x8xf32> -> vector<2x8x8xf32>
    "tpu.trace_stop"() : () -> ()
    %303 = vector.shape_cast %302 : vector<2x8x8xf32> to vector<16x8xf32>
    %304 = vector.extract_strided_slice %218 {offsets = [16, 0], sizes = [8, 32], strides = [1, 1]} : vector<32x32xf32> to vector<8x32xf32>
    %cst_144 = arith.constant dense<0.000000e+00> : vector<16x32xf32>
    %305 = tpu.matmul %303, %304, %cst_144 {dimension_numbers = #tpu.dot_dimension_numbers<[1], [0], [0], [1], [0, 0, 1, 1], [], []>} : vector<16x8xf32>, vector<8x32xf32>, vector<16x32xf32> -> vector<16x32xf32>
    %306 = arith.addf %286, %305 : vector<16x32xf32>
    %307 = vector.extract_strided_slice %241 {offsets = [0, 0, 24], sizes = [2, 8, 8], strides = [1, 1, 1]} : vector<2x8x32xf32> to vector<2x8x8xf32>
    %308 = vector.extract_strided_slice %243 {offsets = [0, 0, 24], sizes = [2, 8, 8], strides = [1, 1, 1]} : vector<2x8x32xf32> to vector<2x8x8xf32>
    %309 = vector.extract_strided_slice %245 {offsets = [0, 0, 24], sizes = [2, 8, 8], strides = [1, 1, 1]} : vector<2x8x32xf32> to vector<2x8x8xf32>
    "tpu.trace_start"() <{level = 10 : i32, message = "bqd,bkd->bqk"}> : () -> ()
    %cst_145 = arith.constant dense<0.000000e+00> : vector<2x8x8xf32>
    %310 = tpu.matmul %307, %308, %cst_145 {dimension_numbers = #tpu.dot_dimension_numbers<[2], [2], [1], [1], [0, 0, 0, 1, 1, 1], [0], [0]>} : vector<2x8x8xf32>, vector<2x8x8xf32>, vector<2x8x8xf32> -> vector<2x8x8xf32>
    "tpu.trace_stop"() : () -> ()
    %cst_146 = arith.constant dense<0xFF800000> : vector<2x8xf32>
    %311 = vector.multi_reduction <maximumf>, %310, %cst_146 [2] : vector<2x8x8xf32> to vector<2x8xf32>
    %cst_147 = arith.constant 0xFF800000 : f32
    %312 = vector.broadcast %cst_147 : f32 to vector<2x8xf32>
    %313 = arith.maximumf %312, %311 : vector<2x8xf32>
    %314 = vector.shape_cast %313 : vector<2x8xf32> to vector<2x8x1xf32>
    %315 = vector.broadcast %314 : vector<2x8x1xf32> to vector<2x8x8xf32>
    %316 = arith.subf %310, %315 : vector<2x8x8xf32>
    %317 = math.exp %316 : vector<2x8x8xf32>
    %cst_148 = arith.constant dense<0.000000e+00> : vector<2x8xf32>
    %318 = vector.multi_reduction <add>, %317, %cst_148 [2] : vector<2x8x8xf32> to vector<2x8xf32>
    %319 = vector.shape_cast %318 : vector<2x8xf32> to vector<2x8x1xf32>
    %320 = vector.broadcast %319 : vector<2x8x1xf32> to vector<2x8x8xf32>
    %321 = arith.divf %317, %320 : vector<2x8x8xf32>
    "tpu.trace_start"() <{level = 10 : i32, message = "bqk,bkd->bqd"}> : () -> ()
    %cst_149 = arith.constant dense<0.000000e+00> : vector<2x8x8xf32>
    %322 = tpu.matmul %321, %309, %cst_149 {dimension_numbers = #tpu.dot_dimension_numbers<[2], [1], [1], [2], [0, 0, 0, 1, 1, 2], [0], [0]>} : vector<2x8x8xf32>, vector<2x8x8xf32>, vector<2x8x8xf32> -> vector<2x8x8xf32>
    "tpu.trace_stop"() : () -> ()
    %323 = vector.shape_cast %322 : vector<2x8x8xf32> to vector<16x8xf32>
    %324 = vector.extract_strided_slice %218 {offsets = [24, 0], sizes = [8, 32], strides = [1, 1]} : vector<32x32xf32> to vector<8x32xf32>
    %cst_150 = arith.constant dense<0.000000e+00> : vector<16x32xf32>
    %325 = tpu.matmul %323, %324, %cst_150 {dimension_numbers = #tpu.dot_dimension_numbers<[1], [0], [0], [1], [0, 0, 1, 1], [], []>} : vector<16x8xf32>, vector<8x32xf32>, vector<16x32xf32> -> vector<16x32xf32>
    %326 = arith.addf %306, %325 : vector<16x32xf32>
    %327 = arith.addf %212, %326 : vector<16x32xf32>
    %328 = vector.broadcast %220 : vector<1x32xf32> to vector<16x32xf32>
    %329 = arith.addf %327, %328 : vector<16x32xf32>
    %cst_151 = arith.constant dense<0.000000e+00> : vector<16xf32>
    %330 = vector.multi_reduction <add>, %329, %cst_151 [1] : vector<16x32xf32> to vector<16xf32>
    %331 = vector.shape_cast %330 : vector<16xf32> to vector<16x1xf32>
    %cst_152 = arith.constant 3.200000e+01 : f32
    %332 = vector.broadcast %cst_152 : f32 to vector<16x1xf32>
    %333 = arith.divf %331, %332 : vector<16x1xf32>
    %334 = vector.broadcast %333 : vector<16x1xf32> to vector<16x32xf32>
    %335 = arith.subf %329, %334 : vector<16x32xf32>
    %336 = arith.mulf %335, %335 : vector<16x32xf32>
    %cst_153 = arith.constant dense<0.000000e+00> : vector<16xf32>
    %337 = vector.multi_reduction <add>, %336, %cst_153 [1] : vector<16x32xf32> to vector<16xf32>
    %338 = vector.shape_cast %337 : vector<16xf32> to vector<16x1xf32>
    %cst_154 = arith.constant 3.200000e+01 : f32
    %339 = vector.broadcast %cst_154 : f32 to vector<16x1xf32>
    %340 = arith.divf %338, %339 : vector<16x1xf32>
    %341 = vector.broadcast %333 : vector<16x1xf32> to vector<16x32xf32>
    %342 = arith.subf %329, %341 : vector<16x32xf32>
    %cst_155 = arith.constant 9.99999996E-13 : f32
    %343 = vector.broadcast %cst_155 : f32 to vector<16x1xf32>
    %344 = arith.addf %340, %343 : vector<16x1xf32>
    %345 = math.rsqrt %344 : vector<16x1xf32>
    %346 = vector.broadcast %345 : vector<16x1xf32> to vector<16x32xf32>
    %347 = arith.mulf %342, %346 : vector<16x32xf32>
    %348 = vector.broadcast %222 : vector<1x32xf32> to vector<16x32xf32>
    %349 = arith.mulf %347, %348 : vector<16x32xf32>
    %350 = vector.broadcast %224 : vector<1x32xf32> to vector<16x32xf32>
    %351 = arith.addf %349, %350 : vector<16x32xf32>
    %cst_156 = arith.constant dense<0.000000e+00> : vector<16x64xf32>
    %352 = tpu.matmul %351, %226, %cst_156 {dimension_numbers = #tpu.dot_dimension_numbers<[1], [0], [0], [1], [0, 0, 1, 1], [], []>} : vector<16x32xf32>, vector<32x64xf32>, vector<16x64xf32> -> vector<16x64xf32>
    %353 = vector.broadcast %228 : vector<1x64xf32> to vector<16x64xf32>
    %354 = arith.addf %352, %353 : vector<16x64xf32>
    %355 = arith.mulf %354, %354 : vector<16x64xf32>
    %356 = arith.mulf %354, %355 : vector<16x64xf32>
    %cst_157 = arith.constant 4.471500e-02 : f32
    %357 = vector.broadcast %cst_157 : f32 to vector<16x64xf32>
    %358 = arith.mulf %357, %356 : vector<16x64xf32>
    %359 = arith.addf %354, %358 : vector<16x64xf32>
    %cst_158 = arith.constant 0.797884583 : f32
    %360 = vector.broadcast %cst_158 : f32 to vector<16x64xf32>
    %361 = arith.mulf %360, %359 : vector<16x64xf32>
    %362 = math.tanh %361 : vector<16x64xf32>
    %cst_159 = arith.constant 1.000000e+00 : f32
    %363 = vector.broadcast %cst_159 : f32 to vector<16x64xf32>
    %364 = arith.addf %363, %362 : vector<16x64xf32>
    %cst_160 = arith.constant 5.000000e-01 : f32
    %365 = vector.broadcast %cst_160 : f32 to vector<16x64xf32>
    %366 = arith.mulf %365, %364 : vector<16x64xf32>
    %367 = arith.mulf %354, %366 : vector<16x64xf32>
    %cst_161 = arith.constant dense<0.000000e+00> : vector<16x32xf32>
    %368 = tpu.matmul %367, %230, %cst_161 {dimension_numbers = #tpu.dot_dimension_numbers<[1], [0], [0], [1], [0, 0, 1, 1], [], []>} : vector<16x64xf32>, vector<64x32xf32>, vector<16x32xf32> -> vector<16x32xf32>
    %369 = vector.broadcast %232 : vector<1x32xf32> to vector<16x32xf32>
    %370 = arith.addf %368, %369 : vector<16x32xf32>
    %371 = arith.addf %351, %370 : vector<16x32xf32>
    %cst_162 = arith.constant dense<0.000000e+00> : vector<16xf32>
    %372 = vector.multi_reduction <add>, %371, %cst_162 [1] : vector<16x32xf32> to vector<16xf32>
    %373 = vector.shape_cast %372 : vector<16xf32> to vector<16x1xf32>
    %cst_163 = arith.constant 3.200000e+01 : f32
    %374 = vector.broadcast %cst_163 : f32 to vector<16x1xf32>
    %375 = arith.divf %373, %374 : vector<16x1xf32>
    %376 = vector.broadcast %375 : vector<16x1xf32> to vector<16x32xf32>
    %377 = arith.subf %371, %376 : vector<16x32xf32>
    %378 = arith.mulf %377, %377 : vector<16x32xf32>
    %cst_164 = arith.constant dense<0.000000e+00> : vector<16xf32>
    %379 = vector.multi_reduction <add>, %378, %cst_164 [1] : vector<16x32xf32> to vector<16xf32>
    %380 = vector.shape_cast %379 : vector<16xf32> to vector<16x1xf32>
    %cst_165 = arith.constant 3.200000e+01 : f32
    %381 = vector.broadcast %cst_165 : f32 to vector<16x1xf32>
    %382 = arith.divf %380, %381 : vector<16x1xf32>
    %383 = vector.broadcast %375 : vector<16x1xf32> to vector<16x32xf32>
    %384 = arith.subf %371, %383 : vector<16x32xf32>
    %cst_166 = arith.constant 9.99999996E-13 : f32
    %385 = vector.broadcast %cst_166 : f32 to vector<16x1xf32>
    %386 = arith.addf %382, %385 : vector<16x1xf32>
    %387 = math.rsqrt %386 : vector<16x1xf32>
    %388 = vector.broadcast %387 : vector<16x1xf32> to vector<16x32xf32>
    %389 = arith.mulf %384, %388 : vector<16x32xf32>
    %390 = vector.broadcast %234 : vector<1x32xf32> to vector<16x32xf32>
    %391 = arith.mulf %389, %390 : vector<16x32xf32>
    %392 = vector.broadcast %236 : vector<1x32xf32> to vector<16x32xf32>
    %393 = arith.addf %391, %392 : vector<16x32xf32>
    %394 = vector.shape_cast %393 : vector<16x32xf32> to vector<2x8x32xf32>
    %395 = vector.extract_strided_slice %394 {offsets = [0, 0, 0], sizes = [2, 1, 32], strides = [1, 1, 1]} : vector<2x8x32xf32> to vector<2x1x32xf32>
    %396 = vector.shape_cast %395 : vector<2x1x32xf32> to vector<2x32xf32>
    %397 = math.tanh %396 : vector<2x32xf32>
    %c0_167 = arith.constant 0 : index
    %c0_168 = arith.constant 0 : index
    %398 = vector.load %arg16[%c0_167, %c0_168] : memref<32x4xf32, #tpu.memory_space<vmem>>, vector<32x4xf32>
    %cst_169 = arith.constant dense<0.000000e+00> : vector<2x4xf32>
    %399 = tpu.matmul %397, %398, %cst_169 {dimension_numbers = #tpu.dot_dimension_numbers<[1], [0], [0], [1], [0, 0, 1, 1], [], []>} : vector<2x32xf32>, vector<32x4xf32>, vector<2x4xf32> -> vector<2x4xf32>
    %c0_170 = arith.constant 0 : index
    %c0_171 = arith.constant 0 : index
    %400 = vector.load %arg17[%c0_170, %c0_171] : memref<1x4xf32, #tpu.memory_space<vmem>>, vector<1x4xf32>
    %401 = vector.broadcast %400 : vector<1x4xf32> to vector<2x4xf32>
    %402 = arith.addf %399, %401 : vector<2x4xf32>
    %c0_172 = arith.constant 0 : index
    %c0_173 = arith.constant 0 : index
    %403 = vector.load %arg18[%c0_172, %c0_173] : memref<2x4xf32, #tpu.memory_space<vmem>>, vector<2x4xf32>
    tpu.vector_store %arg18[%c0_172, %c0_173], %402 {strides = array<i32>} : memref<2x4xf32, #tpu.memory_space<vmem>>, vector<2x4xf32>,
    return
  }
}

</mosaic_0001>

<llo_original>
// kernel: tpu_custom_call.1
$region0: #{tpu_custom_call.1}
  #allocation0 [shape = 'u32[]', space=smem, size = 0x4, offset = 0x4, fixed_abs, tag = 'smem constant byte address 0x4 - core index']
  #allocation1 [shape = 'u32[144,128]{1,0:T(1,128)}', space=vmem, size = 0x12000, scoped, tag = 'internal scratch']
  %s0 = inlined_call_operand.vmem [shape: f32[2,8,32], index: 0, kind: input, shape index: {}]
  %s1 = inlined_call_operand.vmem [shape: f32[8,32], index: 1, kind: input, shape index: {}]
  %s2 = inlined_call_operand.vmem [shape: f32[1,32], index: 2, kind: input, shape index: {}]
  %s3 = inlined_call_operand.hbm [shape: f32[1,32], index: 3, kind: input, shape index: {}]
  %s4 = inlined_call_operand.vmem [shape: f32[2,32,96], index: 4, kind: input, shape index: {}]
  %s5 = inlined_call_operand.vmem [shape: f32[2,1,96], index: 5, kind: input, shape index: {}]
  %s6 = inlined_call_operand.vmem [shape: f32[2,32,32], index: 6, kind: input, shape index: {}]
  %s7 = inlined_call_operand.vmem [shape: f32[2,1,32], index: 7, kind: input, shape index: {}]
  %s8 = inlined_call_operand.vmem [shape: f32[2,1,32], index: 8, kind: input, shape index: {}]
  %s9 = inlined_call_operand.vmem [shape: f32[2,1,32], index: 9, kind: input, shape index: {}]
  %s10 = inlined_call_operand.vmem [shape: f32[2,32,64], index: 10, kind: input, shape index: {}]
  %s11 = inlined_call_operand.vmem [shape: f32[2,1,64], index: 11, kind: input, shape index: {}]
  %s12 = inlined_call_operand.vmem [shape: f32[2,64,32], index: 12, kind: input, shape index: {}]
  %s13 = inlined_call_operand.vmem [shape: f32[2,1,32], index: 13, kind: input, shape index: {}]
  %s14 = inlined_call_operand.vmem [shape: f32[2,1,32], index: 14, kind: input, shape index: {}]
  %s15 = inlined_call_operand.vmem [shape: f32[2,1,32], index: 15, kind: input, shape index: {}]
  %s16 = inlined_call_operand.vmem [shape: f32[32,4], index: 16, kind: input, shape index: {}]
  %s17 = inlined_call_operand.vmem [shape: f32[1,4], index: 17, kind: input, shape index: {}]
  %s18 = inlined_call_operand.hbm [shape: f32[2,4], index: 18, kind: output, shape index: {}]
  %s19 = sld [smem:[#allocation0]]
  $region86: #{tpu_custom_call.1} parent=0
    _
  %s21 = ssub.s32 1, %s19
  %s22 = scalar_select 0, %s21, %s19
  $region1: #{tpu_custom_call.1} parent=0
    #allocation2 [shape = 'u8[512]{0}', space=vmem, size = 0x400, scoped, tag = 'input window, operand 3, single buffered']
    #allocation3 [shape = 's32[1]{0}', space=sflag, size = 0x4, scoped, tag = 'scoped memory for tpu_custom_call.1']
    #allocation4 [shape = 's32[1]{0}', space=sflag, size = 0x4, scoped, tag = 'scoped memory for tpu_custom_call.1']
    #allocation5 [shape = 'u8[1024]{0}', space=vmem, size = 0x400, scoped, tag = 'output window, operand 0, single buffered']
    %23 = vsyncpa [#allocation3], 0
    %24 = vsyncpa [#allocation4], 0
    // Predicated region
    $region2: #{tpu_custom_call.1} parent=1 // pred_check
      _
    $region3: #{tpu_custom_call.1} parent=1 // pred_check_branch
      %26 = sbr.rel (0) target = $region5
    $region4: #{tpu_custom_call.1} parent=1 // pred_region
      _
    $region5: #{tpu_custom_call.1} parent=1 // pred_fallthru
      _
    // Predicated region
    $region6: #{tpu_custom_call.1} parent=1 // pred_check
      _
    $region7: #{tpu_custom_call.1} parent=1 // pred_check_branch
      %28 = sbr.rel (0) target = $region9
    $region8: #{tpu_custom_call.1} parent=1 // pred_region
      _
    $region9: #{tpu_custom_call.1} parent=1 // pred_fallthru
      _
    // Predicated region
    $region10: #{tpu_custom_call.1} parent=1 // pred_check
      _
    $region11: #{tpu_custom_call.1} parent=1 // pred_check_branch
      %30 = sbr.rel (0) target = $region13
    $region12: #{tpu_custom_call.1} parent=1 // pred_region
      _
    $region13: #{tpu_custom_call.1} parent=1 // pred_fallthru
      _
    // Predicated region
    $region14: #{tpu_custom_call.1} parent=1 // pred_check
      _
    $region15: #{tpu_custom_call.1} parent=1 // pred_check_branch
      %32 = sbr.rel (0) target = $region17
    $region16: #{tpu_custom_call.1} parent=1 // pred_region
      %s34 = ssub.s32 16, 16
      %35 = vsyncadd [#allocation3], %s34
      %s37 = sshll.u32 [#allocation2], 4
      %s38 = int_to_ptr.vmem [resolvable:$true] %s37
      %40 = dma.hbm_to_vmem [thread:$0]  %s3, 16, %s38, [#allocation3]
    $region17: #{tpu_custom_call.1} parent=1 // pred_fallthru
      _
    // Predicated region
    $region18: #{tpu_custom_call.1} parent=1 // pred_check
      _
    $region19: #{tpu_custom_call.1} parent=1 // pred_check_branch
      %42 = sbr.rel (0) target = $region21
    $region20: #{tpu_custom_call.1} parent=1 // pred_region
      _
    $region21: #{tpu_custom_call.1} parent=1 // pred_fallthru
      _
    // Predicated region
    $region22: #{tpu_custom_call.1} parent=1 // pred_check
      _
    $region23: #{tpu_custom_call.1} parent=1 // pred_check_branch
      %44 = sbr.rel (0) target = $region25
    $region24: #{tpu_custom_call.1} parent=1 // pred_region
      _
    $region25: #{tpu_custom_call.1} parent=1 // pred_fallthru
      _
    // Predicated region
    $region26: #{tpu_custom_call.1} parent=1 // pred_check
      _
    $region27: #{tpu_custom_call.1} parent=1 // pred_check_branch
      %46 = sbr.rel (0) target = $region29
    $region28: #{tpu_custom_call.1} parent=1 // pred_region
      _
    $region29: #{tpu_custom_call.1} parent=1 // pred_fallthru
      _
    // Predicated region
    $region30: #{tpu_custom_call.1} parent=1 // pred_check
      _
    $region31: #{tpu_custom_call.1} parent=1 // pred_check_branch
      %48 = sbr.rel (0) target = $region33
    $region32: #{tpu_custom_call.1} parent=1 // pred_region
      _
    $region33: #{tpu_custom_call.1} parent=1 // pred_fallthru
      _
    // Predicated region
    $region34: #{tpu_custom_call.1} parent=1 // pred_check
      _
    $region35: #{tpu_custom_call.1} parent=1 // pred_check_branch
      %50 = sbr.rel (0) target = $region37
    $region36: #{tpu_custom_call.1} parent=1 // pred_region
      _
    $region37: #{tpu_custom_call.1} parent=1 // pred_fallthru
      _
    // Predicated region
    $region38: #{tpu_custom_call.1} parent=1 // pred_check
      _
    $region39: #{tpu_custom_call.1} parent=1 // pred_check_branch
      %52 = sbr.rel (0) target = $region41
    $region40: #{tpu_custom_call.1} parent=1 // pred_region
      _
    $region41: #{tpu_custom_call.1} parent=1 // pred_fallthru
      _
    // Predicated region
    $region42: #{tpu_custom_call.1} parent=1 // pred_check
      _
    $region43: #{tpu_custom_call.1} parent=1 // pred_check_branch
      %54 = sbr.rel (0) target = $region45
    $region44: #{tpu_custom_call.1} parent=1 // pred_region
      _
    $region45: #{tpu_custom_call.1} parent=1 // pred_fallthru
      _
    // Predicated region
    $region46: #{tpu_custom_call.1} parent=1 // pred_check
      _
    $region47: #{tpu_custom_call.1} parent=1 // pred_check_branch
      %56 = sbr.rel (0) target = $region49
    $region48: #{tpu_custom_call.1} parent=1 // pred_region
      _
    $region49: #{tpu_custom_call.1} parent=1 // pred_fallthru
      _
    // Predicated region
    $region50: #{tpu_custom_call.1} parent=1 // pred_check
      _
    $region51: #{tpu_custom_call.1} parent=1 // pred_check_branch
      %58 = sbr.rel (0) target = $region53
    $region52: #{tpu_custom_call.1} parent=1 // pred_region
      _
    $region53: #{tpu_custom_call.1} parent=1 // pred_fallthru
      _
    // Predicated region
    $region54: #{tpu_custom_call.1} parent=1 // pred_check
      _
    $region55: #{tpu_custom_call.1} parent=1 // pred_check_branch
      %60 = sbr.rel (0) target = $region57
    $region56: #{tpu_custom_call.1} parent=1 // pred_region
      _
    $region57: #{tpu_custom_call.1} parent=1 // pred_fallthru
      _
    // Predicated region
    $region58: #{tpu_custom_call.1} parent=1 // pred_check
      _
    $region59: #{tpu_custom_call.1} parent=1 // pred_check_branch
      %62 = sbr.rel (0) target = $region61
    $region60: #{tpu_custom_call.1} parent=1 // pred_region
      _
    $region61: #{tpu_custom_call.1} parent=1 // pred_fallthru
      _
    // Predicated region
    $region62: #{tpu_custom_call.1} parent=1 // pred_check
      _
    $region63: #{tpu_custom_call.1} parent=1 // pred_check_branch
      %64 = sbr.rel (0) target = $region65
    $region64: #{tpu_custom_call.1} parent=1 // pred_region
      _
    $region65: #{tpu_custom_call.1} parent=1 // pred_fallthru
      _
    // Predicated region
    $region66: #{tpu_custom_call.1} parent=1 // pred_check
      _
    $region67: #{tpu_custom_call.1} parent=1 // pred_check_branch
      %66 = sbr.rel (0) target = $region69
    $region68: #{tpu_custom_call.1} parent=1 // pred_region
      _
    $region69: #{tpu_custom_call.1} parent=1 // pred_fallthru
      _
    // Predicated region
    $region70: #{tpu_custom_call.1} parent=1 // pred_check
      _
    $region71: #{tpu_custom_call.1} parent=1 // pred_check_branch
      %68 = sbr.rel (0) target = $region73
    $region72: #{tpu_custom_call.1} parent=1 // pred_region
      _
    $region73: #{tpu_custom_call.1} parent=1 // pred_fallthru
      _
    // Predicated region
    $region74: #{tpu_custom_call.1} parent=1 // pred_check
      _
    $region75: #{tpu_custom_call.1} parent=1 // pred_check_branch
      %70 = sbr.rel (0) target = $region77
    $region76: #{tpu_custom_call.1} parent=1 // pred_region
      %71 = dma.done [#allocation3], 16
    $region77: #{tpu_custom_call.1} parent=1 // pred_fallthru
      _
    %v72 = vld [vmem:[%s0] sm:$0xff]
    %v73 = vld [vmem:[%s0 + $0x8] sm:$0xff]
    %v74 = vld [vmem:[%s1] sm:$0xff]
    %v75 = vadd.f32 %v72, %v74
    %v76 = vadd.f32 %v73, %v74
    %v77 = vld [vmem:[%s2] sm:$0x1]
    %v78 = vld [vmem:[#allocation2] sm:$0x1]
    %vm79 = vcmask 261120
    %v80 = vsel %vm79, %v75, 0.0
    %81 = vadd.xlane.f32.xlu0 %v80
    %v82 = vpop.xlane.xlu0 %81
    %v83 = vsel %vm79, %v76, 0.0
    %84 = vadd.xlane.f32.xlu0 %v83
    %v85 = vpop.xlane.xlu0 %84
    %v86 = vrcp.pop 32.0
    %v87 = vmul.f32 %v82, %v86
    %v88 = vmul.f32 %v85, %v86
    %v89 = vsub.f32 %v75, %v87
    %v90 = vsub.f32 %v76, %v88
    %v91 = vmul.f32 %v89, %v89
    %v92 = vmul.f32 %v90, %v90
    %v93 = vsel %vm79, %v91, 0.0
    %94 = vadd.xlane.f32.xlu0 %v93
    %v95 = vpop.xlane.xlu0 %94
    %v96 = vsel %vm79, %v92, 0.0
    %97 = vadd.xlane.f32.xlu0 %v96
    %v98 = vpop.xlane.xlu0 %97
    %v99 = vmul.f32 %v95, %v86
    %v100 = vmul.f32 %v98, %v86
    %v101 = vadd.f32 %v99, 1e-12
    %v102 = vadd.f32 %v100, 1e-12
    %v103 = vrsqrt.pop %v101
    %v104 = vrsqrt.pop %v102
    %v105 = vmul.f32 %v89, %v103
    %v106 = vmul.f32 %v90, %v104
    %v108 = vlaneseq
    %v109 = vshrl.u32 %v108, 7
    %v110 = vsub.s32 0, %v109
    %v111 = vrot.slane %v77, %v110
    %v113 = vmul.f32 %v105, %v111
    %v114 = vmul.f32 %v106, %v111
    %v116 = vlaneseq
    %v117 = vshrl.u32 %v116, 7
    %v118 = vsub.s32 0, %v117
    %v119 = vrot.slane %v78, %v118
    %v121 = vadd.f32 %v113, %v119
    %v122 = vadd.f32 %v114, %v119
    %v123 = vld [vmem:[%s4] sm:$0xff]
    %v124 = vld [vmem:[%s4 + $0x8] sm:$0xff]
    %v125 = vld [vmem:[%s4 + $0x10] sm:$0xff]
    %v126 = vld [vmem:[%s4 + $0x18] sm:$0xff]
    %v127 = vld [vmem:[%s5] sm:$0x1]
    %v128 = vld [vmem:[%s6] sm:$0xff]
    %v129 = vld [vmem:[%s6 + $0x8] sm:$0xff]
    %v130 = vld [vmem:[%s6 + $0x10] sm:$0xff]
    %v131 = vld [vmem:[%s6 + $0x18] sm:$0xff]
    %v132 = vld [vmem:[%s7] sm:$0x1]
    %v133 = vld [vmem:[%s8] sm:$0x1]
    %v134 = vld [vmem:[%s9] sm:$0x1]
    %v135 = vld [vmem:[%s10] sm:$0xff]
    %v136 = vld [vmem:[%s10 + $0x8] sm:$0xff]
    %v137 = vld [vmem:[%s10 + $0x10] sm:$0xff]
    %v138 = vld [vmem:[%s10 + $0x18] sm:$0xff]
    %v139 = vld [vmem:[%s11] sm:$0x1]
    %v140 = vld [vmem:[%s12] sm:$0xff]
    %v141 = vld [vmem:[%s12 + $0x8] sm:$0xff]
    %v142 = vld [vmem:[%s12 + $0x10] sm:$0xff]
    %v143 = vld [vmem:[%s12 + $0x18] sm:$0xff]
    %v144 = vld [vmem:[%s12 + $0x20] sm:$0xff]
    %v145 = vld [vmem:[%s12 + $0x28] sm:$0xff]
    %v146 = vld [vmem:[%s12 + $0x30] sm:$0xff]
    %v147 = vld [vmem:[%s12 + $0x38] sm:$0xff]
    %v148 = vld [vmem:[%s13] sm:$0x1]
    %v149 = vld [vmem:[%s14] sm:$0x1]
    %v150 = vld [vmem:[%s15] sm:$0x1]
    %v152 = vlaneseq
    %v153 = vshrl.u32 %v152, 7
    %v154 = vsub.s32 0, %v153
    %v155 = vrot.slane %v127, %v154
    %v158 = vsel %vm79, %v121, 0
    %v161 = vsel %vm79, %v122, 0
    %163 = vmatprep.subr.mxu0 0.0
    %164 = vmatpush1.msra.mxu0 0.0
    %165 = vmatprep.subr.mxu0 0.0
    %166 = vmatpush1.msra.mxu0 0.0
    %167 = vmatprep.subr.mxu0 0.0
    %168 = vmatpush1.msra.mxu0 0.0
    %169 = vmatprep.subr.mxu0 0.0
    %170 = vmatpush1.msra.mxu0 0.0
    %171 = vmatprep.subr.mxu0 0.0
    %172 = vmatpush1.msra.mxu0 0.0
    %173 = vmatprep.subr.mxu0 0.0
    %174 = vmatpush1.msra.mxu0 0.0
    %175 = vmatprep.subr.mxu0 0.0
    %176 = vmatpush1.msra.mxu0 0.0
    %177 = vmatprep.subr.mxu0 0.0
    %178 = vmatpush1.msra.mxu0 0.0
    %179 = vmatprep.subr.mxu0 0.0
    %180 = vmatpush1.msra.mxu0 0.0
    %181 = vmatprep.subr.mxu0 0.0
    %182 = vmatpush1.msra.mxu0 0.0
    %183 = vmatprep.subr.mxu0 0.0
    %184 = vmatpush1.msra.mxu0 0.0
    %185 = vmatprep.subr.mxu0 0.0
    %186 = vmatpush1.msra.mxu0 0.0
    %187 = vmatprep.subr.mxu0 0.0
    %188 = vmatpush1.msra.mxu0 %v126
    %189 = vmatprep.subr.mxu0 0.0
    %190 = vmatpush1.msra.mxu0 %v125
    %191 = vmatprep.subr.mxu0 0.0
    %192 = vmatpush1.msra.mxu0 %v124
    %193 = vmatprep.subr.mxu0 0.0
    %194 = vmatpush1.msra.mxu0 %v123
    %195 = vmatprep.subr.mxu0 0.0
    %196 = vmatpush2.msra.mxu0 0.0
    %197 = vmatprep.subr.mxu0 0.0
    %198 = vmatpush2.msra.mxu0 0.0
    %199 = vmatprep.subr.mxu0 0.0
    %200 = vmatpush2.msra.mxu0 0.0
    %201 = vmatprep.subr.mxu0 0.0
    %202 = vmatpush2.msra.mxu0 0.0
    %203 = vmatprep.subr.mxu0 0.0
    %204 = vmatpush2.msra.mxu0 0.0
    %205 = vmatprep.subr.mxu0 0.0
    %206 = vmatpush2.msra.mxu0 0.0
    %207 = vmatprep.subr.mxu0 0.0
    %208 = vmatpush2.msra.mxu0 0.0
    %209 = vmatprep.subr.mxu0 0.0
    %210 = vmatpush2.msra.mxu0 0.0
    %211 = vmatprep.subr.mxu0 0.0
    %212 = vmatpush2.msra.mxu0 0.0
    %213 = vmatprep.subr.mxu0 0.0
    %214 = vmatpush2.msra.mxu0 0.0
    %215 = vmatprep.subr.mxu0 0.0
    %216 = vmatpush2.msra.mxu0 0.0
    %217 = vmatprep.subr.mxu0 0.0
    %218 = vmatpush2.msra.mxu0 0.0
    %219 = vmatprep.subr.mxu0 0.0
    %220 = vmatpush2.msra.mxu0 0.0
    %221 = vmatprep.subr.mxu0 0.0
    %222 = vmatpush2.msra.mxu0 0.0
    %223 = vmatprep.subr.mxu0 0.0
    %224 = vmatpush2.msra.mxu0 0.0
    %225 = vmatprep.subr.mxu0 0.0
    %226 = vmatpush2.msra.mxu0 0.0
    %227 = vmatprep.mubr.f32.mxu0 0.0
    %228 = vmatmul.mubr.f32.gmra.mxu0 %v158
    %v229 = vpop.f32.mrf.mxu0
    %v230 = vadd.f32 %v155, %v229
    %v231 = vpop.f32.mrf.mxu0
    %232 = vmatprep.mubr.f32.mxu0 0.0
    %233 = vmatmul.mubr.f32.gmra.mxu0 %v161
    %v234 = vpop.f32.mrf.mxu0
    %v235 = vadd.f32 %v155, %v234
    %v236 = vpop.f32.mrf.mxu0
    %237 = vdwg.mxu0
    %239 = vrot.lane.b32.xlu0 %v230, 96
    %v240 = vpop.permute.xlu0 %239
    %vm241 = vcmask 64512
    %v242 = vsel %vm241, %v230, 0
    %v244 = vsel %vm241, %v240, 0
    %246 = vmatprep.subr.mxu0 0.0
    %247 = vmatpush1.xpose.msra.mxu0 0.0
    %248 = vmatprep.subr.mxu0 0.0
    %249 = vmatpush1.xpose.msra.mxu0 0.0
    %250 = vmatprep.subr.mxu0 0.0
    %251 = vmatpush1.xpose.msra.mxu0 0.0
    %252 = vmatprep.subr.mxu0 0.0
    %253 = vmatpush1.xpose.msra.mxu0 0.0
    %254 = vmatprep.subr.mxu0 0.0
    %255 = vmatpush1.xpose.msra.mxu0 0.0
    %256 = vmatprep.subr.mxu0 0.0
    %257 = vmatpush1.xpose.msra.mxu0 0.0
    %258 = vmatprep.subr.mxu0 0.0
    %259 = vmatpush1.xpose.msra.mxu0 0.0
    %260 = vmatprep.subr.mxu0 0.0
    %261 = vmatpush1.xpose.msra.mxu0 0.0
    %262 = vmatprep.subr.mxu0 0.0
    %263 = vmatpush1.xpose.msra.mxu0 0.0
    %264 = vmatprep.subr.mxu0 0.0
    %265 = vmatpush1.xpose.msra.mxu0 0.0
    %266 = vmatprep.subr.mxu0 0.0
    %267 = vmatpush1.xpose.msra.mxu0 0.0
    %268 = vmatprep.subr.mxu0 0.0
    %269 = vmatpush1.xpose.msra.mxu0 0.0
    %270 = vmatprep.subr.mxu0 0.0
    %271 = vmatpush1.xpose.msra.mxu0 0.0
    %272 = vmatprep.subr.mxu0 0.0
    %273 = vmatpush1.xpose.msra.mxu0 0.0
    %274 = vmatprep.subr.mxu0 0.0
    %275 = vmatpush1.xpose.msra.mxu0 0.0
    %276 = vmatprep.subr.mxu0 0.0
    %277 = vmatpush1.xpose.msra.mxu0 %v244
    %278 = vmatprep.subr.mxu0 0.0
    %279 = vmatpush2.xpose.msra.mxu0 0.0
    %280 = vmatprep.subr.mxu0 0.0
    %281 = vmatpush2.xpose.msra.mxu0 0.0
    %282 = vmatprep.subr.mxu0 0.0
    %283 = vmatpush2.xpose.msra.mxu0 0.0
    %284 = vmatprep.subr.mxu0 0.0
    %285 = vmatpush2.xpose.msra.mxu0 0.0
    %286 = vmatprep.subr.mxu0 0.0
    %287 = vmatpush2.xpose.msra.mxu0 0.0
    %288 = vmatprep.subr.mxu0 0.0
    %289 = vmatpush2.xpose.msra.mxu0 0.0
    %290 = vmatprep.subr.mxu0 0.0
    %291 = vmatpush2.xpose.msra.mxu0 0.0
    %292 = vmatprep.subr.mxu0 0.0
    %293 = vmatpush2.xpose.msra.mxu0 0.0
    %294 = vmatprep.subr.mxu0 0.0
    %295 = vmatpush2.xpose.msra.mxu0 0.0
    %296 = vmatprep.subr.mxu0 0.0
    %297 = vmatpush2.xpose.msra.mxu0 0.0
    %298 = vmatprep.subr.mxu0 0.0
    %299 = vmatpush2.xpose.msra.mxu0 0.0
    %300 = vmatprep.subr.mxu0 0.0
    %301 = vmatpush2.xpose.msra.mxu0 0.0
    %302 = vmatprep.subr.mxu0 0.0
    %303 = vmatpush2.xpose.msra.mxu0 0.0
    %304 = vmatprep.subr.mxu0 0.0
    %305 = vmatpush2.xpose.msra.mxu0 0.0
    %306 = vmatprep.subr.mxu0 0.0
    %307 = vmatpush2.xpose.msra.mxu0 0.0
    %308 = vmatprep.subr.mxu0 0.0
    %309 = vmatpush2.xpose.msra.mxu0 0.0
    %310 = vmatprep.mubr.f32.mxu0 0.0
    %311 = vmatmul.mubr.f32.gmra.mxu0 %v242
    %v312 = vpop.f32.mrf.mxu0
    %v313 = vadd.f32 0.0, %v312
    %v314 = vpop.f32.mrf.mxu0
    %315 = vdwg.mxu0
    %317 = vrot.lane.b32.xlu0 %v235, 96
    %v318 = vpop.permute.xlu0 %317
    %v319 = vsel %vm241, %v235, 0
    %v321 = vsel %vm241, %v318, 0
    %323 = vmatprep.subr.mxu0 0.0
    %324 = vmatpush1.xpose.msra.mxu0 0.0
    %325 = vmatprep.subr.mxu0 0.0
    %326 = vmatpush1.xpose.msra.mxu0 0.0
    %327 = vmatprep.subr.mxu0 0.0
    %328 = vmatpush1.xpose.msra.mxu0 0.0
    %329 = vmatprep.subr.mxu0 0.0
    %330 = vmatpush1.xpose.msra.mxu0 0.0
    %331 = vmatprep.subr.mxu0 0.0
    %332 = vmatpush1.xpose.msra.mxu0 0.0
    %333 = vmatprep.subr.mxu0 0.0
    %334 = vmatpush1.xpose.msra.mxu0 0.0
    %335 = vmatprep.subr.mxu0 0.0
    %336 = vmatpush1.xpose.msra.mxu0 0.0
    %337 = vmatprep.subr.mxu0 0.0
    %338 = vmatpush1.xpose.msra.mxu0 0.0
    %339 = vmatprep.subr.mxu0 0.0
    %340 = vmatpush1.xpose.msra.mxu0 0.0
    %341 = vmatprep.subr.mxu0 0.0
    %342 = vmatpush1.xpose.msra.mxu0 0.0
    %343 = vmatprep.subr.mxu0 0.0
    %344 = vmatpush1.xpose.msra.mxu0 0.0
    %345 = vmatprep.subr.mxu0 0.0
    %346 = vmatpush1.xpose.msra.mxu0 0.0
    %347 = vmatprep.subr.mxu0 0.0
    %348 = vmatpush1.xpose.msra.mxu0 0.0
    %349 = vmatprep.subr.mxu0 0.0
    %350 = vmatpush1.xpose.msra.mxu0 0.0
    %351 = vmatprep.subr.mxu0 0.0
    %352 = vmatpush1.xpose.msra.mxu0 0.0
    %353 = vmatprep.subr.mxu0 0.0
    %354 = vmatpush1.xpose.msra.mxu0 %v321
    %355 = vmatprep.subr.mxu0 0.0
    %356 = vmatpush2.xpose.msra.mxu0 0.0
    %357 = vmatprep.subr.mxu0 0.0
    %358 = vmatpush2.xpose.msra.mxu0 0.0
    %359 = vmatprep.subr.mxu0 0.0
    %360 = vmatpush2.xpose.msra.mxu0 0.0
    %361 = vmatprep.subr.mxu0 0.0
    %362 = vmatpush2.xpose.msra.mxu0 0.0
    %363 = vmatprep.subr.mxu0 0.0
    %364 = vmatpush2.xpose.msra.mxu0 0.0
    %365 = vmatprep.subr.mxu0 0.0
    %366 = vmatpush2.xpose.msra.mxu0 0.0
    %367 = vmatprep.subr.mxu0 0.0
    %368 = vmatpush2.xpose.msra.mxu0 0.0
    %369 = vmatprep.subr.mxu0 0.0
    %370 = vmatpush2.xpose.msra.mxu0 0.0
    %371 = vmatprep.subr.mxu0 0.0
    %372 = vmatpush2.xpose.msra.mxu0 0.0
    %373 = vmatprep.subr.mxu0 0.0
    %374 = vmatpush2.xpose.msra.mxu0 0.0
    %375 = vmatprep.subr.mxu0 0.0
    %376 = vmatpush2.xpose.msra.mxu0 0.0
    %377 = vmatprep.subr.mxu0 0.0
    %378 = vmatpush2.xpose.msra.mxu0 0.0
    %379 = vmatprep.subr.mxu0 0.0
    %380 = vmatpush2.xpose.msra.mxu0 0.0
    %381 = vmatprep.subr.mxu0 0.0
    %382 = vmatpush2.xpose.msra.mxu0 0.0
    %383 = vmatprep.subr.mxu0 0.0
    %384 = vmatpush2.xpose.msra.mxu0 0.0
    %385 = vmatprep.subr.mxu0 0.0
    %386 = vmatpush2.xpose.msra.mxu0 0.0
    %387 = vmatprep.mubr.f32.mxu0 0.0
    %388 = vmatmul.mubr.f32.gmra.mxu0 %v319
    %v389 = vpop.f32.mrf.mxu0
    %v390 = vadd.f32 0.0, %v389
    %v391 = vpop.f32.mrf.mxu0
    %392 = vdwg.mxu0
    %v393 = vsel %vm241, %v313, -inf
    %394 = vmax.xlane.f32.xlu0 %v393
    %v395 = vpop.xlane.xlu0 %394
    %v396 = vsel %vm241, %v390, -inf
    %397 = vmax.xlane.f32.xlu0 %v396
    %v398 = vpop.xlane.xlu0 %397
    %v399 = vsub.f32 %v313, %v395
    %v400 = vsub.f32 %v390, %v398
    %v401 = vmul.f32 %v399, 1.442695
    %v402 = vpow.pop %v401
    %v403 = vmul.f32 %v400, 1.442695
    %v404 = vpow.pop %v403
    %v405 = vsel %vm241, %v402, 0.0
    %406 = vadd.xlane.f32.xlu0 %v405
    %v407 = vpop.xlane.xlu0 %406
    %v408 = vsel %vm241, %v404, 0.0
    %409 = vadd.xlane.f32.xlu0 %v408
    %v410 = vpop.xlane.xlu0 %409
    %v411 = vrcp.pop %v407
    %v412 = vmul.f32 %v402, %v411
    %v413 = vrcp.pop %v410
    %v414 = vmul.f32 %v404, %v413
    %415 = vrot.lane.b32.xlu0 %v230, 64
    %v416 = vpop.permute.xlu0 %415
    %v419 = vsel %vm241, %v412, 0
    %421 = vmatprep.subr.mxu0 0.0
    %422 = vmatpush1.msra.mxu0 0.0
    %423 = vmatprep.subr.mxu0 0.0
    %424 = vmatpush1.msra.mxu0 0.0
    %425 = vmatprep.subr.mxu0 0.0
    %426 = vmatpush1.msra.mxu0 0.0
    %427 = vmatprep.subr.mxu0 0.0
    %428 = vmatpush1.msra.mxu0 0.0
    %429 = vmatprep.subr.mxu0 0.0
    %430 = vmatpush1.msra.mxu0 0.0
    %431 = vmatprep.subr.mxu0 0.0
    %432 = vmatpush1.msra.mxu0 0.0
    %433 = vmatprep.subr.mxu0 0.0
    %434 = vmatpush1.msra.mxu0 0.0
    %435 = vmatprep.subr.mxu0 0.0
    %436 = vmatpush1.msra.mxu0 0.0
    %437 = vmatprep.subr.mxu0 0.0
    %438 = vmatpush1.msra.mxu0 0.0
    %439 = vmatprep.subr.mxu0 0.0
    %440 = vmatpush1.msra.mxu0 0.0
    %441 = vmatprep.subr.mxu0 0.0
    %442 = vmatpush1.msra.mxu0 0.0
    %443 = vmatprep.subr.mxu0 0.0
    %444 = vmatpush1.msra.mxu0 0.0
    %445 = vmatprep.subr.mxu0 0.0
    %446 = vmatpush1.msra.mxu0 0.0
    %447 = vmatprep.subr.mxu0 0.0
    %448 = vmatpush1.msra.mxu0 0.0
    %449 = vmatprep.subr.mxu0 0.0
    %450 = vmatpush1.msra.mxu0 0.0
    %451 = vmatprep.subr.mxu0 0.0
    %452 = vmatpush1.msra.mxu0 %v416
    %453 = vmatprep.subr.mxu0 0.0
    %454 = vmatpush2.msra.mxu0 0.0
    %455 = vmatprep.subr.mxu0 0.0
    %456 = vmatpush2.msra.mxu0 0.0
    %457 = vmatprep.subr.mxu0 0.0
    %458 = vmatpush2.msra.mxu0 0.0
    %459 = vmatprep.subr.mxu0 0.0
    %460 = vmatpush2.msra.mxu0 0.0
    %461 = vmatprep.subr.mxu0 0.0
    %462 = vmatpush2.msra.mxu0 0.0
    %463 = vmatprep.subr.mxu0 0.0
    %464 = vmatpush2.msra.mxu0 0.0
    %465 = vmatprep.subr.mxu0 0.0
    %466 = vmatpush2.msra.mxu0 0.0
    %467 = vmatprep.subr.mxu0 0.0
    %468 = vmatpush2.msra.mxu0 0.0
    %469 = vmatprep.subr.mxu0 0.0
    %470 = vmatpush2.msra.mxu0 0.0
    %471 = vmatprep.subr.mxu0 0.0
    %472 = vmatpush2.msra.mxu0 0.0
    %473 = vmatprep.subr.mxu0 0.0
    %474 = vmatpush2.msra.mxu0 0.0
    %475 = vmatprep.subr.mxu0 0.0
    %476 = vmatpush2.msra.mxu0 0.0
    %477 = vmatprep.subr.mxu0 0.0
    %478 = vmatpush2.msra.mxu0 0.0
    %479 = vmatprep.subr.mxu0 0.0
    %480 = vmatpush2.msra.mxu0 0.0
    %481 = vmatprep.subr.mxu0 0.0
    %482 = vmatpush2.msra.mxu0 0.0
    %483 = vmatprep.subr.mxu0 0.0
    %484 = vmatpush2.msra.mxu0 0.0
    %485 = vmatprep.mubr.f32.mxu0 0.0
    %486 = vmatmul.mubr.f32.gmra.mxu0 %v419
    %v487 = vpop.f32.mrf.mxu0
    %v488 = vadd.f32 0.0, %v487
    %v489 = vpop.f32.mrf.mxu0
    %490 = vdwg.mxu0
    %491 = vrot.lane.b32.xlu0 %v235, 64
    %v492 = vpop.permute.xlu0 %491
    %v495 = vsel %vm241, %v414, 0
    %497 = vmatprep.subr.mxu0 0.0
    %498 = vmatpush1.msra.mxu0 0.0
    %499 = vmatprep.subr.mxu0 0.0
    %500 = vmatpush1.msra.mxu0 0.0
    %501 = vmatprep.subr.mxu0 0.0
    %502 = vmatpush1.msra.mxu0 0.0
    %503 = vmatprep.subr.mxu0 0.0
    %504 = vmatpush1.msra.mxu0 0.0
    %505 = vmatprep.subr.mxu0 0.0
    %506 = vmatpush1.msra.mxu0 0.0
    %507 = vmatprep.subr.mxu0 0.0
    %508 = vmatpush1.msra.mxu0 0.0
    %509 = vmatprep.subr.mxu0 0.0
    %510 = vmatpush1.msra.mxu0 0.0
    %511 = vmatprep.subr.mxu0 0.0
    %512 = vmatpush1.msra.mxu0 0.0
    %513 = vmatprep.subr.mxu0 0.0
    %514 = vmatpush1.msra.mxu0 0.0
    %515 = vmatprep.subr.mxu0 0.0
    %516 = vmatpush1.msra.mxu0 0.0
    %517 = vmatprep.subr.mxu0 0.0
    %518 = vmatpush1.msra.mxu0 0.0
    %519 = vmatprep.subr.mxu0 0.0
    %520 = vmatpush1.msra.mxu0 0.0
    %521 = vmatprep.subr.mxu0 0.0
    %522 = vmatpush1.msra.mxu0 0.0
    %523 = vmatprep.subr.mxu0 0.0
    %524 = vmatpush1.msra.mxu0 0.0
    %525 = vmatprep.subr.mxu0 0.0
    %526 = vmatpush1.msra.mxu0 0.0
    %527 = vmatprep.subr.mxu0 0.0
    %528 = vmatpush1.msra.mxu0 %v492
    %529 = vmatprep.subr.mxu0 0.0
    %530 = vmatpush2.msra.mxu0 0.0
    %531 = vmatprep.subr.mxu0 0.0
    %532 = vmatpush2.msra.mxu0 0.0
    %533 = vmatprep.subr.mxu0 0.0
    %534 = vmatpush2.msra.mxu0 0.0
    %535 = vmatprep.subr.mxu0 0.0
    %536 = vmatpush2.msra.mxu0 0.0
    %537 = vmatprep.subr.mxu0 0.0
    %538 = vmatpush2.msra.mxu0 0.0
    %539 = vmatprep.subr.mxu0 0.0
    %540 = vmatpush2.msra.mxu0 0.0
    %541 = vmatprep.subr.mxu0 0.0
    %542 = vmatpush2.msra.mxu0 0.0
    %543 = vmatprep.subr.mxu0 0.0
    %544 = vmatpush2.msra.mxu0 0.0
    %545 = vmatprep.subr.mxu0 0.0
    %546 = vmatpush2.msra.mxu0 0.0
    %547 = vmatprep.subr.mxu0 0.0
    %548 = vmatpush2.msra.mxu0 0.0
    %549 = vmatprep.subr.mxu0 0.0
    %550 = vmatpush2.msra.mxu0 0.0
    %551 = vmatprep.subr.mxu0 0.0
    %552 = vmatpush2.msra.mxu0 0.0
    %553 = vmatprep.subr.mxu0 0.0
    %554 = vmatpush2.msra.mxu0 0.0
    %555 = vmatprep.subr.mxu0 0.0
    %556 = vmatpush2.msra.mxu0 0.0
    %557 = vmatprep.subr.mxu0 0.0
    %558 = vmatpush2.msra.mxu0 0.0
    %559 = vmatprep.subr.mxu0 0.0
    %560 = vmatpush2.msra.mxu0 0.0
    %561 = vmatprep.mubr.f32.mxu0 0.0
    %562 = vmatmul.mubr.f32.gmra.mxu0 %v495
    %v563 = vpop.f32.mrf.mxu0
    %v564 = vadd.f32 0.0, %v563
    %v565 = vpop.f32.mrf.mxu0
    %566 = vdwg.mxu0
    %567 = vrot.lane.b32.xlu0 %v230, 120
    %v568 = vpop.permute.xlu0 %567
    %569 = vrot.lane.b32.xlu0 %v230, 88
    %v570 = vpop.permute.xlu0 %569
    %v571 = vsel %vm241, %v568, 0
    %v573 = vsel %vm241, %v570, 0
    %575 = vmatprep.subr.mxu0 0.0
    %576 = vmatpush1.xpose.msra.mxu0 0.0
    %577 = vmatprep.subr.mxu0 0.0
    %578 = vmatpush1.xpose.msra.mxu0 0.0
    %579 = vmatprep.subr.mxu0 0.0
    %580 = vmatpush1.xpose.msra.mxu0 0.0
    %581 = vmatprep.subr.mxu0 0.0
    %582 = vmatpush1.xpose.msra.mxu0 0.0
    %583 = vmatprep.subr.mxu0 0.0
    %584 = vmatpush1.xpose.msra.mxu0 0.0
    %585 = vmatprep.subr.mxu0 0.0
    %586 = vmatpush1.xpose.msra.mxu0 0.0
    %587 = vmatprep.subr.mxu0 0.0
    %588 = vmatpush1.xpose.msra.mxu0 0.0
    %589 = vmatprep.subr.mxu0 0.0
    %590 = vmatpush1.xpose.msra.mxu0 0.0
    %591 = vmatprep.subr.mxu0 0.0
    %592 = vmatpush1.xpose.msra.mxu0 0.0
    %593 = vmatprep.subr.mxu0 0.0
    %594 = vmatpush1.xpose.msra.mxu0 0.0
    %595 = vmatprep.subr.mxu0 0.0
    %596 = vmatpush1.xpose.msra.mxu0 0.0
    %597 = vmatprep.subr.mxu0 0.0
    %598 = vmatpush1.xpose.msra.mxu0 0.0
    %599 = vmatprep.subr.mxu0 0.0
    %600 = vmatpush1.xpose.msra.mxu0 0.0
    %601 = vmatprep.subr.mxu0 0.0
    %602 = vmatpush1.xpose.msra.mxu0 0.0
    %603 = vmatprep.subr.mxu0 0.0
    %604 = vmatpush1.xpose.msra.mxu0 0.0
    %605 = vmatprep.subr.mxu0 0.0
    %606 = vmatpush1.xpose.msra.mxu0 %v573
    %607 = vmatprep.subr.mxu0 0.0
    %608 = vmatpush2.xpose.msra.mxu0 0.0
    %609 = vmatprep.subr.mxu0 0.0
    %610 = vmatpush2.xpose.msra.mxu0 0.0
    %611 = vmatprep.subr.mxu0 0.0
    %612 = vmatpush2.xpose.msra.mxu0 0.0
    %613 = vmatprep.subr.mxu0 0.0
    %614 = vmatpush2.xpose.msra.mxu0 0.0
    %615 = vmatprep.subr.mxu0 0.0
    %616 = vmatpush2.xpose.msra.mxu0 0.0
    %617 = vmatprep.subr.mxu0 0.0
    %618 = vmatpush2.xpose.msra.mxu0 0.0
    %619 = vmatprep.subr.mxu0 0.0
    %620 = vmatpush2.xpose.msra.mxu0 0.0
    %621 = vmatprep.subr.mxu0 0.0
    %622 = vmatpush2.xpose.msra.mxu0 0.0
    %623 = vmatprep.subr.mxu0 0.0
    %624 = vmatpush2.xpose.msra.mxu0 0.0
    %625 = vmatprep.subr.mxu0 0.0
    %626 = vmatpush2.xpose.msra.mxu0 0.0
    %627 = vmatprep.subr.mxu0 0.0
    %628 = vmatpush2.xpose.msra.mxu0 0.0
    %629 = vmatprep.subr.mxu0 0.0
    %630 = vmatpush2.xpose.msra.mxu0 0.0
    %631 = vmatprep.subr.mxu0 0.0
    %632 = vmatpush2.xpose.msra.mxu0 0.0
    %633 = vmatprep.subr.mxu0 0.0
    %634 = vmatpush2.xpose.msra.mxu0 0.0
    %635 = vmatprep.subr.mxu0 0.0
    %636 = vmatpush2.xpose.msra.mxu0 0.0
    %637 = vmatprep.subr.mxu0 0.0
    %638 = vmatpush2.xpose.msra.mxu0 0.0
    %639 = vmatprep.mubr.f32.mxu0 0.0
    %640 = vmatmul.mubr.f32.gmra.mxu0 %v571
    %v641 = vpop.f32.mrf.mxu0
    %v642 = vadd.f32 0.0, %v641
    %v643 = vpop.f32.mrf.mxu0
    %644 = vdwg.mxu0
    %645 = vrot.lane.b32.xlu0 %v235, 120
    %v646 = vpop.permute.xlu0 %645
    %647 = vrot.lane.b32.xlu0 %v235, 88
    %v648 = vpop.permute.xlu0 %647
    %v649 = vsel %vm241, %v646, 0
    %v651 = vsel %vm241, %v648, 0
    %653 = vmatprep.subr.mxu0 0.0
    %654 = vmatpush1.xpose.msra.mxu0 0.0
    %655 = vmatprep.subr.mxu0 0.0
    %656 = vmatpush1.xpose.msra.mxu0 0.0
    %657 = vmatprep.subr.mxu0 0.0
    %658 = vmatpush1.xpose.msra.mxu0 0.0
    %659 = vmatprep.subr.mxu0 0.0
    %660 = vmatpush1.xpose.msra.mxu0 0.0
    %661 = vmatprep.subr.mxu0 0.0
    %662 = vmatpush1.xpose.msra.mxu0 0.0
    %663 = vmatprep.subr.mxu0 0.0
    %664 = vmatpush1.xpose.msra.mxu0 0.0
    %665 = vmatprep.subr.mxu0 0.0
    %666 = vmatpush1.xpose.msra.mxu0 0.0
    %667 = vmatprep.subr.mxu0 0.0
    %668 = vmatpush1.xpose.msra.mxu0 0.0
    %669 = vmatprep.subr.mxu0 0.0
    %670 = vmatpush1.xpose.msra.mxu0 0.0
    %671 = vmatprep.subr.mxu0 0.0
    %672 = vmatpush1.xpose.msra.mxu0 0.0
    %673 = vmatprep.subr.mxu0 0.0
    %674 = vmatpush1.xpose.msra.mxu0 0.0
    %675 = vmatprep.subr.mxu0 0.0
    %676 = vmatpush1.xpose.msra.mxu0 0.0
    %677 = vmatprep.subr.mxu0 0.0
    %678 = vmatpush1.xpose.msra.mxu0 0.0
    %679 = vmatprep.subr.mxu0 0.0
    %680 = vmatpush1.xpose.msra.mxu0 0.0
    %681 = vmatprep.subr.mxu0 0.0
    %682 = vmatpush1.xpose.msra.mxu0 0.0
    %683 = vmatprep.subr.mxu0 0.0
    %684 = vmatpush1.xpose.msra.mxu0 %v651
    %685 = vmatprep.subr.mxu0 0.0
    %686 = vmatpush2.xpose.msra.mxu0 0.0
    %687 = vmatprep.subr.mxu0 0.0
    %688 = vmatpush2.xpose.msra.mxu0 0.0
    %689 = vmatprep.subr.mxu0 0.0
    %690 = vmatpush2.xpose.msra.mxu0 0.0
    %691 = vmatprep.subr.mxu0 0.0
    %692 = vmatpush2.xpose.msra.mxu0 0.0
    %693 = vmatprep.subr.mxu0 0.0
    %694 = vmatpush2.xpose.msra.mxu0 0.0
    %695 = vmatprep.subr.mxu0 0.0
    %696 = vmatpush2.xpose.msra.mxu0 0.0
    %697 = vmatprep.subr.mxu0 0.0
    %698 = vmatpush2.xpose.msra.mxu0 0.0
    %699 = vmatprep.subr.mxu0 0.0
    %700 = vmatpush2.xpose.msra.mxu0 0.0
    %701 = vmatprep.subr.mxu0 0.0
    %702 = vmatpush2.xpose.msra.mxu0 0.0
    %703 = vmatprep.subr.mxu0 0.0
    %704 = vmatpush2.xpose.msra.mxu0 0.0
    %705 = vmatprep.subr.mxu0 0.0
    %706 = vmatpush2.xpose.msra.mxu0 0.0
    %707 = vmatprep.subr.mxu0 0.0
    %708 = vmatpush2.xpose.msra.mxu0 0.0
    %709 = vmatprep.subr.mxu0 0.0
    %710 = vmatpush2.xpose.msra.mxu0 0.0
    %711 = vmatprep.subr.mxu0 0.0
    %712 = vmatpush2.xpose.msra.mxu0 0.0
    %713 = vmatprep.subr.mxu0 0.0
    %714 = vmatpush2.xpose.msra.mxu0 0.0
    %715 = vmatprep.subr.mxu0 0.0
    %716 = vmatpush2.xpose.msra.mxu0 0.0
    %717 = vmatprep.mubr.f32.mxu0 0.0
    %718 = vmatmul.mubr.f32.gmra.mxu0 %v649
    %v719 = vpop.f32.mrf.mxu0
    %v720 = vadd.f32 0.0, %v719
    %v721 = vpop.f32.mrf.mxu0
    %722 = vdwg.mxu0
    %v723 = vsel %vm241, %v642, -inf
    %724 = vmax.xlane.f32.xlu0 %v723
    %v725 = vpop.xlane.xlu0 %724
    %v726 = vsel %vm241, %v720, -inf
    %727 = vmax.xlane.f32.xlu0 %v726
    %v728 = vpop.xlane.xlu0 %727
    %v729 = vsub.f32 %v642, %v725
    %v730 = vsub.f32 %v720, %v728
    %v731 = vmul.f32 %v729, 1.442695
    %v732 = vpow.pop %v731
    %v733 = vmul.f32 %v730, 1.442695
    %v734 = vpow.pop %v733
    %v735 = vsel %vm241, %v732, 0.0
    %736 = vadd.xlane.f32.xlu0 %v735
    %v737 = vpop.xlane.xlu0 %736
    %v738 = vsel %vm241, %v734, 0.0
    %739 = vadd.xlane.f32.xlu0 %v738
    %v740 = vpop.xlane.xlu0 %739
    %v741 = vrcp.pop %v737
    %v742 = vmul.f32 %v732, %v741
    %v743 = vrcp.pop %v740
    %v744 = vmul.f32 %v734, %v743
    %745 = vrot.lane.b32.xlu0 %v230, 56
    %v746 = vpop.permute.xlu0 %745
    %v749 = vsel %vm241, %v742, 0
    %751 = vmatprep.subr.mxu0 0.0
    %752 = vmatpush1.msra.mxu0 0.0
    %753 = vmatprep.subr.mxu0 0.0
    %754 = vmatpush1.msra.mxu0 0.0
    %755 = vmatprep.subr.mxu0 0.0
    %756 = vmatpush1.msra.mxu0 0.0
    %757 = vmatprep.subr.mxu0 0.0
    %758 = vmatpush1.msra.mxu0 0.0
    %759 = vmatprep.subr.mxu0 0.0
    %760 = vmatpush1.msra.mxu0 0.0
    %761 = vmatprep.subr.mxu0 0.0
    %762 = vmatpush1.msra.mxu0 0.0
    %763 = vmatprep.subr.mxu0 0.0
    %764 = vmatpush1.msra.mxu0 0.0
    %765 = vmatprep.subr.mxu0 0.0
    %766 = vmatpush1.msra.mxu0 0.0
    %767 = vmatprep.subr.mxu0 0.0
    %768 = vmatpush1.msra.mxu0 0.0
    %769 = vmatprep.subr.mxu0 0.0
    %770 = vmatpush1.msra.mxu0 0.0
    %771 = vmatprep.subr.mxu0 0.0
    %772 = vmatpush1.msra.mxu0 0.0
    %773 = vmatprep.subr.mxu0 0.0
    %774 = vmatpush1.msra.mxu0 0.0
    %775 = vmatprep.subr.mxu0 0.0
    %776 = vmatpush1.msra.mxu0 0.0
    %777 = vmatprep.subr.mxu0 0.0
    %778 = vmatpush1.msra.mxu0 0.0
    %779 = vmatprep.subr.mxu0 0.0
    %780 = vmatpush1.msra.mxu0 0.0
    %781 = vmatprep.subr.mxu0 0.0
    %782 = vmatpush1.msra.mxu0 %v746
    %783 = vmatprep.subr.mxu0 0.0
    %784 = vmatpush2.msra.mxu0 0.0
    %785 = vmatprep.subr.mxu0 0.0
    %786 = vmatpush2.msra.mxu0 0.0
    %787 = vmatprep.subr.mxu0 0.0
    %788 = vmatpush2.msra.mxu0 0.0
    %789 = vmatprep.subr.mxu0 0.0
    %790 = vmatpush2.msra.mxu0 0.0
    %791 = vmatprep.subr.mxu0 0.0
    %792 = vmatpush2.msra.mxu0 0.0
    %793 = vmatprep.subr.mxu0 0.0
    %794 = vmatpush2.msra.mxu0 0.0
    %795 = vmatprep.subr.mxu0 0.0
    %796 = vmatpush2.msra.mxu0 0.0
    %797 = vmatprep.subr.mxu0 0.0
    %798 = vmatpush2.msra.mxu0 0.0
    %799 = vmatprep.subr.mxu0 0.0
    %800 = vmatpush2.msra.mxu0 0.0
    %801 = vmatprep.subr.mxu0 0.0
    %802 = vmatpush2.msra.mxu0 0.0
    %803 = vmatprep.subr.mxu0 0.0
    %804 = vmatpush2.msra.mxu0 0.0
    %805 = vmatprep.subr.mxu0 0.0
    %806 = vmatpush2.msra.mxu0 0.0
    %807 = vmatprep.subr.mxu0 0.0
    %808 = vmatpush2.msra.mxu0 0.0
    %809 = vmatprep.subr.mxu0 0.0
    %810 = vmatpush2.msra.mxu0 0.0
    %811 = vmatprep.subr.mxu0 0.0
    %812 = vmatpush2.msra.mxu0 0.0
    %813 = vmatprep.subr.mxu0 0.0
    %814 = vmatpush2.msra.mxu0 0.0
    %815 = vmatprep.mubr.f32.mxu0 0.0
    %816 = vmatmul.mubr.f32.gmra.mxu0 %v749
    %v817 = vpop.f32.mrf.mxu0
    %v818 = vadd.f32 0.0, %v817
    %v819 = vpop.f32.mrf.mxu0
    %820 = vdwg.mxu0
    %821 = vrot.lane.b32.xlu0 %v235, 56
    %v822 = vpop.permute.xlu0 %821
    %v825 = vsel %vm241, %v744, 0
    %827 = vmatprep.subr.mxu0 0.0
    %828 = vmatpush1.msra.mxu0 0.0
    %829 = vmatprep.subr.mxu0 0.0
    %830 = vmatpush1.msra.mxu0 0.0
    %831 = vmatprep.subr.mxu0 0.0
    %832 = vmatpush1.msra.mxu0 0.0
    %833 = vmatprep.subr.mxu0 0.0
    %834 = vmatpush1.msra.mxu0 0.0
    %835 = vmatprep.subr.mxu0 0.0
    %836 = vmatpush1.msra.mxu0 0.0
    %837 = vmatprep.subr.mxu0 0.0
    %838 = vmatpush1.msra.mxu0 0.0
    %839 = vmatprep.subr.mxu0 0.0
    %840 = vmatpush1.msra.mxu0 0.0
    %841 = vmatprep.subr.mxu0 0.0
    %842 = vmatpush1.msra.mxu0 0.0
    %843 = vmatprep.subr.mxu0 0.0
    %844 = vmatpush1.msra.mxu0 0.0
    %845 = vmatprep.subr.mxu0 0.0
    %846 = vmatpush1.msra.mxu0 0.0
    %847 = vmatprep.subr.mxu0 0.0
    %848 = vmatpush1.msra.mxu0 0.0
    %849 = vmatprep.subr.mxu0 0.0
    %850 = vmatpush1.msra.mxu0 0.0
    %851 = vmatprep.subr.mxu0 0.0
    %852 = vmatpush1.msra.mxu0 0.0
    %853 = vmatprep.subr.mxu0 0.0
    %854 = vmatpush1.msra.mxu0 0.0
    %855 = vmatprep.subr.mxu0 0.0
    %856 = vmatpush1.msra.mxu0 0.0
    %857 = vmatprep.subr.mxu0 0.0
    %858 = vmatpush1.msra.mxu0 %v822
    %859 = vmatprep.subr.mxu0 0.0
    %860 = vmatpush2.msra.mxu0 0.0
    %861 = vmatprep.subr.mxu0 0.0
    %862 = vmatpush2.msra.mxu0 0.0
    %863 = vmatprep.subr.mxu0 0.0
    %864 = vmatpush2.msra.mxu0 0.0
    %865 = vmatprep.subr.mxu0 0.0
    %866 = vmatpush2.msra.mxu0 0.0
    %867 = vmatprep.subr.mxu0 0.0
    %868 = vmatpush2.msra.mxu0 0.0
    %869 = vmatprep.subr.mxu0 0.0
    %870 = vmatpush2.msra.mxu0 0.0
    %871 = vmatprep.subr.mxu0 0.0
    %872 = vmatpush2.msra.mxu0 0.0
    %873 = vmatprep.subr.mxu0 0.0
    %874 = vmatpush2.msra.mxu0 0.0
    %875 = vmatprep.subr.mxu0 0.0
    %876 = vmatpush2.msra.mxu0 0.0
    %877 = vmatprep.subr.mxu0 0.0
    %878 = vmatpush2.msra.mxu0 0.0
    %879 = vmatprep.subr.mxu0 0.0
    %880 = vmatpush2.msra.mxu0 0.0
    %881 = vmatprep.subr.mxu0 0.0
    %882 = vmatpush2.msra.mxu0 0.0
    %883 = vmatprep.subr.mxu0 0.0
    %884 = vmatpush2.msra.mxu0 0.0
    %885 = vmatprep.subr.mxu0 0.0
    %886 = vmatpush2.msra.mxu0 0.0
    %887 = vmatprep.subr.mxu0 0.0
    %888 = vmatpush2.msra.mxu0 0.0
    %889 = vmatprep.subr.mxu0 0.0
    %890 = vmatpush2.msra.mxu0 0.0
    %891 = vmatprep.mubr.f32.mxu0 0.0
    %892 = vmatmul.mubr.f32.gmra.mxu0 %v825
    %v893 = vpop.f32.mrf.mxu0
    %v894 = vadd.f32 0.0, %v893
    %v895 = vpop.f32.mrf.mxu0
    %896 = vdwg.mxu0
    %v898 = vsel %vm241, %v818, 0
    %v901 = vsel %vm241, %v894, 0
    %903 = vmatprep.subr.mxu0 0.0
    %904 = vmatpush1.msra.mxu0 0.0
    %905 = vmatprep.subr.mxu0 0.0
    %906 = vmatpush1.msra.mxu0 0.0
    %907 = vmatprep.subr.mxu0 0.0
    %908 = vmatpush1.msra.mxu0 0.0
    %909 = vmatprep.subr.mxu0 0.0
    %910 = vmatpush1.msra.mxu0 0.0
    %911 = vmatprep.subr.mxu0 0.0
    %912 = vmatpush1.msra.mxu0 0.0
    %913 = vmatprep.subr.mxu0 0.0
    %914 = vmatpush1.msra.mxu0 0.0
    %915 = vmatprep.subr.mxu0 0.0
    %916 = vmatpush1.msra.mxu0 0.0
    %917 = vmatprep.subr.mxu0 0.0
    %918 = vmatpush1.msra.mxu0 0.0
    %919 = vmatprep.subr.mxu0 0.0
    %920 = vmatpush1.msra.mxu0 0.0
    %921 = vmatprep.subr.mxu0 0.0
    %922 = vmatpush1.msra.mxu0 0.0
    %923 = vmatprep.subr.mxu0 0.0
    %924 = vmatpush1.msra.mxu0 0.0
    %925 = vmatprep.subr.mxu0 0.0
    %926 = vmatpush1.msra.mxu0 0.0
    %927 = vmatprep.subr.mxu0 0.0
    %928 = vmatpush1.msra.mxu0 0.0
    %929 = vmatprep.subr.mxu0 0.0
    %930 = vmatpush1.msra.mxu0 0.0
    %931 = vmatprep.subr.mxu0 0.0
    %932 = vmatpush1.msra.mxu0 0.0
    %933 = vmatprep.subr.mxu0 0.0
    %934 = vmatpush1.msra.mxu0 %v129
    %935 = vmatprep.subr.mxu0 0.0
    %936 = vmatpush2.msra.mxu0 0.0
    %937 = vmatprep.subr.mxu0 0.0
    %938 = vmatpush2.msra.mxu0 0.0
    %939 = vmatprep.subr.mxu0 0.0
    %940 = vmatpush2.msra.mxu0 0.0
    %941 = vmatprep.subr.mxu0 0.0
    %942 = vmatpush2.msra.mxu0 0.0
    %943 = vmatprep.subr.mxu0 0.0
    %944 = vmatpush2.msra.mxu0 0.0
    %945 = vmatprep.subr.mxu0 0.0
    %946 = vmatpush2.msra.mxu0 0.0
    %947 = vmatprep.subr.mxu0 0.0
    %948 = vmatpush2.msra.mxu0 0.0
    %949 = vmatprep.subr.mxu0 0.0
    %950 = vmatpush2.msra.mxu0 0.0
    %951 = vmatprep.subr.mxu0 0.0
    %952 = vmatpush2.msra.mxu0 0.0
    %953 = vmatprep.subr.mxu0 0.0
    %954 = vmatpush2.msra.mxu0 0.0
    %955 = vmatprep.subr.mxu0 0.0
    %956 = vmatpush2.msra.mxu0 0.0
    %957 = vmatprep.subr.mxu0 0.0
    %958 = vmatpush2.msra.mxu0 0.0
    %959 = vmatprep.subr.mxu0 0.0
    %960 = vmatpush2.msra.mxu0 0.0
    %961 = vmatprep.subr.mxu0 0.0
    %962 = vmatpush2.msra.mxu0 0.0
    %963 = vmatprep.subr.mxu0 0.0
    %964 = vmatpush2.msra.mxu0 0.0
    %965 = vmatprep.subr.mxu0 0.0
    %966 = vmatpush2.msra.mxu0 0.0
    %967 = vmatprep.mubr.f32.mxu0 0.0
    %968 = vmatmul.mubr.f32.gmra.mxu0 %v898
    %v969 = vpop.f32.mrf.mxu0
    %v970 = vadd.f32 0.0, %v969
    %v971 = vpop.f32.mrf.mxu0
    %972 = vmatprep.mubr.f32.mxu0 0.0
    %973 = vmatmul.mubr.f32.gmra.mxu0 %v901
    %v974 = vpop.f32.mrf.mxu0
    %v975 = vadd.f32 0.0, %v974
    %v976 = vpop.f32.mrf.mxu0
    %977 = vdwg.mxu0
    %v979 = vsel %vm241, %v488, 0
    %v982 = vsel %vm241, %v564, 0
    %984 = vmatprep.subr.mxu0 0.0
    %985 = vmatpush1.msra.mxu0 0.0
    %986 = vmatprep.subr.mxu0 0.0
    %987 = vmatpush1.msra.mxu0 0.0
    %988 = vmatprep.subr.mxu0 0.0
    %989 = vmatpush1.msra.mxu0 0.0
    %990 = vmatprep.subr.mxu0 0.0
    %991 = vmatpush1.msra.mxu0 0.0
    %992 = vmatprep.subr.mxu0 0.0
    %993 = vmatpush1.msra.mxu0 0.0
    %994 = vmatprep.subr.mxu0 0.0
    %995 = vmatpush1.msra.mxu0 0.0
    %996 = vmatprep.subr.mxu0 0.0
    %997 = vmatpush1.msra.mxu0 0.0
    %998 = vmatprep.subr.mxu0 0.0
    %999 = vmatpush1.msra.mxu0 0.0
    %1000 = vmatprep.subr.mxu0 0.0
    %1001 = vmatpush1.msra.mxu0 0.0
    %1002 = vmatprep.subr.mxu0 0.0
    %1003 = vmatpush1.msra.mxu0 0.0
    %1004 = vmatprep.subr.mxu0 0.0
    %1005 = vmatpush1.msra.mxu0 0.0
    %1006 = vmatprep.subr.mxu0 0.0
    %1007 = vmatpush1.msra.mxu0 0.0
    %1008 = vmatprep.subr.mxu0 0.0
    %1009 = vmatpush1.msra.mxu0 0.0
    %1010 = vmatprep.subr.mxu0 0.0
    %1011 = vmatpush1.msra.mxu0 0.0
    %1012 = vmatprep.subr.mxu0 0.0
    %1013 = vmatpush1.msra.mxu0 0.0
    %1014 = vmatprep.subr.mxu0 0.0
    %1015 = vmatpush1.msra.mxu0 %v128
    %1016 = vmatprep.subr.mxu0 0.0
    %1017 = vmatpush2.msra.mxu0 0.0
    %1018 = vmatprep.subr.mxu0 0.0
    %1019 = vmatpush2.msra.mxu0 0.0
    %1020 = vmatprep.subr.mxu0 0.0
    %1021 = vmatpush2.msra.mxu0 0.0
    %1022 = vmatprep.subr.mxu0 0.0
    %1023 = vmatpush2.msra.mxu0 0.0
    %1024 = vmatprep.subr.mxu0 0.0
    %1025 = vmatpush2.msra.mxu0 0.0
    %1026 = vmatprep.subr.mxu0 0.0
    %1027 = vmatpush2.msra.mxu0 0.0
    %1028 = vmatprep.subr.mxu0 0.0
    %1029 = vmatpush2.msra.mxu0 0.0
    %1030 = vmatprep.subr.mxu0 0.0
    %1031 = vmatpush2.msra.mxu0 0.0
    %1032 = vmatprep.subr.mxu0 0.0
    %1033 = vmatpush2.msra.mxu0 0.0
    %1034 = vmatprep.subr.mxu0 0.0
    %1035 = vmatpush2.msra.mxu0 0.0
    %1036 = vmatprep.subr.mxu0 0.0
    %1037 = vmatpush2.msra.mxu0 0.0
    %1038 = vmatprep.subr.mxu0 0.0
    %1039 = vmatpush2.msra.mxu0 0.0
    %1040 = vmatprep.subr.mxu0 0.0
    %1041 = vmatpush2.msra.mxu0 0.0
    %1042 = vmatprep.subr.mxu0 0.0
    %1043 = vmatpush2.msra.mxu0 0.0
    %1044 = vmatprep.subr.mxu0 0.0
    %1045 = vmatpush2.msra.mxu0 0.0
    %1046 = vmatprep.subr.mxu0 0.0
    %1047 = vmatpush2.msra.mxu0 0.0
    %1048 = vmatprep.mubr.f32.mxu0 0.0
    %1049 = vmatmul.mubr.f32.gmra.mxu0 %v979
    %v1050 = vpop.f32.mrf.mxu0
    %v1051 = vadd.f32 %v970, %v1050
    %v1052 = vpop.f32.mrf.mxu0
    %1053 = vmatprep.mubr.f32.mxu0 0.0
    %1054 = vmatmul.mubr.f32.gmra.mxu0 %v982
    %v1055 = vpop.f32.mrf.mxu0
    %v1056 = vadd.f32 %v975, %v1055
    %v1057 = vpop.f32.mrf.mxu0
    %1058 = vdwg.mxu0
    %1059 = vrot.lane.b32.xlu0 %v230, 112
    %v1060 = vpop.permute.xlu0 %1059
    %1061 = vrot.lane.b32.xlu0 %v230, 80
    %v1062 = vpop.permute.xlu0 %1061
    %v1063 = vsel %vm241, %v1060, 0
    %v1065 = vsel %vm241, %v1062, 0
    %1067 = vmatprep.subr.mxu0 0.0
    %1068 = vmatpush1.xpose.msra.mxu0 0.0
    %1069 = vmatprep.subr.mxu0 0.0
    %1070 = vmatpush1.xpose.msra.mxu0 0.0
    %1071 = vmatprep.subr.mxu0 0.0
    %1072 = vmatpush1.xpose.msra.mxu0 0.0
    %1073 = vmatprep.subr.mxu0 0.0
    %1074 = vmatpush1.xpose.msra.mxu0 0.0
    %1075 = vmatprep.subr.mxu0 0.0
    %1076 = vmatpush1.xpose.msra.mxu0 0.0
    %1077 = vmatprep.subr.mxu0 0.0
    %1078 = vmatpush1.xpose.msra.mxu0 0.0
    %1079 = vmatprep.subr.mxu0 0.0
    %1080 = vmatpush1.xpose.msra.mxu0 0.0
    %1081 = vmatprep.subr.mxu0 0.0
    %1082 = vmatpush1.xpose.msra.mxu0 0.0
    %1083 = vmatprep.subr.mxu0 0.0
    %1084 = vmatpush1.xpose.msra.mxu0 0.0
    %1085 = vmatprep.subr.mxu0 0.0
    %1086 = vmatpush1.xpose.msra.mxu0 0.0
    %1087 = vmatprep.subr.mxu0 0.0
    %1088 = vmatpush1.xpose.msra.mxu0 0.0
    %1089 = vmatprep.subr.mxu0 0.0
    %1090 = vmatpush1.xpose.msra.mxu0 0.0
    %1091 = vmatprep.subr.mxu0 0.0
    %1092 = vmatpush1.xpose.msra.mxu0 0.0
    %1093 = vmatprep.subr.mxu0 0.0
    %1094 = vmatpush1.xpose.msra.mxu0 0.0
    %1095 = vmatprep.subr.mxu0 0.0
    %1096 = vmatpush1.xpose.msra.mxu0 0.0
    %1097 = vmatprep.subr.mxu0 0.0
    %1098 = vmatpush1.xpose.msra.mxu0 %v1065
    %1099 = vmatprep.subr.mxu0 0.0
    %1100 = vmatpush2.xpose.msra.mxu0 0.0
    %1101 = vmatprep.subr.mxu0 0.0
    %1102 = vmatpush2.xpose.msra.mxu0 0.0
    %1103 = vmatprep.subr.mxu0 0.0
    %1104 = vmatpush2.xpose.msra.mxu0 0.0
    %1105 = vmatprep.subr.mxu0 0.0
    %1106 = vmatpush2.xpose.msra.mxu0 0.0
    %1107 = vmatprep.subr.mxu0 0.0
    %1108 = vmatpush2.xpose.msra.mxu0 0.0
    %1109 = vmatprep.subr.mxu0 0.0
    %1110 = vmatpush2.xpose.msra.mxu0 0.0
    %1111 = vmatprep.subr.mxu0 0.0
    %1112 = vmatpush2.xpose.msra.mxu0 0.0
    %1113 = vmatprep.subr.mxu0 0.0
    %1114 = vmatpush2.xpose.msra.mxu0 0.0
    %1115 = vmatprep.subr.mxu0 0.0
    %1116 = vmatpush2.xpose.msra.mxu0 0.0
    %1117 = vmatprep.subr.mxu0 0.0
    %1118 = vmatpush2.xpose.msra.mxu0 0.0
    %1119 = vmatprep.subr.mxu0 0.0
    %1120 = vmatpush2.xpose.msra.mxu0 0.0
    %1121 = vmatprep.subr.mxu0 0.0
    %1122 = vmatpush2.xpose.msra.mxu0 0.0
    %1123 = vmatprep.subr.mxu0 0.0
    %1124 = vmatpush2.xpose.msra.mxu0 0.0
    %1125 = vmatprep.subr.mxu0 0.0
    %1126 = vmatpush2.xpose.msra.mxu0 0.0
    %1127 = vmatprep.subr.mxu0 0.0
    %1128 = vmatpush2.xpose.msra.mxu0 0.0
    %1129 = vmatprep.subr.mxu0 0.0
    %1130 = vmatpush2.xpose.msra.mxu0 0.0
    %1131 = vmatprep.mubr.f32.mxu0 0.0
    %1132 = vmatmul.mubr.f32.gmra.mxu0 %v1063
    %v1133 = vpop.f32.mrf.mxu0
    %v1134 = vadd.f32 0.0, %v1133
    %v1135 = vpop.f32.mrf.mxu0
    %1136 = vdwg.mxu0
    %1137 = vrot.lane.b32.xlu0 %v235, 112
    %v1138 = vpop.permute.xlu0 %1137
    %1139 = vrot.lane.b32.xlu0 %v235, 80
    %v1140 = vpop.permute.xlu0 %1139
    %v1141 = vsel %vm241, %v1138, 0
    %v1143 = vsel %vm241, %v1140, 0
    %1145 = vmatprep.subr.mxu0 0.0
    %1146 = vmatpush1.xpose.msra.mxu0 0.0
    %1147 = vmatprep.subr.mxu0 0.0
    %1148 = vmatpush1.xpose.msra.mxu0 0.0
    %1149 = vmatprep.subr.mxu0 0.0
    %1150 = vmatpush1.xpose.msra.mxu0 0.0
    %1151 = vmatprep.subr.mxu0 0.0
    %1152 = vmatpush1.xpose.msra.mxu0 0.0
    %1153 = vmatprep.subr.mxu0 0.0
    %1154 = vmatpush1.xpose.msra.mxu0 0.0
    %1155 = vmatprep.subr.mxu0 0.0
    %1156 = vmatpush1.xpose.msra.mxu0 0.0
    %1157 = vmatprep.subr.mxu0 0.0
    %1158 = vmatpush1.xpose.msra.mxu0 0.0
    %1159 = vmatprep.subr.mxu0 0.0
    %1160 = vmatpush1.xpose.msra.mxu0 0.0
    %1161 = vmatprep.subr.mxu0 0.0
    %1162 = vmatpush1.xpose.msra.mxu0 0.0
    %1163 = vmatprep.subr.mxu0 0.0
    %1164 = vmatpush1.xpose.msra.mxu0 0.0
    %1165 = vmatprep.subr.mxu0 0.0
    %1166 = vmatpush1.xpose.msra.mxu0 0.0
    %1167 = vmatprep.subr.mxu0 0.0
    %1168 = vmatpush1.xpose.msra.mxu0 0.0
    %1169 = vmatprep.subr.mxu0 0.0
    %1170 = vmatpush1.xpose.msra.mxu0 0.0
    %1171 = vmatprep.subr.mxu0 0.0
    %1172 = vmatpush1.xpose.msra.mxu0 0.0
    %1173 = vmatprep.subr.mxu0 0.0
    %1174 = vmatpush1.xpose.msra.mxu0 0.0
    %1175 = vmatprep.subr.mxu0 0.0
    %1176 = vmatpush1.xpose.msra.mxu0 %v1143
    %1177 = vmatprep.subr.mxu0 0.0
    %1178 = vmatpush2.xpose.msra.mxu0 0.0
    %1179 = vmatprep.subr.mxu0 0.0
    %1180 = vmatpush2.xpose.msra.mxu0 0.0
    %1181 = vmatprep.subr.mxu0 0.0
    %1182 = vmatpush2.xpose.msra.mxu0 0.0
    %1183 = vmatprep.subr.mxu0 0.0
    %1184 = vmatpush2.xpose.msra.mxu0 0.0
    %1185 = vmatprep.subr.mxu0 0.0
    %1186 = vmatpush2.xpose.msra.mxu0 0.0
    %1187 = vmatprep.subr.mxu0 0.0
    %1188 = vmatpush2.xpose.msra.mxu0 0.0
    %1189 = vmatprep.subr.mxu0 0.0
    %1190 = vmatpush2.xpose.msra.mxu0 0.0
    %1191 = vmatprep.subr.mxu0 0.0
    %1192 = vmatpush2.xpose.msra.mxu0 0.0
    %1193 = vmatprep.subr.mxu0 0.0
    %1194 = vmatpush2.xpose.msra.mxu0 0.0
    %1195 = vmatprep.subr.mxu0 0.0
    %1196 = vmatpush2.xpose.msra.mxu0 0.0
    %1197 = vmatprep.subr.mxu0 0.0
    %1198 = vmatpush2.xpose.msra.mxu0 0.0
    %1199 = vmatprep.subr.mxu0 0.0
    %1200 = vmatpush2.xpose.msra.mxu0 0.0
    %1201 = vmatprep.subr.mxu0 0.0
    %1202 = vmatpush2.xpose.msra.mxu0 0.0
    %1203 = vmatprep.subr.mxu0 0.0
    %1204 = vmatpush2.xpose.msra.mxu0 0.0
    %1205 = vmatprep.subr.mxu0 0.0
    %1206 = vmatpush2.xpose.msra.mxu0 0.0
    %1207 = vmatprep.subr.mxu0 0.0
    %1208 = vmatpush2.xpose.msra.mxu0 0.0
    %1209 = vmatprep.mubr.f32.mxu0 0.0
    %1210 = vmatmul.mubr.f32.gmra.mxu0 %v1141
    %v1211 = vpop.f32.mrf.mxu0
    %v1212 = vadd.f32 0.0, %v1211
    %v1213 = vpop.f32.mrf.mxu0
    %1214 = vdwg.mxu0
    %v1215 = vsel %vm241, %v1134, -inf
    %1216 = vmax.xlane.f32.xlu0 %v1215
    %v1217 = vpop.xlane.xlu0 %1216
    %v1218 = vsel %vm241, %v1212, -inf
    %1219 = vmax.xlane.f32.xlu0 %v1218
    %v1220 = vpop.xlane.xlu0 %1219
    %v1221 = vsub.f32 %v1134, %v1217
    %v1222 = vsub.f32 %v1212, %v1220
    %v1223 = vmul.f32 %v1221, 1.442695
    %v1224 = vpow.pop %v1223
    %v1225 = vmul.f32 %v1222, 1.442695
    %v1226 = vpow.pop %v1225
    %v1227 = vsel %vm241, %v1224, 0.0
    %1228 = vadd.xlane.f32.xlu0 %v1227
    %v1229 = vpop.xlane.xlu0 %1228
    %v1230 = vsel %vm241, %v1226, 0.0
    %1231 = vadd.xlane.f32.xlu0 %v1230
    %v1232 = vpop.xlane.xlu0 %1231
    %v1233 = vrcp.pop %v1229
    %v1234 = vmul.f32 %v1224, %v1233
    %v1235 = vrcp.pop %v1232
    %v1236 = vmul.f32 %v1226, %v1235
    %1237 = vrot.lane.b32.xlu0 %v230, 48
    %v1238 = vpop.permute.xlu0 %1237
    %v1241 = vsel %vm241, %v1234, 0
    %1243 = vmatprep.subr.mxu0 0.0
    %1244 = vmatpush1.msra.mxu0 0.0
    %1245 = vmatprep.subr.mxu0 0.0
    %1246 = vmatpush1.msra.mxu0 0.0
    %1247 = vmatprep.subr.mxu0 0.0
    %1248 = vmatpush1.msra.mxu0 0.0
    %1249 = vmatprep.subr.mxu0 0.0
    %1250 = vmatpush1.msra.mxu0 0.0
    %1251 = vmatprep.subr.mxu0 0.0
    %1252 = vmatpush1.msra.mxu0 0.0
    %1253 = vmatprep.subr.mxu0 0.0
    %1254 = vmatpush1.msra.mxu0 0.0
    %1255 = vmatprep.subr.mxu0 0.0
    %1256 = vmatpush1.msra.mxu0 0.0
    %1257 = vmatprep.subr.mxu0 0.0
    %1258 = vmatpush1.msra.mxu0 0.0
    %1259 = vmatprep.subr.mxu0 0.0
    %1260 = vmatpush1.msra.mxu0 0.0
    %1261 = vmatprep.subr.mxu0 0.0
    %1262 = vmatpush1.msra.mxu0 0.0
    %1263 = vmatprep.subr.mxu0 0.0
    %1264 = vmatpush1.msra.mxu0 0.0
    %1265 = vmatprep.subr.mxu0 0.0
    %1266 = vmatpush1.msra.mxu0 0.0
    %1267 = vmatprep.subr.mxu0 0.0
    %1268 = vmatpush1.msra.mxu0 0.0
    %1269 = vmatprep.subr.mxu0 0.0
    %1270 = vmatpush1.msra.mxu0 0.0
    %1271 = vmatprep.subr.mxu0 0.0
    %1272 = vmatpush1.msra.mxu0 0.0
    %1273 = vmatprep.subr.mxu0 0.0
    %1274 = vmatpush1.msra.mxu0 %v1238
    %1275 = vmatprep.subr.mxu0 0.0
    %1276 = vmatpush2.msra.mxu0 0.0
    %1277 = vmatprep.subr.mxu0 0.0
    %1278 = vmatpush2.msra.mxu0 0.0
    %1279 = vmatprep.subr.mxu0 0.0
    %1280 = vmatpush2.msra.mxu0 0.0
    %1281 = vmatprep.subr.mxu0 0.0
    %1282 = vmatpush2.msra.mxu0 0.0
    %1283 = vmatprep.subr.mxu0 0.0
    %1284 = vmatpush2.msra.mxu0 0.0
    %1285 = vmatprep.subr.mxu0 0.0
    %1286 = vmatpush2.msra.mxu0 0.0
    %1287 = vmatprep.subr.mxu0 0.0
    %1288 = vmatpush2.msra.mxu0 0.0
    %1289 = vmatprep.subr.mxu0 0.0
    %1290 = vmatpush2.msra.mxu0 0.0
    %1291 = vmatprep.subr.mxu0 0.0
    %1292 = vmatpush2.msra.mxu0 0.0
    %1293 = vmatprep.subr.mxu0 0.0
    %1294 = vmatpush2.msra.mxu0 0.0
    %1295 = vmatprep.subr.mxu0 0.0
    %1296 = vmatpush2.msra.mxu0 0.0
    %1297 = vmatprep.subr.mxu0 0.0
    %1298 = vmatpush2.msra.mxu0 0.0
    %1299 = vmatprep.subr.mxu0 0.0
    %1300 = vmatpush2.msra.mxu0 0.0
    %1301 = vmatprep.subr.mxu0 0.0
    %1302 = vmatpush2.msra.mxu0 0.0
    %1303 = vmatprep.subr.mxu0 0.0
    %1304 = vmatpush2.msra.mxu0 0.0
    %1305 = vmatprep.subr.mxu0 0.0
    %1306 = vmatpush2.msra.mxu0 0.0
    %1307 = vmatprep.mubr.f32.mxu0 0.0
    %1308 = vmatmul.mubr.f32.gmra.mxu0 %v1241
    %v1309 = vpop.f32.mrf.mxu0
    %v1310 = vadd.f32 0.0, %v1309
    %v1311 = vpop.f32.mrf.mxu0
    %1312 = vdwg.mxu0
    %1313 = vrot.lane.b32.xlu0 %v235, 48
    %v1314 = vpop.permute.xlu0 %1313
    %v1317 = vsel %vm241, %v1236, 0
    %1319 = vmatprep.subr.mxu0 0.0
    %1320 = vmatpush1.msra.mxu0 0.0
    %1321 = vmatprep.subr.mxu0 0.0
    %1322 = vmatpush1.msra.mxu0 0.0
    %1323 = vmatprep.subr.mxu0 0.0
    %1324 = vmatpush1.msra.mxu0 0.0
    %1325 = vmatprep.subr.mxu0 0.0
    %1326 = vmatpush1.msra.mxu0 0.0
    %1327 = vmatprep.subr.mxu0 0.0
    %1328 = vmatpush1.msra.mxu0 0.0
    %1329 = vmatprep.subr.mxu0 0.0
    %1330 = vmatpush1.msra.mxu0 0.0
    %1331 = vmatprep.subr.mxu0 0.0
    %1332 = vmatpush1.msra.mxu0 0.0
    %1333 = vmatprep.subr.mxu0 0.0
    %1334 = vmatpush1.msra.mxu0 0.0
    %1335 = vmatprep.subr.mxu0 0.0
    %1336 = vmatpush1.msra.mxu0 0.0
    %1337 = vmatprep.subr.mxu0 0.0
    %1338 = vmatpush1.msra.mxu0 0.0
    %1339 = vmatprep.subr.mxu0 0.0
    %1340 = vmatpush1.msra.mxu0 0.0
    %1341 = vmatprep.subr.mxu0 0.0
    %1342 = vmatpush1.msra.mxu0 0.0
    %1343 = vmatprep.subr.mxu0 0.0
    %1344 = vmatpush1.msra.mxu0 0.0
    %1345 = vmatprep.subr.mxu0 0.0
    %1346 = vmatpush1.msra.mxu0 0.0
    %1347 = vmatprep.subr.mxu0 0.0
    %1348 = vmatpush1.msra.mxu0 0.0
    %1349 = vmatprep.subr.mxu0 0.0
    %1350 = vmatpush1.msra.mxu0 %v1314
    %1351 = vmatprep.subr.mxu0 0.0
    %1352 = vmatpush2.msra.mxu0 0.0
    %1353 = vmatprep.subr.mxu0 0.0
    %1354 = vmatpush2.msra.mxu0 0.0
    %1355 = vmatprep.subr.mxu0 0.0
    %1356 = vmatpush2.msra.mxu0 0.0
    %1357 = vmatprep.subr.mxu0 0.0
    %1358 = vmatpush2.msra.mxu0 0.0
    %1359 = vmatprep.subr.mxu0 0.0
    %1360 = vmatpush2.msra.mxu0 0.0
    %1361 = vmatprep.subr.mxu0 0.0
    %1362 = vmatpush2.msra.mxu0 0.0
    %1363 = vmatprep.subr.mxu0 0.0
    %1364 = vmatpush2.msra.mxu0 0.0
    %1365 = vmatprep.subr.mxu0 0.0
    %1366 = vmatpush2.msra.mxu0 0.0
    %1367 = vmatprep.subr.mxu0 0.0
    %1368 = vmatpush2.msra.mxu0 0.0
    %1369 = vmatprep.subr.mxu0 0.0
    %1370 = vmatpush2.msra.mxu0 0.0
    %1371 = vmatprep.subr.mxu0 0.0
    %1372 = vmatpush2.msra.mxu0 0.0
    %1373 = vmatprep.subr.mxu0 0.0
    %1374 = vmatpush2.msra.mxu0 0.0
    %1375 = vmatprep.subr.mxu0 0.0
    %1376 = vmatpush2.msra.mxu0 0.0
    %1377 = vmatprep.subr.mxu0 0.0
    %1378 = vmatpush2.msra.mxu0 0.0
    %1379 = vmatprep.subr.mxu0 0.0
    %1380 = vmatpush2.msra.mxu0 0.0
    %1381 = vmatprep.subr.mxu0 0.0
    %1382 = vmatpush2.msra.mxu0 0.0
    %1383 = vmatprep.mubr.f32.mxu0 0.0
    %1384 = vmatmul.mubr.f32.gmra.mxu0 %v1317
    %v1385 = vpop.f32.mrf.mxu0
    %v1386 = vadd.f32 0.0, %v1385
    %v1387 = vpop.f32.mrf.mxu0
    %1388 = vdwg.mxu0
    %v1390 = vsel %vm241, %v1310, 0
    %v1393 = vsel %vm241, %v1386, 0
    %1395 = vmatprep.subr.mxu0 0.0
    %1396 = vmatpush1.msra.mxu0 0.0
    %1397 = vmatprep.subr.mxu0 0.0
    %1398 = vmatpush1.msra.mxu0 0.0
    %1399 = vmatprep.subr.mxu0 0.0
    %1400 = vmatpush1.msra.mxu0 0.0
    %1401 = vmatprep.subr.mxu0 0.0
    %1402 = vmatpush1.msra.mxu0 0.0
    %1403 = vmatprep.subr.mxu0 0.0
    %1404 = vmatpush1.msra.mxu0 0.0
    %1405 = vmatprep.subr.mxu0 0.0
    %1406 = vmatpush1.msra.mxu0 0.0
    %1407 = vmatprep.subr.mxu0 0.0
    %1408 = vmatpush1.msra.mxu0 0.0
    %1409 = vmatprep.subr.mxu0 0.0
    %1410 = vmatpush1.msra.mxu0 0.0
    %1411 = vmatprep.subr.mxu0 0.0
    %1412 = vmatpush1.msra.mxu0 0.0
    %1413 = vmatprep.subr.mxu0 0.0
    %1414 = vmatpush1.msra.mxu0 0.0
    %1415 = vmatprep.subr.mxu0 0.0
    %1416 = vmatpush1.msra.mxu0 0.0
    %1417 = vmatprep.subr.mxu0 0.0
    %1418 = vmatpush1.msra.mxu0 0.0
    %1419 = vmatprep.subr.mxu0 0.0
    %1420 = vmatpush1.msra.mxu0 0.0
    %1421 = vmatprep.subr.mxu0 0.0
    %1422 = vmatpush1.msra.mxu0 0.0
    %1423 = vmatprep.subr.mxu0 0.0
    %1424 = vmatpush1.msra.mxu0 0.0
    %1425 = vmatprep.subr.mxu0 0.0
    %1426 = vmatpush1.msra.mxu0 %v130
    %1427 = vmatprep.subr.mxu0 0.0
    %1428 = vmatpush2.msra.mxu0 0.0
    %1429 = vmatprep.subr.mxu0 0.0
    %1430 = vmatpush2.msra.mxu0 0.0
    %1431 = vmatprep.subr.mxu0 0.0
    %1432 = vmatpush2.msra.mxu0 0.0
    %1433 = vmatprep.subr.mxu0 0.0
    %1434 = vmatpush2.msra.mxu0 0.0
    %1435 = vmatprep.subr.mxu0 0.0
    %1436 = vmatpush2.msra.mxu0 0.0
    %1437 = vmatprep.subr.mxu0 0.0
    %1438 = vmatpush2.msra.mxu0 0.0
    %1439 = vmatprep.subr.mxu0 0.0
    %1440 = vmatpush2.msra.mxu0 0.0
    %1441 = vmatprep.subr.mxu0 0.0
    %1442 = vmatpush2.msra.mxu0 0.0
    %1443 = vmatprep.subr.mxu0 0.0
    %1444 = vmatpush2.msra.mxu0 0.0
    %1445 = vmatprep.subr.mxu0 0.0
    %1446 = vmatpush2.msra.mxu0 0.0
    %1447 = vmatprep.subr.mxu0 0.0
    %1448 = vmatpush2.msra.mxu0 0.0
    %1449 = vmatprep.subr.mxu0 0.0
    %1450 = vmatpush2.msra.mxu0 0.0
    %1451 = vmatprep.subr.mxu0 0.0
    %1452 = vmatpush2.msra.mxu0 0.0
    %1453 = vmatprep.subr.mxu0 0.0
    %1454 = vmatpush2.msra.mxu0 0.0
    %1455 = vmatprep.subr.mxu0 0.0
    %1456 = vmatpush2.msra.mxu0 0.0
    %1457 = vmatprep.subr.mxu0 0.0
    %1458 = vmatpush2.msra.mxu0 0.0
    %1459 = vmatprep.mubr.f32.mxu0 0.0
    %1460 = vmatmul.mubr.f32.gmra.mxu0 %v1390
    %v1461 = vpop.f32.mrf.mxu0
    %v1462 = vadd.f32 0.0, %v1461
    %v1463 = vpop.f32.mrf.mxu0
    %1464 = vmatprep.mubr.f32.mxu0 0.0
    %1465 = vmatmul.mubr.f32.gmra.mxu0 %v1393
    %v1466 = vpop.f32.mrf.mxu0
    %v1467 = vadd.f32 0.0, %v1466
    %v1468 = vpop.f32.mrf.mxu0
    %1469 = vdwg.mxu0
    %v1470 = vadd.f32 %v1051, %v1462
    %v1471 = vadd.f32 %v1056, %v1467
    %1472 = vrot.lane.b32.xlu0 %v230, 104
    %v1473 = vpop.permute.xlu0 %1472
    %1474 = vrot.lane.b32.xlu0 %v230, 72
    %v1475 = vpop.permute.xlu0 %1474
    %v1476 = vsel %vm241, %v1473, 0
    %v1478 = vsel %vm241, %v1475, 0
    %1480 = vmatprep.subr.mxu0 0.0
    %1481 = vmatpush1.xpose.msra.mxu0 0.0
    %1482 = vmatprep.subr.mxu0 0.0
    %1483 = vmatpush1.xpose.msra.mxu0 0.0
    %1484 = vmatprep.subr.mxu0 0.0
    %1485 = vmatpush1.xpose.msra.mxu0 0.0
    %1486 = vmatprep.subr.mxu0 0.0
    %1487 = vmatpush1.xpose.msra.mxu0 0.0
    %1488 = vmatprep.subr.mxu0 0.0
    %1489 = vmatpush1.xpose.msra.mxu0 0.0
    %1490 = vmatprep.subr.mxu0 0.0
    %1491 = vmatpush1.xpose.msra.mxu0 0.0
    %1492 = vmatprep.subr.mxu0 0.0
    %1493 = vmatpush1.xpose.msra.mxu0 0.0
    %1494 = vmatprep.subr.mxu0 0.0
    %1495 = vmatpush1.xpose.msra.mxu0 0.0
    %1496 = vmatprep.subr.mxu0 0.0
    %1497 = vmatpush1.xpose.msra.mxu0 0.0
    %1498 = vmatprep.subr.mxu0 0.0
    %1499 = vmatpush1.xpose.msra.mxu0 0.0
    %1500 = vmatprep.subr.mxu0 0.0
    %1501 = vmatpush1.xpose.msra.mxu0 0.0
    %1502 = vmatprep.subr.mxu0 0.0
    %1503 = vmatpush1.xpose.msra.mxu0 0.0
    %1504 = vmatprep.subr.mxu0 0.0
    %1505 = vmatpush1.xpose.msra.mxu0 0.0
    %1506 = vmatprep.subr.mxu0 0.0
    %1507 = vmatpush1.xpose.msra.mxu0 0.0
    %1508 = vmatprep.subr.mxu0 0.0
    %1509 = vmatpush1.xpose.msra.mxu0 0.0
    %1510 = vmatprep.subr.mxu0 0.0
    %1511 = vmatpush1.xpose.msra.mxu0 %v1478
    %1512 = vmatprep.subr.mxu0 0.0
    %1513 = vmatpush2.xpose.msra.mxu0 0.0
    %1514 = vmatprep.subr.mxu0 0.0
    %1515 = vmatpush2.xpose.msra.mxu0 0.0
    %1516 = vmatprep.subr.mxu0 0.0
    %1517 = vmatpush2.xpose.msra.mxu0 0.0
    %1518 = vmatprep.subr.mxu0 0.0
    %1519 = vmatpush2.xpose.msra.mxu0 0.0
    %1520 = vmatprep.subr.mxu0 0.0
    %1521 = vmatpush2.xpose.msra.mxu0 0.0
    %1522 = vmatprep.subr.mxu0 0.0
    %1523 = vmatpush2.xpose.msra.mxu0 0.0
    %1524 = vmatprep.subr.mxu0 0.0
    %1525 = vmatpush2.xpose.msra.mxu0 0.0
    %1526 = vmatprep.subr.mxu0 0.0
    %1527 = vmatpush2.xpose.msra.mxu0 0.0
    %1528 = vmatprep.subr.mxu0 0.0
    %1529 = vmatpush2.xpose.msra.mxu0 0.0
    %1530 = vmatprep.subr.mxu0 0.0
    %1531 = vmatpush2.xpose.msra.mxu0 0.0
    %1532 = vmatprep.subr.mxu0 0.0
    %1533 = vmatpush2.xpose.msra.mxu0 0.0
    %1534 = vmatprep.subr.mxu0 0.0
    %1535 = vmatpush2.xpose.msra.mxu0 0.0
    %1536 = vmatprep.subr.mxu0 0.0
    %1537 = vmatpush2.xpose.msra.mxu0 0.0
    %1538 = vmatprep.subr.mxu0 0.0
    %1539 = vmatpush2.xpose.msra.mxu0 0.0
    %1540 = vmatprep.subr.mxu0 0.0
    %1541 = vmatpush2.xpose.msra.mxu0 0.0
    %1542 = vmatprep.subr.mxu0 0.0
    %1543 = vmatpush2.xpose.msra.mxu0 0.0
    %1544 = vmatprep.mubr.f32.mxu0 0.0
    %1545 = vmatmul.mubr.f32.gmra.mxu0 %v1476
    %v1546 = vpop.f32.mrf.mxu0
    %v1547 = vadd.f32 0.0, %v1546
    %v1548 = vpop.f32.mrf.mxu0
    %1549 = vdwg.mxu0
    %1550 = vrot.lane.b32.xlu0 %v235, 104
    %v1551 = vpop.permute.xlu0 %1550
    %1552 = vrot.lane.b32.xlu0 %v235, 72
    %v1553 = vpop.permute.xlu0 %1552
    %v1554 = vsel %vm241, %v1551, 0
    %v1556 = vsel %vm241, %v1553, 0
    %1558 = vmatprep.subr.mxu0 0.0
    %1559 = vmatpush1.xpose.msra.mxu0 0.0
    %1560 = vmatprep.subr.mxu0 0.0
    %1561 = vmatpush1.xpose.msra.mxu0 0.0
    %1562 = vmatprep.subr.mxu0 0.0
    %1563 = vmatpush1.xpose.msra.mxu0 0.0
    %1564 = vmatprep.subr.mxu0 0.0
    %1565 = vmatpush1.xpose.msra.mxu0 0.0
    %1566 = vmatprep.subr.mxu0 0.0
    %1567 = vmatpush1.xpose.msra.mxu0 0.0
    %1568 = vmatprep.subr.mxu0 0.0
    %1569 = vmatpush1.xpose.msra.mxu0 0.0
    %1570 = vmatprep.subr.mxu0 0.0
    %1571 = vmatpush1.xpose.msra.mxu0 0.0
    %1572 = vmatprep.subr.mxu0 0.0
    %1573 = vmatpush1.xpose.msra.mxu0 0.0
    %1574 = vmatprep.subr.mxu0 0.0
    %1575 = vmatpush1.xpose.msra.mxu0 0.0
    %1576 = vmatprep.subr.mxu0 0.0
    %1577 = vmatpush1.xpose.msra.mxu0 0.0
    %1578 = vmatprep.subr.mxu0 0.0
    %1579 = vmatpush1.xpose.msra.mxu0 0.0
    %1580 = vmatprep.subr.mxu0 0.0
    %1581 = vmatpush1.xpose.msra.mxu0 0.0
    %1582 = vmatprep.subr.mxu0 0.0
    %1583 = vmatpush1.xpose.msra.mxu0 0.0
    %1584 = vmatprep.subr.mxu0 0.0
    %1585 = vmatpush1.xpose.msra.mxu0 0.0
    %1586 = vmatprep.subr.mxu0 0.0
    %1587 = vmatpush1.xpose.msra.mxu0 0.0
    %1588 = vmatprep.subr.mxu0 0.0
    %1589 = vmatpush1.xpose.msra.mxu0 %v1556
    %1590 = vmatprep.subr.mxu0 0.0
    %1591 = vmatpush2.xpose.msra.mxu0 0.0
    %1592 = vmatprep.subr.mxu0 0.0
    %1593 = vmatpush2.xpose.msra.mxu0 0.0
    %1594 = vmatprep.subr.mxu0 0.0
    %1595 = vmatpush2.xpose.msra.mxu0 0.0
    %1596 = vmatprep.subr.mxu0 0.0
    %1597 = vmatpush2.xpose.msra.mxu0 0.0
    %1598 = vmatprep.subr.mxu0 0.0
    %1599 = vmatpush2.xpose.msra.mxu0 0.0
    %1600 = vmatprep.subr.mxu0 0.0
    %1601 = vmatpush2.xpose.msra.mxu0 0.0
    %1602 = vmatprep.subr.mxu0 0.0
    %1603 = vmatpush2.xpose.msra.mxu0 0.0
    %1604 = vmatprep.subr.mxu0 0.0
    %1605 = vmatpush2.xpose.msra.mxu0 0.0
    %1606 = vmatprep.subr.mxu0 0.0
    %1607 = vmatpush2.xpose.msra.mxu0 0.0
    %1608 = vmatprep.subr.mxu0 0.0
    %1609 = vmatpush2.xpose.msra.mxu0 0.0
    %1610 = vmatprep.subr.mxu0 0.0
    %1611 = vmatpush2.xpose.msra.mxu0 0.0
    %1612 = vmatprep.subr.mxu0 0.0
    %1613 = vmatpush2.xpose.msra.mxu0 0.0
    %1614 = vmatprep.subr.mxu0 0.0
    %1615 = vmatpush2.xpose.msra.mxu0 0.0
    %1616 = vmatprep.subr.mxu0 0.0
    %1617 = vmatpush2.xpose.msra.mxu0 0.0
    %1618 = vmatprep.subr.mxu0 0.0
    %1619 = vmatpush2.xpose.msra.mxu0 0.0
    %1620 = vmatprep.subr.mxu0 0.0
    %1621 = vmatpush2.xpose.msra.mxu0 0.0
    %1622 = vmatprep.mubr.f32.mxu0 0.0
    %1623 = vmatmul.mubr.f32.gmra.mxu0 %v1554
    %v1624 = vpop.f32.mrf.mxu0
    %v1625 = vadd.f32 0.0, %v1624
    %v1626 = vpop.f32.mrf.mxu0
    %1627 = vdwg.mxu0
    %v1628 = vsel %vm241, %v1547, -inf
    %1629 = vmax.xlane.f32.xlu0 %v1628
    %v1630 = vpop.xlane.xlu0 %1629
    %v1631 = vsel %vm241, %v1625, -inf
    %1632 = vmax.xlane.f32.xlu0 %v1631
    %v1633 = vpop.xlane.xlu0 %1632
    %v1634 = vsub.f32 %v1547, %v1630
    %v1635 = vsub.f32 %v1625, %v1633
    %v1636 = vmul.f32 %v1634, 1.442695
    %v1637 = vpow.pop %v1636
    %v1638 = vmul.f32 %v1635, 1.442695
    %v1639 = vpow.pop %v1638
    %v1640 = vsel %vm241, %v1637, 0.0
    %1641 = vadd.xlane.f32.xlu0 %v1640
    %v1642 = vpop.xlane.xlu0 %1641
    %v1643 = vsel %vm241, %v1639, 0.0
    %1644 = vadd.xlane.f32.xlu0 %v1643
    %v1645 = vpop.xlane.xlu0 %1644
    %v1646 = vrcp.pop %v1642
    %v1647 = vmul.f32 %v1637, %v1646
    %v1648 = vrcp.pop %v1645
    %v1649 = vmul.f32 %v1639, %v1648
    %1650 = vrot.lane.b32.xlu0 %v230, 40
    %v1651 = vpop.permute.xlu0 %1650
    %v1654 = vsel %vm241, %v1647, 0
    %1656 = vmatprep.subr.mxu0 0.0
    %1657 = vmatpush1.msra.mxu0 0.0
    %1658 = vmatprep.subr.mxu0 0.0
    %1659 = vmatpush1.msra.mxu0 0.0
    %1660 = vmatprep.subr.mxu0 0.0
    %1661 = vmatpush1.msra.mxu0 0.0
    %1662 = vmatprep.subr.mxu0 0.0
    %1663 = vmatpush1.msra.mxu0 0.0
    %1664 = vmatprep.subr.mxu0 0.0
    %1665 = vmatpush1.msra.mxu0 0.0
    %1666 = vmatprep.subr.mxu0 0.0
    %1667 = vmatpush1.msra.mxu0 0.0
    %1668 = vmatprep.subr.mxu0 0.0
    %1669 = vmatpush1.msra.mxu0 0.0
    %1670 = vmatprep.subr.mxu0 0.0
    %1671 = vmatpush1.msra.mxu0 0.0
    %1672 = vmatprep.subr.mxu0 0.0
    %1673 = vmatpush1.msra.mxu0 0.0
    %1674 = vmatprep.subr.mxu0 0.0
    %1675 = vmatpush1.msra.mxu0 0.0
    %1676 = vmatprep.subr.mxu0 0.0
    %1677 = vmatpush1.msra.mxu0 0.0
    %1678 = vmatprep.subr.mxu0 0.0
    %1679 = vmatpush1.msra.mxu0 0.0
    %1680 = vmatprep.subr.mxu0 0.0
    %1681 = vmatpush1.msra.mxu0 0.0
    %1682 = vmatprep.subr.mxu0 0.0
    %1683 = vmatpush1.msra.mxu0 0.0
    %1684 = vmatprep.subr.mxu0 0.0
    %1685 = vmatpush1.msra.mxu0 0.0
    %1686 = vmatprep.subr.mxu0 0.0
    %1687 = vmatpush1.msra.mxu0 %v1651
    %1688 = vmatprep.subr.mxu0 0.0
    %1689 = vmatpush2.msra.mxu0 0.0
    %1690 = vmatprep.subr.mxu0 0.0
    %1691 = vmatpush2.msra.mxu0 0.0
    %1692 = vmatprep.subr.mxu0 0.0
    %1693 = vmatpush2.msra.mxu0 0.0
    %1694 = vmatprep.subr.mxu0 0.0
    %1695 = vmatpush2.msra.mxu0 0.0
    %1696 = vmatprep.subr.mxu0 0.0
    %1697 = vmatpush2.msra.mxu0 0.0
    %1698 = vmatprep.subr.mxu0 0.0
    %1699 = vmatpush2.msra.mxu0 0.0
    %1700 = vmatprep.subr.mxu0 0.0
    %1701 = vmatpush2.msra.mxu0 0.0
    %1702 = vmatprep.subr.mxu0 0.0
    %1703 = vmatpush2.msra.mxu0 0.0
    %1704 = vmatprep.subr.mxu0 0.0
    %1705 = vmatpush2.msra.mxu0 0.0
    %1706 = vmatprep.subr.mxu0 0.0
    %1707 = vmatpush2.msra.mxu0 0.0
    %1708 = vmatprep.subr.mxu0 0.0
    %1709 = vmatpush2.msra.mxu0 0.0
    %1710 = vmatprep.subr.mxu0 0.0
    %1711 = vmatpush2.msra.mxu0 0.0
    %1712 = vmatprep.subr.mxu0 0.0
    %1713 = vmatpush2.msra.mxu0 0.0
    %1714 = vmatprep.subr.mxu0 0.0
    %1715 = vmatpush2.msra.mxu0 0.0
    %1716 = vmatprep.subr.mxu0 0.0
    %1717 = vmatpush2.msra.mxu0 0.0
    %1718 = vmatprep.subr.mxu0 0.0
    %1719 = vmatpush2.msra.mxu0 0.0
    %1720 = vmatprep.mubr.f32.mxu0 0.0
    %1721 = vmatmul.mubr.f32.gmra.mxu0 %v1654
    %v1722 = vpop.f32.mrf.mxu0
    %v1723 = vadd.f32 0.0, %v1722
    %v1724 = vpop.f32.mrf.mxu0
    %1725 = vdwg.mxu0
    %1726 = vrot.lane.b32.xlu0 %v235, 40
    %v1727 = vpop.permute.xlu0 %1726
    %v1730 = vsel %vm241, %v1649, 0
    %1732 = vmatprep.subr.mxu0 0.0
    %1733 = vmatpush1.msra.mxu0 0.0
    %1734 = vmatprep.subr.mxu0 0.0
    %1735 = vmatpush1.msra.mxu0 0.0
    %1736 = vmatprep.subr.mxu0 0.0
    %1737 = vmatpush1.msra.mxu0 0.0
    %1738 = vmatprep.subr.mxu0 0.0
    %1739 = vmatpush1.msra.mxu0 0.0
    %1740 = vmatprep.subr.mxu0 0.0
    %1741 = vmatpush1.msra.mxu0 0.0
    %1742 = vmatprep.subr.mxu0 0.0
    %1743 = vmatpush1.msra.mxu0 0.0
    %1744 = vmatprep.subr.mxu0 0.0
    %1745 = vmatpush1.msra.mxu0 0.0
    %1746 = vmatprep.subr.mxu0 0.0
    %1747 = vmatpush1.msra.mxu0 0.0
    %1748 = vmatprep.subr.mxu0 0.0
    %1749 = vmatpush1.msra.mxu0 0.0
    %1750 = vmatprep.subr.mxu0 0.0
    %1751 = vmatpush1.msra.mxu0 0.0
    %1752 = vmatprep.subr.mxu0 0.0
    %1753 = vmatpush1.msra.mxu0 0.0
    %1754 = vmatprep.subr.mxu0 0.0
    %1755 = vmatpush1.msra.mxu0 0.0
    %1756 = vmatprep.subr.mxu0 0.0
    %1757 = vmatpush1.msra.mxu0 0.0
    %1758 = vmatprep.subr.mxu0 0.0
    %1759 = vmatpush1.msra.mxu0 0.0
    %1760 = vmatprep.subr.mxu0 0.0
    %1761 = vmatpush1.msra.mxu0 0.0
    %1762 = vmatprep.subr.mxu0 0.0
    %1763 = vmatpush1.msra.mxu0 %v1727
    %1764 = vmatprep.subr.mxu0 0.0
    %1765 = vmatpush2.msra.mxu0 0.0
    %1766 = vmatprep.subr.mxu0 0.0
    %1767 = vmatpush2.msra.mxu0 0.0
    %1768 = vmatprep.subr.mxu0 0.0
    %1769 = vmatpush2.msra.mxu0 0.0
    %1770 = vmatprep.subr.mxu0 0.0
    %1771 = vmatpush2.msra.mxu0 0.0
    %1772 = vmatprep.subr.mxu0 0.0
    %1773 = vmatpush2.msra.mxu0 0.0
    %1774 = vmatprep.subr.mxu0 0.0
    %1775 = vmatpush2.msra.mxu0 0.0
    %1776 = vmatprep.subr.mxu0 0.0
    %1777 = vmatpush2.msra.mxu0 0.0
    %1778 = vmatprep.subr.mxu0 0.0
    %1779 = vmatpush2.msra.mxu0 0.0
    %1780 = vmatprep.subr.mxu0 0.0
    %1781 = vmatpush2.msra.mxu0 0.0
    %1782 = vmatprep.subr.mxu0 0.0
    %1783 = vmatpush2.msra.mxu0 0.0
    %1784 = vmatprep.subr.mxu0 0.0
    %1785 = vmatpush2.msra.mxu0 0.0
    %1786 = vmatprep.subr.mxu0 0.0
    %1787 = vmatpush2.msra.mxu0 0.0
    %1788 = vmatprep.subr.mxu0 0.0
    %1789 = vmatpush2.msra.mxu0 0.0
    %1790 = vmatprep.subr.mxu0 0.0
    %1791 = vmatpush2.msra.mxu0 0.0
    %1792 = vmatprep.subr.mxu0 0.0
    %1793 = vmatpush2.msra.mxu0 0.0
    %1794 = vmatprep.subr.mxu0 0.0
    %1795 = vmatpush2.msra.mxu0 0.0
    %1796 = vmatprep.mubr.f32.mxu0 0.0
    %1797 = vmatmul.mubr.f32.gmra.mxu0 %v1730
    %v1798 = vpop.f32.mrf.mxu0
    %v1799 = vadd.f32 0.0, %v1798
    %v1800 = vpop.f32.mrf.mxu0
    %1801 = vdwg.mxu0
    %v1803 = vsel %vm241, %v1723, 0
    %v1806 = vsel %vm241, %v1799, 0
    %1808 = vmatprep.subr.mxu0 0.0
    %1809 = vmatpush1.msra.mxu0 0.0
    %1810 = vmatprep.subr.mxu0 0.0
    %1811 = vmatpush1.msra.mxu0 0.0
    %1812 = vmatprep.subr.mxu0 0.0
    %1813 = vmatpush1.msra.mxu0 0.0
    %1814 = vmatprep.subr.mxu0 0.0
    %1815 = vmatpush1.msra.mxu0 0.0
    %1816 = vmatprep.subr.mxu0 0.0
    %1817 = vmatpush1.msra.mxu0 0.0
    %1818 = vmatprep.subr.mxu0 0.0
    %1819 = vmatpush1.msra.mxu0 0.0
    %1820 = vmatprep.subr.mxu0 0.0
    %1821 = vmatpush1.msra.mxu0 0.0
    %1822 = vmatprep.subr.mxu0 0.0
    %1823 = vmatpush1.msra.mxu0 0.0
    %1824 = vmatprep.subr.mxu0 0.0
    %1825 = vmatpush1.msra.mxu0 0.0
    %1826 = vmatprep.subr.mxu0 0.0
    %1827 = vmatpush1.msra.mxu0 0.0
    %1828 = vmatprep.subr.mxu0 0.0
    %1829 = vmatpush1.msra.mxu0 0.0
    %1830 = vmatprep.subr.mxu0 0.0
    %1831 = vmatpush1.msra.mxu0 0.0
    %1832 = vmatprep.subr.mxu0 0.0
    %1833 = vmatpush1.msra.mxu0 0.0
    %1834 = vmatprep.subr.mxu0 0.0
    %1835 = vmatpush1.msra.mxu0 0.0
    %1836 = vmatprep.subr.mxu0 0.0
    %1837 = vmatpush1.msra.mxu0 0.0
    %1838 = vmatprep.subr.mxu0 0.0
    %1839 = vmatpush1.msra.mxu0 %v131
    %1840 = vmatprep.subr.mxu0 0.0
    %1841 = vmatpush2.msra.mxu0 0.0
    %1842 = vmatprep.subr.mxu0 0.0
    %1843 = vmatpush2.msra.mxu0 0.0
    %1844 = vmatprep.subr.mxu0 0.0
    %1845 = vmatpush2.msra.mxu0 0.0
    %1846 = vmatprep.subr.mxu0 0.0
    %1847 = vmatpush2.msra.mxu0 0.0
    %1848 = vmatprep.subr.mxu0 0.0
    %1849 = vmatpush2.msra.mxu0 0.0
    %1850 = vmatprep.subr.mxu0 0.0
    %1851 = vmatpush2.msra.mxu0 0.0
    %1852 = vmatprep.subr.mxu0 0.0
    %1853 = vmatpush2.msra.mxu0 0.0
    %1854 = vmatprep.subr.mxu0 0.0
    %1855 = vmatpush2.msra.mxu0 0.0
    %1856 = vmatprep.subr.mxu0 0.0
    %1857 = vmatpush2.msra.mxu0 0.0
    %1858 = vmatprep.subr.mxu0 0.0
    %1859 = vmatpush2.msra.mxu0 0.0
    %1860 = vmatprep.subr.mxu0 0.0
    %1861 = vmatpush2.msra.mxu0 0.0
    %1862 = vmatprep.subr.mxu0 0.0
    %1863 = vmatpush2.msra.mxu0 0.0
    %1864 = vmatprep.subr.mxu0 0.0
    %1865 = vmatpush2.msra.mxu0 0.0
    %1866 = vmatprep.subr.mxu0 0.0
    %1867 = vmatpush2.msra.mxu0 0.0
    %1868 = vmatprep.subr.mxu0 0.0
    %1869 = vmatpush2.msra.mxu0 0.0
    %1870 = vmatprep.subr.mxu0 0.0
    %1871 = vmatpush2.msra.mxu0 0.0
    %1872 = vmatprep.mubr.f32.mxu0 0.0
    %1873 = vmatmul.mubr.f32.gmra.mxu0 %v1803
    %v1874 = vpop.f32.mrf.mxu0
    %v1875 = vadd.f32 0.0, %v1874
    %v1876 = vpop.f32.mrf.mxu0
    %1877 = vmatprep.mubr.f32.mxu0 0.0
    %1878 = vmatmul.mubr.f32.gmra.mxu0 %v1806
    %v1879 = vpop.f32.mrf.mxu0
    %v1880 = vadd.f32 0.0, %v1879
    %v1881 = vpop.f32.mrf.mxu0
    %1882 = vdwg.mxu0
    %v1883 = vadd.f32 %v1470, %v1875
    %v1884 = vadd.f32 %v1471, %v1880
    %v1885 = vadd.f32 %v121, %v1883
    %v1886 = vadd.f32 %v122, %v1884
    %v1888 = vlaneseq
    %v1889 = vshrl.u32 %v1888, 7
    %v1890 = vsub.s32 0, %v1889
    %v1891 = vrot.slane %v132, %v1890
    %v1893 = vadd.f32 %v1885, %v1891
    %v1894 = vadd.f32 %v1886, %v1891
    %v1895 = vsel %vm79, %v1893, 0.0
    %1896 = vadd.xlane.f32.xlu0 %v1895
    %v1897 = vpop.xlane.xlu0 %1896
    %v1898 = vsel %vm79, %v1894, 0.0
    %1899 = vadd.xlane.f32.xlu0 %v1898
    %v1900 = vpop.xlane.xlu0 %1899
    %v1901 = vmul.f32 %v1897, %v86
    %v1902 = vmul.f32 %v1900, %v86
    %v1903 = vsub.f32 %v1893, %v1901
    %v1904 = vsub.f32 %v1894, %v1902
    %v1905 = vmul.f32 %v1903, %v1903
    %v1906 = vmul.f32 %v1904, %v1904
    %v1907 = vsel %vm79, %v1905, 0.0
    %1908 = vadd.xlane.f32.xlu0 %v1907
    %v1909 = vpop.xlane.xlu0 %1908
    %v1910 = vsel %vm79, %v1906, 0.0
    %1911 = vadd.xlane.f32.xlu0 %v1910
    %v1912 = vpop.xlane.xlu0 %1911
    %v1913 = vmul.f32 %v1909, %v86
    %v1914 = vmul.f32 %v1912, %v86
    %v1915 = vadd.f32 %v1913, 1e-12
    %v1916 = vadd.f32 %v1914, 1e-12
    %v1917 = vrsqrt.pop %v1915
    %v1918 = vrsqrt.pop %v1916
    %v1919 = vmul.f32 %v1903, %v1917
    %v1920 = vmul.f32 %v1904, %v1918
    %v1922 = vlaneseq
    %v1923 = vshrl.u32 %v1922, 7
    %v1924 = vsub.s32 0, %v1923
    %v1925 = vrot.slane %v133, %v1924
    %v1927 = vmul.f32 %v1919, %v1925
    %v1928 = vmul.f32 %v1920, %v1925
    %v1930 = vlaneseq
    %v1931 = vshrl.u32 %v1930, 7
    %v1932 = vsub.s32 0, %v1931
    %v1933 = vrot.slane %v134, %v1932
    %v1935 = vadd.f32 %v1927, %v1933
    %v1936 = vadd.f32 %v1928, %v1933
    %v1938 = vlaneseq
    %v1939 = vshrl.u32 %v1938, 7
    %v1940 = vsub.s32 0, %v1939
    %v1941 = vrot.slane %v139, %v1940
    %v1944 = vsel %vm79, %v1935, 0
    %v1947 = vsel %vm79, %v1936, 0
    %1949 = vmatprep.subr.mxu0 0.0
    %1950 = vmatpush1.msra.mxu0 0.0
    %1951 = vmatprep.subr.mxu0 0.0
    %1952 = vmatpush1.msra.mxu0 0.0
    %1953 = vmatprep.subr.mxu0 0.0
    %1954 = vmatpush1.msra.mxu0 0.0
    %1955 = vmatprep.subr.mxu0 0.0
    %1956 = vmatpush1.msra.mxu0 0.0
    %1957 = vmatprep.subr.mxu0 0.0
    %1958 = vmatpush1.msra.mxu0 0.0
    %1959 = vmatprep.subr.mxu0 0.0
    %1960 = vmatpush1.msra.mxu0 0.0
    %1961 = vmatprep.subr.mxu0 0.0
    %1962 = vmatpush1.msra.mxu0 0.0
    %1963 = vmatprep.subr.mxu0 0.0
    %1964 = vmatpush1.msra.mxu0 0.0
    %1965 = vmatprep.subr.mxu0 0.0
    %1966 = vmatpush1.msra.mxu0 0.0
    %1967 = vmatprep.subr.mxu0 0.0
    %1968 = vmatpush1.msra.mxu0 0.0
    %1969 = vmatprep.subr.mxu0 0.0
    %1970 = vmatpush1.msra.mxu0 0.0
    %1971 = vmatprep.subr.mxu0 0.0
    %1972 = vmatpush1.msra.mxu0 0.0
    %1973 = vmatprep.subr.mxu0 0.0
    %1974 = vmatpush1.msra.mxu0 %v138
    %1975 = vmatprep.subr.mxu0 0.0
    %1976 = vmatpush1.msra.mxu0 %v137
    %1977 = vmatprep.subr.mxu0 0.0
    %1978 = vmatpush1.msra.mxu0 %v136
    %1979 = vmatprep.subr.mxu0 0.0
    %1980 = vmatpush1.msra.mxu0 %v135
    %1981 = vmatprep.subr.mxu0 0.0
    %1982 = vmatpush2.msra.mxu0 0.0
    %1983 = vmatprep.subr.mxu0 0.0
    %1984 = vmatpush2.msra.mxu0 0.0
    %1985 = vmatprep.subr.mxu0 0.0
    %1986 = vmatpush2.msra.mxu0 0.0
    %1987 = vmatprep.subr.mxu0 0.0
    %1988 = vmatpush2.msra.mxu0 0.0
    %1989 = vmatprep.subr.mxu0 0.0
    %1990 = vmatpush2.msra.mxu0 0.0
    %1991 = vmatprep.subr.mxu0 0.0
    %1992 = vmatpush2.msra.mxu0 0.0
    %1993 = vmatprep.subr.mxu0 0.0
    %1994 = vmatpush2.msra.mxu0 0.0
    %1995 = vmatprep.subr.mxu0 0.0
    %1996 = vmatpush2.msra.mxu0 0.0
    %1997 = vmatprep.subr.mxu0 0.0
    %1998 = vmatpush2.msra.mxu0 0.0
    %1999 = vmatprep.subr.mxu0 0.0
    %2000 = vmatpush2.msra.mxu0 0.0
    %2001 = vmatprep.subr.mxu0 0.0
    %2002 = vmatpush2.msra.mxu0 0.0
    %2003 = vmatprep.subr.mxu0 0.0
    %2004 = vmatpush2.msra.mxu0 0.0
    %2005 = vmatprep.subr.mxu0 0.0
    %2006 = vmatpush2.msra.mxu0 0.0
    %2007 = vmatprep.subr.mxu0 0.0
    %2008 = vmatpush2.msra.mxu0 0.0
    %2009 = vmatprep.subr.mxu0 0.0
    %2010 = vmatpush2.msra.mxu0 0.0
    %2011 = vmatprep.subr.mxu0 0.0
    %2012 = vmatpush2.msra.mxu0 0.0
    %2013 = vmatprep.mubr.f32.mxu0 0.0
    %2014 = vmatmul.mubr.f32.gmra.mxu0 %v1944
    %v2015 = vpop.f32.mrf.mxu0
    %v2016 = vadd.f32 %v1941, %v2015
    %v2017 = vpop.f32.mrf.mxu0
    %2018 = vmatprep.mubr.f32.mxu0 0.0
    %2019 = vmatmul.mubr.f32.gmra.mxu0 %v1947
    %v2020 = vpop.f32.mrf.mxu0
    %v2021 = vadd.f32 %v1941, %v2020
    %v2022 = vpop.f32.mrf.mxu0
    %2023 = vdwg.mxu0
    %v2024 = vmul.f32 %v2016, %v2016
    %v2025 = vmul.f32 %v2021, %v2021
    %v2026 = vmul.f32 %v2016, %v2024
    %v2027 = vmul.f32 %v2021, %v2025
    %v2028 = vmul.f32 %v2026, 0.044715
    %v2029 = vmul.f32 %v2027, 0.044715
    %v2030 = vadd.f32 %v2016, %v2028
    %v2031 = vadd.f32 %v2021, %v2029
    %v2032 = vmul.f32 %v2030, 0.7978846
    %v2033 = vmul.f32 %v2031, 0.7978846
    %v2034 = vtanh.pop %v2032
    %v2035 = vtanh.pop %v2033
    %v2036 = vadd.f32 %v2034, 1.0
    %v2037 = vadd.f32 %v2035, 1.0
    %v2038 = vmul.f32 %v2036, 0.5
    %v2039 = vmul.f32 %v2037, 0.5
    %v2040 = vmul.f32 %v2016, %v2038
    %v2041 = vmul.f32 %v2021, %v2039
    %v2043 = vlaneseq
    %v2044 = vshrl.u32 %v2043, 7
    %v2045 = vsub.s32 0, %v2044
    %v2046 = vrot.slane %v148, %v2045
    %vm2048 = vcmask 523264
    %v2050 = vsel %vm2048, %v2040, 0
    %v2053 = vsel %vm2048, %v2041, 0
    %2055 = vmatprep.subr.mxu0 0.0
    %2056 = vmatpush1.msra.mxu0 0.0
    %2057 = vmatprep.subr.mxu0 0.0
    %2058 = vmatpush1.msra.mxu0 0.0
    %2059 = vmatprep.subr.mxu0 0.0
    %2060 = vmatpush1.msra.mxu0 0.0
    %2061 = vmatprep.subr.mxu0 0.0
    %2062 = vmatpush1.msra.mxu0 0.0
    %2063 = vmatprep.subr.mxu0 0.0
    %2064 = vmatpush1.msra.mxu0 0.0
    %2065 = vmatprep.subr.mxu0 0.0
    %2066 = vmatpush1.msra.mxu0 0.0
    %2067 = vmatprep.subr.mxu0 0.0
    %2068 = vmatpush1.msra.mxu0 0.0
    %2069 = vmatprep.subr.mxu0 0.0
    %2070 = vmatpush1.msra.mxu0 0.0
    %2071 = vmatprep.subr.mxu0 0.0
    %2072 = vmatpush1.msra.mxu0 %v147
    %2073 = vmatprep.subr.mxu0 0.0
    %2074 = vmatpush1.msra.mxu0 %v146
    %2075 = vmatprep.subr.mxu0 0.0
    %2076 = vmatpush1.msra.mxu0 %v145
    %2077 = vmatprep.subr.mxu0 0.0
    %2078 = vmatpush1.msra.mxu0 %v144
    %2079 = vmatprep.subr.mxu0 0.0
    %2080 = vmatpush1.msra.mxu0 %v143
    %2081 = vmatprep.subr.mxu0 0.0
    %2082 = vmatpush1.msra.mxu0 %v142
    %2083 = vmatprep.subr.mxu0 0.0
    %2084 = vmatpush1.msra.mxu0 %v141
    %2085 = vmatprep.subr.mxu0 0.0
    %2086 = vmatpush1.msra.mxu0 %v140
    %2087 = vmatprep.subr.mxu0 0.0
    %2088 = vmatpush2.msra.mxu0 0.0
    %2089 = vmatprep.subr.mxu0 0.0
    %2090 = vmatpush2.msra.mxu0 0.0
    %2091 = vmatprep.subr.mxu0 0.0
    %2092 = vmatpush2.msra.mxu0 0.0
    %2093 = vmatprep.subr.mxu0 0.0
    %2094 = vmatpush2.msra.mxu0 0.0
    %2095 = vmatprep.subr.mxu0 0.0
    %2096 = vmatpush2.msra.mxu0 0.0
    %2097 = vmatprep.subr.mxu0 0.0
    %2098 = vmatpush2.msra.mxu0 0.0
    %2099 = vmatprep.subr.mxu0 0.0
    %2100 = vmatpush2.msra.mxu0 0.0
    %2101 = vmatprep.subr.mxu0 0.0
    %2102 = vmatpush2.msra.mxu0 0.0
    %2103 = vmatprep.subr.mxu0 0.0
    %2104 = vmatpush2.msra.mxu0 0.0
    %2105 = vmatprep.subr.mxu0 0.0
    %2106 = vmatpush2.msra.mxu0 0.0
    %2107 = vmatprep.subr.mxu0 0.0
    %2108 = vmatpush2.msra.mxu0 0.0
    %2109 = vmatprep.subr.mxu0 0.0
    %2110 = vmatpush2.msra.mxu0 0.0
    %2111 = vmatprep.subr.mxu0 0.0
    %2112 = vmatpush2.msra.mxu0 0.0
    %2113 = vmatprep.subr.mxu0 0.0
    %2114 = vmatpush2.msra.mxu0 0.0
    %2115 = vmatprep.subr.mxu0 0.0
    %2116 = vmatpush2.msra.mxu0 0.0
    %2117 = vmatprep.subr.mxu0 0.0
    %2118 = vmatpush2.msra.mxu0 0.0
    %2119 = vmatprep.mubr.f32.mxu0 0.0
    %2120 = vmatmul.mubr.f32.gmra.mxu0 %v2050
    %v2121 = vpop.f32.mrf.mxu0
    %v2122 = vadd.f32 %v2046, %v2121
    %v2123 = vpop.f32.mrf.mxu0
    %2124 = vmatprep.mubr.f32.mxu0 0.0
    %2125 = vmatmul.mubr.f32.gmra.mxu0 %v2053
    %v2126 = vpop.f32.mrf.mxu0
    %v2127 = vadd.f32 %v2046, %v2126
    %v2128 = vpop.f32.mrf.mxu0
    %2129 = vdwg.mxu0
    %v2130 = vadd.f32 %v1935, %v2122
    %v2131 = vadd.f32 %v1936, %v2127
    %v2132 = vsel %vm79, %v2130, 0.0
    %2133 = vadd.xlane.f32.xlu0 %v2132
    %v2134 = vpop.xlane.xlu0 %2133
    %v2135 = vsel %vm79, %v2131, 0.0
    %2136 = vadd.xlane.f32.xlu0 %v2135
    %v2137 = vpop.xlane.xlu0 %2136
    %v2138 = vmul.f32 %v2134, %v86
    %v2139 = vmul.f32 %v2137, %v86
    %v2140 = vsub.f32 %v2130, %v2138
    %v2141 = vsub.f32 %v2131, %v2139
    %v2142 = vmul.f32 %v2140, %v2140
    %v2143 = vmul.f32 %v2141, %v2141
    %v2144 = vsel %vm79, %v2142, 0.0
    %2145 = vadd.xlane.f32.xlu0 %v2144
    %v2146 = vpop.xlane.xlu0 %2145
    %v2147 = vsel %vm79, %v2143, 0.0
    %2148 = vadd.xlane.f32.xlu0 %v2147
    %v2149 = vpop.xlane.xlu0 %2148
    %v2150 = vmul.f32 %v2146, %v86
    %v2151 = vmul.f32 %v2149, %v86
    %v2152 = vadd.f32 %v2150, 1e-12
    %v2153 = vadd.f32 %v2151, 1e-12
    %v2154 = vrsqrt.pop %v2152
    %v2155 = vrsqrt.pop %v2153
    %v2156 = vmul.f32 %v2140, %v2154
    %v2157 = vmul.f32 %v2141, %v2155
    %v2159 = vlaneseq
    %v2160 = vshrl.u32 %v2159, 7
    %v2161 = vsub.s32 0, %v2160
    %v2162 = vrot.slane %v149, %v2161
    %v2164 = vmul.f32 %v2156, %v2162
    %v2165 = vmul.f32 %v2157, %v2162
    %v2167 = vlaneseq
    %v2168 = vshrl.u32 %v2167, 7
    %v2169 = vsub.s32 0, %v2168
    %v2170 = vrot.slane %v150, %v2169
    %v2172 = vadd.f32 %v2164, %v2170
    %v2173 = vadd.f32 %v2165, %v2170
    %s2174 = scalar_lea.vmem %s4, 32
    %v2175 = vld [vmem:[%s2174] sm:$0xff]
    %v2176 = vld [vmem:[%s2174 + $0x8] sm:$0xff]
    %v2177 = vld [vmem:[%s2174 + $0x10] sm:$0xff]
    %v2178 = vld [vmem:[%s2174 + $0x18] sm:$0xff]
    %s2179 = scalar_lea.vmem %s5, 1
    %v2180 = vld [vmem:[%s2179] sm:$0x1]
    %s2181 = scalar_lea.vmem %s6, 32
    %v2182 = vld [vmem:[%s2181] sm:$0xff]
    %v2183 = vld [vmem:[%s2181 + $0x8] sm:$0xff]
    %v2184 = vld [vmem:[%s2181 + $0x10] sm:$0xff]
    %v2185 = vld [vmem:[%s2181 + $0x18] sm:$0xff]
    %s2186 = scalar_lea.vmem %s7, 1
    %v2187 = vld [vmem:[%s2186] sm:$0x1]
    %s2188 = scalar_lea.vmem %s8, 1
    %v2189 = vld [vmem:[%s2188] sm:$0x1]
    %s2190 = scalar_lea.vmem %s9, 1
    %v2191 = vld [vmem:[%s2190] sm:$0x1]
    %s2192 = scalar_lea.vmem %s10, 32
    %v2193 = vld [vmem:[%s2192] sm:$0xff]
    %v2194 = vld [vmem:[%s2192 + $0x8] sm:$0xff]
    %v2195 = vld [vmem:[%s2192 + $0x10] sm:$0xff]
    %v2196 = vld [vmem:[%s2192 + $0x18] sm:$0xff]
    %s2197 = scalar_lea.vmem %s11, 1
    %v2198 = vld [vmem:[%s2197] sm:$0x1]
    %s2199 = scalar_lea.vmem %s12, 64
    %v2200 = vld [vmem:[%s2199] sm:$0xff]
    %v2201 = vld [vmem:[%s2199 + $0x8] sm:$0xff]
    %v2202 = vld [vmem:[%s2199 + $0x10] sm:$0xff]
    %v2203 = vld [vmem:[%s2199 + $0x18] sm:$0xff]
    %v2204 = vld [vmem:[%s2199 + $0x20] sm:$0xff]
    %v2205 = vld [vmem:[%s2199 + $0x28] sm:$0xff]
    %v2206 = vld [vmem:[%s2199 + $0x30] sm:$0xff]
    %v2207 = vld [vmem:[%s2199 + $0x38] sm:$0xff]
    %s2208 = scalar_lea.vmem %s13, 1
    %v2209 = vld [vmem:[%s2208] sm:$0x1]
    %s2210 = scalar_lea.vmem %s14, 1
    %v2211 = vld [vmem:[%s2210] sm:$0x1]
    %s2212 = scalar_lea.vmem %s15, 1
    %v2213 = vld [vmem:[%s2212] sm:$0x1]
    %v2215 = vlaneseq
    %v2216 = vshrl.u32 %v2215, 7
    %v2217 = vsub.s32 0, %v2216
    %v2218 = vrot.slane %v2180, %v2217
    %v2221 = vsel %vm79, %v2172, 0
    %v2224 = vsel %vm79, %v2173, 0
    %2226 = vmatprep.subr.mxu0 0.0
    %2227 = vmatpush1.msra.mxu0 0.0
    %2228 = vmatprep.subr.mxu0 0.0
    %2229 = vmatpush1.msra.mxu0 0.0
    %2230 = vmatprep.subr.mxu0 0.0
    %2231 = vmatpush1.msra.mxu0 0.0
    %2232 = vmatprep.subr.mxu0 0.0
    %2233 = vmatpush1.msra.mxu0 0.0
    %2234 = vmatprep.subr.mxu0 0.0
    %2235 = vmatpush1.msra.mxu0 0.0
    %2236 = vmatprep.subr.mxu0 0.0
    %2237 = vmatpush1.msra.mxu0 0.0
    %2238 = vmatprep.subr.mxu0 0.0
    %2239 = vmatpush1.msra.mxu0 0.0
    %2240 = vmatprep.subr.mxu0 0.0
    %2241 = vmatpush1.msra.mxu0 0.0
    %2242 = vmatprep.subr.mxu0 0.0
    %2243 = vmatpush1.msra.mxu0 0.0
    %2244 = vmatprep.subr.mxu0 0.0
    %2245 = vmatpush1.msra.mxu0 0.0
    %2246 = vmatprep.subr.mxu0 0.0
    %2247 = vmatpush1.msra.mxu0 0.0
    %2248 = vmatprep.subr.mxu0 0.0
    %2249 = vmatpush1.msra.mxu0 0.0
    %2250 = vmatprep.subr.mxu0 0.0
    %2251 = vmatpush1.msra.mxu0 %v2178
    %2252 = vmatprep.subr.mxu0 0.0
    %2253 = vmatpush1.msra.mxu0 %v2177
    %2254 = vmatprep.subr.mxu0 0.0
    %2255 = vmatpush1.msra.mxu0 %v2176
    %2256 = vmatprep.subr.mxu0 0.0
    %2257 = vmatpush1.msra.mxu0 %v2175
    %2258 = vmatprep.subr.mxu0 0.0
    %2259 = vmatpush2.msra.mxu0 0.0
    %2260 = vmatprep.subr.mxu0 0.0
    %2261 = vmatpush2.msra.mxu0 0.0
    %2262 = vmatprep.subr.mxu0 0.0
    %2263 = vmatpush2.msra.mxu0 0.0
    %2264 = vmatprep.subr.mxu0 0.0
    %2265 = vmatpush2.msra.mxu0 0.0
    %2266 = vmatprep.subr.mxu0 0.0
    %2267 = vmatpush2.msra.mxu0 0.0
    %2268 = vmatprep.subr.mxu0 0.0
    %2269 = vmatpush2.msra.mxu0 0.0
    %2270 = vmatprep.subr.mxu0 0.0
    %2271 = vmatpush2.msra.mxu0 0.0
    %2272 = vmatprep.subr.mxu0 0.0
    %2273 = vmatpush2.msra.mxu0 0.0
    %2274 = vmatprep.subr.mxu0 0.0
    %2275 = vmatpush2.msra.mxu0 0.0
    %2276 = vmatprep.subr.mxu0 0.0
    %2277 = vmatpush2.msra.mxu0 0.0
    %2278 = vmatprep.subr.mxu0 0.0
    %2279 = vmatpush2.msra.mxu0 0.0
    %2280 = vmatprep.subr.mxu0 0.0
    %2281 = vmatpush2.msra.mxu0 0.0
    %2282 = vmatprep.subr.mxu0 0.0
    %2283 = vmatpush2.msra.mxu0 0.0
    %2284 = vmatprep.subr.mxu0 0.0
    %2285 = vmatpush2.msra.mxu0 0.0
    %2286 = vmatprep.subr.mxu0 0.0
    %2287 = vmatpush2.msra.mxu0 0.0
    %2288 = vmatprep.subr.mxu0 0.0
    %2289 = vmatpush2.msra.mxu0 0.0
    %2290 = vmatprep.mubr.f32.mxu0 0.0
    %2291 = vmatmul.mubr.f32.gmra.mxu0 %v2221
    %v2292 = vpop.f32.mrf.mxu0
    %v2293 = vadd.f32 %v2218, %v2292
    %v2294 = vpop.f32.mrf.mxu0
    %2295 = vmatprep.mubr.f32.mxu0 0.0
    %2296 = vmatmul.mubr.f32.gmra.mxu0 %v2224
    %v2297 = vpop.f32.mrf.mxu0
    %v2298 = vadd.f32 %v2218, %v2297
    %v2299 = vpop.f32.mrf.mxu0
    %2300 = vdwg.mxu0
    %2302 = vrot.lane.b32.xlu0 %v2293, 96
    %v2303 = vpop.permute.xlu0 %2302
    %v2304 = vsel %vm241, %v2293, 0
    %v2306 = vsel %vm241, %v2303, 0
    %2308 = vmatprep.subr.mxu0 0.0
    %2309 = vmatpush1.xpose.msra.mxu0 0.0
    %2310 = vmatprep.subr.mxu0 0.0
    %2311 = vmatpush1.xpose.msra.mxu0 0.0
    %2312 = vmatprep.subr.mxu0 0.0
    %2313 = vmatpush1.xpose.msra.mxu0 0.0
    %2314 = vmatprep.subr.mxu0 0.0
    %2315 = vmatpush1.xpose.msra.mxu0 0.0
    %2316 = vmatprep.subr.mxu0 0.0
    %2317 = vmatpush1.xpose.msra.mxu0 0.0
    %2318 = vmatprep.subr.mxu0 0.0
    %2319 = vmatpush1.xpose.msra.mxu0 0.0
    %2320 = vmatprep.subr.mxu0 0.0
    %2321 = vmatpush1.xpose.msra.mxu0 0.0
    %2322 = vmatprep.subr.mxu0 0.0
    %2323 = vmatpush1.xpose.msra.mxu0 0.0
    %2324 = vmatprep.subr.mxu0 0.0
    %2325 = vmatpush1.xpose.msra.mxu0 0.0
    %2326 = vmatprep.subr.mxu0 0.0
    %2327 = vmatpush1.xpose.msra.mxu0 0.0
    %2328 = vmatprep.subr.mxu0 0.0
    %2329 = vmatpush1.xpose.msra.mxu0 0.0
    %2330 = vmatprep.subr.mxu0 0.0
    %2331 = vmatpush1.xpose.msra.mxu0 0.0
    %2332 = vmatprep.subr.mxu0 0.0
    %2333 = vmatpush1.xpose.msra.mxu0 0.0
    %2334 = vmatprep.subr.mxu0 0.0
    %2335 = vmatpush1.xpose.msra.mxu0 0.0
    %2336 = vmatprep.subr.mxu0 0.0
    %2337 = vmatpush1.xpose.msra.mxu0 0.0
    %2338 = vmatprep.subr.mxu0 0.0
    %2339 = vmatpush1.xpose.msra.mxu0 %v2306
    %2340 = vmatprep.subr.mxu0 0.0
    %2341 = vmatpush2.xpose.msra.mxu0 0.0
    %2342 = vmatprep.subr.mxu0 0.0
    %2343 = vmatpush2.xpose.msra.mxu0 0.0
    %2344 = vmatprep.subr.mxu0 0.0
    %2345 = vmatpush2.xpose.msra.mxu0 0.0
    %2346 = vmatprep.subr.mxu0 0.0
    %2347 = vmatpush2.xpose.msra.mxu0 0.0
    %2348 = vmatprep.subr.mxu0 0.0
    %2349 = vmatpush2.xpose.msra.mxu0 0.0
    %2350 = vmatprep.subr.mxu0 0.0
    %2351 = vmatpush2.xpose.msra.mxu0 0.0
    %2352 = vmatprep.subr.mxu0 0.0
    %2353 = vmatpush2.xpose.msra.mxu0 0.0
    %2354 = vmatprep.subr.mxu0 0.0
    %2355 = vmatpush2.xpose.msra.mxu0 0.0
    %2356 = vmatprep.subr.mxu0 0.0
    %2357 = vmatpush2.xpose.msra.mxu0 0.0
    %2358 = vmatprep.subr.mxu0 0.0
    %2359 = vmatpush2.xpose.msra.mxu0 0.0
    %2360 = vmatprep.subr.mxu0 0.0
    %2361 = vmatpush2.xpose.msra.mxu0 0.0
    %2362 = vmatprep.subr.mxu0 0.0
    %2363 = vmatpush2.xpose.msra.mxu0 0.0
    %2364 = vmatprep.subr.mxu0 0.0
    %2365 = vmatpush2.xpose.msra.mxu0 0.0
    %2366 = vmatprep.subr.mxu0 0.0
    %2367 = vmatpush2.xpose.msra.mxu0 0.0
    %2368 = vmatprep.subr.mxu0 0.0
    %2369 = vmatpush2.xpose.msra.mxu0 0.0
    %2370 = vmatprep.subr.mxu0 0.0
    %2371 = vmatpush2.xpose.msra.mxu0 0.0
    %2372 = vmatprep.mubr.f32.mxu0 0.0
    %2373 = vmatmul.mubr.f32.gmra.mxu0 %v2304
    %v2374 = vpop.f32.mrf.mxu0
    %v2375 = vadd.f32 0.0, %v2374
    %v2376 = vpop.f32.mrf.mxu0
    %2377 = vdwg.mxu0
    %2379 = vrot.lane.b32.xlu0 %v2298, 96
    %v2380 = vpop.permute.xlu0 %2379
    %v2381 = vsel %vm241, %v2298, 0
    %v2383 = vsel %vm241, %v2380, 0
    %2385 = vmatprep.subr.mxu0 0.0
    %2386 = vmatpush1.xpose.msra.mxu0 0.0
    %2387 = vmatprep.subr.mxu0 0.0
    %2388 = vmatpush1.xpose.msra.mxu0 0.0
    %2389 = vmatprep.subr.mxu0 0.0
    %2390 = vmatpush1.xpose.msra.mxu0 0.0
    %2391 = vmatprep.subr.mxu0 0.0
    %2392 = vmatpush1.xpose.msra.mxu0 0.0
    %2393 = vmatprep.subr.mxu0 0.0
    %2394 = vmatpush1.xpose.msra.mxu0 0.0
    %2395 = vmatprep.subr.mxu0 0.0
    %2396 = vmatpush1.xpose.msra.mxu0 0.0
    %2397 = vmatprep.subr.mxu0 0.0
    %2398 = vmatpush1.xpose.msra.mxu0 0.0
    %2399 = vmatprep.subr.mxu0 0.0
    %2400 = vmatpush1.xpose.msra.mxu0 0.0
    %2401 = vmatprep.subr.mxu0 0.0
    %2402 = vmatpush1.xpose.msra.mxu0 0.0
    %2403 = vmatprep.subr.mxu0 0.0
    %2404 = vmatpush1.xpose.msra.mxu0 0.0
    %2405 = vmatprep.subr.mxu0 0.0
    %2406 = vmatpush1.xpose.msra.mxu0 0.0
    %2407 = vmatprep.subr.mxu0 0.0
    %2408 = vmatpush1.xpose.msra.mxu0 0.0
    %2409 = vmatprep.subr.mxu0 0.0
    %2410 = vmatpush1.xpose.msra.mxu0 0.0
    %2411 = vmatprep.subr.mxu0 0.0
    %2412 = vmatpush1.xpose.msra.mxu0 0.0
    %2413 = vmatprep.subr.mxu0 0.0
    %2414 = vmatpush1.xpose.msra.mxu0 0.0
    %2415 = vmatprep.subr.mxu0 0.0
    %2416 = vmatpush1.xpose.msra.mxu0 %v2383
    %2417 = vmatprep.subr.mxu0 0.0
    %2418 = vmatpush2.xpose.msra.mxu0 0.0
    %2419 = vmatprep.subr.mxu0 0.0
    %2420 = vmatpush2.xpose.msra.mxu0 0.0
    %2421 = vmatprep.subr.mxu0 0.0
    %2422 = vmatpush2.xpose.msra.mxu0 0.0
    %2423 = vmatprep.subr.mxu0 0.0
    %2424 = vmatpush2.xpose.msra.mxu0 0.0
    %2425 = vmatprep.subr.mxu0 0.0
    %2426 = vmatpush2.xpose.msra.mxu0 0.0
    %2427 = vmatprep.subr.mxu0 0.0
    %2428 = vmatpush2.xpose.msra.mxu0 0.0
    %2429 = vmatprep.subr.mxu0 0.0
    %2430 = vmatpush2.xpose.msra.mxu0 0.0
    %2431 = vmatprep.subr.mxu0 0.0
    %2432 = vmatpush2.xpose.msra.mxu0 0.0
    %2433 = vmatprep.subr.mxu0 0.0
    %2434 = vmatpush2.xpose.msra.mxu0 0.0
    %2435 = vmatprep.subr.mxu0 0.0
    %2436 = vmatpush2.xpose.msra.mxu0 0.0
    %2437 = vmatprep.subr.mxu0 0.0
    %2438 = vmatpush2.xpose.msra.mxu0 0.0
    %2439 = vmatprep.subr.mxu0 0.0
    %2440 = vmatpush2.xpose.msra.mxu0 0.0
    %2441 = vmatprep.subr.mxu0 0.0
    %2442 = vmatpush2.xpose.msra.mxu0 0.0
    %2443 = vmatprep.subr.mxu0 0.0
    %2444 = vmatpush2.xpose.msra.mxu0 0.0
    %2445 = vmatprep.subr.mxu0 0.0
    %2446 = vmatpush2.xpose.msra.mxu0 0.0
    %2447 = vmatprep.subr.mxu0 0.0
    %2448 = vmatpush2.xpose.msra.mxu0 0.0
    %2449 = vmatprep.mubr.f32.mxu0 0.0
    %2450 = vmatmul.mubr.f32.gmra.mxu0 %v2381
    %v2451 = vpop.f32.mrf.mxu0
    %v2452 = vadd.f32 0.0, %v2451
    %v2453 = vpop.f32.mrf.mxu0
    %2454 = vdwg.mxu0
    %v2455 = vsel %vm241, %v2375, -inf
    %2456 = vmax.xlane.f32.xlu0 %v2455
    %v2457 = vpop.xlane.xlu0 %2456
    %v2458 = vsel %vm241, %v2452, -inf
    %2459 = vmax.xlane.f32.xlu0 %v2458
    %v2460 = vpop.xlane.xlu0 %2459
    %v2461 = vsub.f32 %v2375, %v2457
    %v2462 = vsub.f32 %v2452, %v2460
    %v2463 = vmul.f32 %v2461, 1.442695
    %v2464 = vpow.pop %v2463
    %v2465 = vmul.f32 %v2462, 1.442695
    %v2466 = vpow.pop %v2465
    %v2467 = vsel %vm241, %v2464, 0.0
    %2468 = vadd.xlane.f32.xlu0 %v2467
    %v2469 = vpop.xlane.xlu0 %2468
    %v2470 = vsel %vm241, %v2466, 0.0
    %2471 = vadd.xlane.f32.xlu0 %v2470
    %v2472 = vpop.xlane.xlu0 %2471
    %v2473 = vrcp.pop %v2469
    %v2474 = vmul.f32 %v2464, %v2473
    %v2475 = vrcp.pop %v2472
    %v2476 = vmul.f32 %v2466, %v2475
    %2477 = vrot.lane.b32.xlu0 %v2293, 64
    %v2478 = vpop.permute.xlu0 %2477
    %v2481 = vsel %vm241, %v2474, 0
    %2483 = vmatprep.subr.mxu0 0.0
    %2484 = vmatpush1.msra.mxu0 0.0
    %2485 = vmatprep.subr.mxu0 0.0
    %2486 = vmatpush1.msra.mxu0 0.0
    %2487 = vmatprep.subr.mxu0 0.0
    %2488 = vmatpush1.msra.mxu0 0.0
    %2489 = vmatprep.subr.mxu0 0.0
    %2490 = vmatpush1.msra.mxu0 0.0
    %2491 = vmatprep.subr.mxu0 0.0
    %2492 = vmatpush1.msra.mxu0 0.0
    %2493 = vmatprep.subr.mxu0 0.0
    %2494 = vmatpush1.msra.mxu0 0.0
    %2495 = vmatprep.subr.mxu0 0.0
    %2496 = vmatpush1.msra.mxu0 0.0
    %2497 = vmatprep.subr.mxu0 0.0
    %2498 = vmatpush1.msra.mxu0 0.0
    %2499 = vmatprep.subr.mxu0 0.0
    %2500 = vmatpush1.msra.mxu0 0.0
    %2501 = vmatprep.subr.mxu0 0.0
    %2502 = vmatpush1.msra.mxu0 0.0
    %2503 = vmatprep.subr.mxu0 0.0
    %2504 = vmatpush1.msra.mxu0 0.0
    %2505 = vmatprep.subr.mxu0 0.0
    %2506 = vmatpush1.msra.mxu0 0.0
    %2507 = vmatprep.subr.mxu0 0.0
    %2508 = vmatpush1.msra.mxu0 0.0
    %2509 = vmatprep.subr.mxu0 0.0
    %2510 = vmatpush1.msra.mxu0 0.0
    %2511 = vmatprep.subr.mxu0 0.0
    %2512 = vmatpush1.msra.mxu0 0.0
    %2513 = vmatprep.subr.mxu0 0.0
    %2514 = vmatpush1.msra.mxu0 %v2478
    %2515 = vmatprep.subr.mxu0 0.0
    %2516 = vmatpush2.msra.mxu0 0.0
    %2517 = vmatprep.subr.mxu0 0.0
    %2518 = vmatpush2.msra.mxu0 0.0
    %2519 = vmatprep.subr.mxu0 0.0
    %2520 = vmatpush2.msra.mxu0 0.0
    %2521 = vmatprep.subr.mxu0 0.0
    %2522 = vmatpush2.msra.mxu0 0.0
    %2523 = vmatprep.subr.mxu0 0.0
    %2524 = vmatpush2.msra.mxu0 0.0
    %2525 = vmatprep.subr.mxu0 0.0
    %2526 = vmatpush2.msra.mxu0 0.0
    %2527 = vmatprep.subr.mxu0 0.0
    %2528 = vmatpush2.msra.mxu0 0.0
    %2529 = vmatprep.subr.mxu0 0.0
    %2530 = vmatpush2.msra.mxu0 0.0
    %2531 = vmatprep.subr.mxu0 0.0
    %2532 = vmatpush2.msra.mxu0 0.0
    %2533 = vmatprep.subr.mxu0 0.0
    %2534 = vmatpush2.msra.mxu0 0.0
    %2535 = vmatprep.subr.mxu0 0.0
    %2536 = vmatpush2.msra.mxu0 0.0
    %2537 = vmatprep.subr.mxu0 0.0
    %2538 = vmatpush2.msra.mxu0 0.0
    %2539 = vmatprep.subr.mxu0 0.0
    %2540 = vmatpush2.msra.mxu0 0.0
    %2541 = vmatprep.subr.mxu0 0.0
    %2542 = vmatpush2.msra.mxu0 0.0
    %2543 = vmatprep.subr.mxu0 0.0
    %2544 = vmatpush2.msra.mxu0 0.0
    %2545 = vmatprep.subr.mxu0 0.0
    %2546 = vmatpush2.msra.mxu0 0.0
    %2547 = vmatprep.mubr.f32.mxu0 0.0
    %2548 = vmatmul.mubr.f32.gmra.mxu0 %v2481
    %v2549 = vpop.f32.mrf.mxu0
    %v2550 = vadd.f32 0.0, %v2549
    %v2551 = vpop.f32.mrf.mxu0
    %2552 = vdwg.mxu0
    %2553 = vrot.lane.b32.xlu0 %v2298, 64
    %v2554 = vpop.permute.xlu0 %2553
    %v2557 = vsel %vm241, %v2476, 0
    %2559 = vmatprep.subr.mxu0 0.0
    %2560 = vmatpush1.msra.mxu0 0.0
    %2561 = vmatprep.subr.mxu0 0.0
    %2562 = vmatpush1.msra.mxu0 0.0
    %2563 = vmatprep.subr.mxu0 0.0
    %2564 = vmatpush1.msra.mxu0 0.0
    %2565 = vmatprep.subr.mxu0 0.0
    %2566 = vmatpush1.msra.mxu0 0.0
    %2567 = vmatprep.subr.mxu0 0.0
    %2568 = vmatpush1.msra.mxu0 0.0
    %2569 = vmatprep.subr.mxu0 0.0
    %2570 = vmatpush1.msra.mxu0 0.0
    %2571 = vmatprep.subr.mxu0 0.0
    %2572 = vmatpush1.msra.mxu0 0.0
    %2573 = vmatprep.subr.mxu0 0.0
    %2574 = vmatpush1.msra.mxu0 0.0
    %2575 = vmatprep.subr.mxu0 0.0
    %2576 = vmatpush1.msra.mxu0 0.0
    %2577 = vmatprep.subr.mxu0 0.0
    %2578 = vmatpush1.msra.mxu0 0.0
    %2579 = vmatprep.subr.mxu0 0.0
    %2580 = vmatpush1.msra.mxu0 0.0
    %2581 = vmatprep.subr.mxu0 0.0
    %2582 = vmatpush1.msra.mxu0 0.0
    %2583 = vmatprep.subr.mxu0 0.0
    %2584 = vmatpush1.msra.mxu0 0.0
    %2585 = vmatprep.subr.mxu0 0.0
    %2586 = vmatpush1.msra.mxu0 0.0
    %2587 = vmatprep.subr.mxu0 0.0
    %2588 = vmatpush1.msra.mxu0 0.0
    %2589 = vmatprep.subr.mxu0 0.0
    %2590 = vmatpush1.msra.mxu0 %v2554
    %2591 = vmatprep.subr.mxu0 0.0
    %2592 = vmatpush2.msra.mxu0 0.0
    %2593 = vmatprep.subr.mxu0 0.0
    %2594 = vmatpush2.msra.mxu0 0.0
    %2595 = vmatprep.subr.mxu0 0.0
    %2596 = vmatpush2.msra.mxu0 0.0
    %2597 = vmatprep.subr.mxu0 0.0
    %2598 = vmatpush2.msra.mxu0 0.0
    %2599 = vmatprep.subr.mxu0 0.0
    %2600 = vmatpush2.msra.mxu0 0.0
    %2601 = vmatprep.subr.mxu0 0.0
    %2602 = vmatpush2.msra.mxu0 0.0
    %2603 = vmatprep.subr.mxu0 0.0
    %2604 = vmatpush2.msra.mxu0 0.0
    %2605 = vmatprep.subr.mxu0 0.0
    %2606 = vmatpush2.msra.mxu0 0.0
    %2607 = vmatprep.subr.mxu0 0.0
    %2608 = vmatpush2.msra.mxu0 0.0
    %2609 = vmatprep.subr.mxu0 0.0
    %2610 = vmatpush2.msra.mxu0 0.0
    %2611 = vmatprep.subr.mxu0 0.0
    %2612 = vmatpush2.msra.mxu0 0.0
    %2613 = vmatprep.subr.mxu0 0.0
    %2614 = vmatpush2.msra.mxu0 0.0
    %2615 = vmatprep.subr.mxu0 0.0
    %2616 = vmatpush2.msra.mxu0 0.0
    %2617 = vmatprep.subr.mxu0 0.0
    %2618 = vmatpush2.msra.mxu0 0.0
    %2619 = vmatprep.subr.mxu0 0.0
    %2620 = vmatpush2.msra.mxu0 0.0
    %2621 = vmatprep.subr.mxu0 0.0
    %2622 = vmatpush2.msra.mxu0 0.0
    %2623 = vmatprep.mubr.f32.mxu0 0.0
    %2624 = vmatmul.mubr.f32.gmra.mxu0 %v2557
    %v2625 = vpop.f32.mrf.mxu0
    %v2626 = vadd.f32 0.0, %v2625
    %v2627 = vpop.f32.mrf.mxu0
    %2628 = vdwg.mxu0
    %2629 = vrot.lane.b32.xlu0 %v2293, 120
    %v2630 = vpop.permute.xlu0 %2629
    %2631 = vrot.lane.b32.xlu0 %v2293, 88
    %v2632 = vpop.permute.xlu0 %2631
    %v2633 = vsel %vm241, %v2630, 0
    %v2635 = vsel %vm241, %v2632, 0
    %2637 = vmatprep.subr.mxu0 0.0
    %2638 = vmatpush1.xpose.msra.mxu0 0.0
    %2639 = vmatprep.subr.mxu0 0.0
    %2640 = vmatpush1.xpose.msra.mxu0 0.0
    %2641 = vmatprep.subr.mxu0 0.0
    %2642 = vmatpush1.xpose.msra.mxu0 0.0
    %2643 = vmatprep.subr.mxu0 0.0
    %2644 = vmatpush1.xpose.msra.mxu0 0.0
    %2645 = vmatprep.subr.mxu0 0.0
    %2646 = vmatpush1.xpose.msra.mxu0 0.0
    %2647 = vmatprep.subr.mxu0 0.0
    %2648 = vmatpush1.xpose.msra.mxu0 0.0
    %2649 = vmatprep.subr.mxu0 0.0
    %2650 = vmatpush1.xpose.msra.mxu0 0.0
    %2651 = vmatprep.subr.mxu0 0.0
    %2652 = vmatpush1.xpose.msra.mxu0 0.0
    %2653 = vmatprep.subr.mxu0 0.0
    %2654 = vmatpush1.xpose.msra.mxu0 0.0
    %2655 = vmatprep.subr.mxu0 0.0
    %2656 = vmatpush1.xpose.msra.mxu0 0.0
    %2657 = vmatprep.subr.mxu0 0.0
    %2658 = vmatpush1.xpose.msra.mxu0 0.0
    %2659 = vmatprep.subr.mxu0 0.0
    %2660 = vmatpush1.xpose.msra.mxu0 0.0
    %2661 = vmatprep.subr.mxu0 0.0
    %2662 = vmatpush1.xpose.msra.mxu0 0.0
    %2663 = vmatprep.subr.mxu0 0.0
    %2664 = vmatpush1.xpose.msra.mxu0 0.0
    %2665 = vmatprep.subr.mxu0 0.0
    %2666 = vmatpush1.xpose.msra.mxu0 0.0
    %2667 = vmatprep.subr.mxu0 0.0
    %2668 = vmatpush1.xpose.msra.mxu0 %v2635
    %2669 = vmatprep.subr.mxu0 0.0
    %2670 = vmatpush2.xpose.msra.mxu0 0.0
    %2671 = vmatprep.subr.mxu0 0.0
    %2672 = vmatpush2.xpose.msra.mxu0 0.0
    %2673 = vmatprep.subr.mxu0 0.0
    %2674 = vmatpush2.xpose.msra.mxu0 0.0
    %2675 = vmatprep.subr.mxu0 0.0
    %2676 = vmatpush2.xpose.msra.mxu0 0.0
    %2677 = vmatprep.subr.mxu0 0.0
    %2678 = vmatpush2.xpose.msra.mxu0 0.0
    %2679 = vmatprep.subr.mxu0 0.0
    %2680 = vmatpush2.xpose.msra.mxu0 0.0
    %2681 = vmatprep.subr.mxu0 0.0
    %2682 = vmatpush2.xpose.msra.mxu0 0.0
    %2683 = vmatprep.subr.mxu0 0.0
    %2684 = vmatpush2.xpose.msra.mxu0 0.0
    %2685 = vmatprep.subr.mxu0 0.0
    %2686 = vmatpush2.xpose.msra.mxu0 0.0
    %2687 = vmatprep.subr.mxu0 0.0
    %2688 = vmatpush2.xpose.msra.mxu0 0.0
    %2689 = vmatprep.subr.mxu0 0.0
    %2690 = vmatpush2.xpose.msra.mxu0 0.0
    %2691 = vmatprep.subr.mxu0 0.0
    %2692 = vmatpush2.xpose.msra.mxu0 0.0
    %2693 = vmatprep.subr.mxu0 0.0
    %2694 = vmatpush2.xpose.msra.mxu0 0.0
    %2695 = vmatprep.subr.mxu0 0.0
    %2696 = vmatpush2.xpose.msra.mxu0 0.0
    %2697 = vmatprep.subr.mxu0 0.0
    %2698 = vmatpush2.xpose.msra.mxu0 0.0
    %2699 = vmatprep.subr.mxu0 0.0
    %2700 = vmatpush2.xpose.msra.mxu0 0.0
    %2701 = vmatprep.mubr.f32.mxu0 0.0
    %2702 = vmatmul.mubr.f32.gmra.mxu0 %v2633
    %v2703 = vpop.f32.mrf.mxu0
    %v2704 = vadd.f32 0.0, %v2703
    %v2705 = vpop.f32.mrf.mxu0
    %2706 = vdwg.mxu0
    %2707 = vrot.lane.b32.xlu0 %v2298, 120
    %v2708 = vpop.permute.xlu0 %2707
    %2709 = vrot.lane.b32.xlu0 %v2298, 88
    %v2710 = vpop.permute.xlu0 %2709
    %v2711 = vsel %vm241, %v2708, 0
    %v2713 = vsel %vm241, %v2710, 0
    %2715 = vmatprep.subr.mxu0 0.0
    %2716 = vmatpush1.xpose.msra.mxu0 0.0
    %2717 = vmatprep.subr.mxu0 0.0
    %2718 = vmatpush1.xpose.msra.mxu0 0.0
    %2719 = vmatprep.subr.mxu0 0.0
    %2720 = vmatpush1.xpose.msra.mxu0 0.0
    %2721 = vmatprep.subr.mxu0 0.0
    %2722 = vmatpush1.xpose.msra.mxu0 0.0
    %2723 = vmatprep.subr.mxu0 0.0
    %2724 = vmatpush1.xpose.msra.mxu0 0.0
    %2725 = vmatprep.subr.mxu0 0.0
    %2726 = vmatpush1.xpose.msra.mxu0 0.0
    %2727 = vmatprep.subr.mxu0 0.0
    %2728 = vmatpush1.xpose.msra.mxu0 0.0
    %2729 = vmatprep.subr.mxu0 0.0
    %2730 = vmatpush1.xpose.msra.mxu0 0.0
    %2731 = vmatprep.subr.mxu0 0.0
    %2732 = vmatpush1.xpose.msra.mxu0 0.0
    %2733 = vmatprep.subr.mxu0 0.0
    %2734 = vmatpush1.xpose.msra.mxu0 0.0
    %2735 = vmatprep.subr.mxu0 0.0
    %2736 = vmatpush1.xpose.msra.mxu0 0.0
    %2737 = vmatprep.subr.mxu0 0.0
    %2738 = vmatpush1.xpose.msra.mxu0 0.0
    %2739 = vmatprep.subr.mxu0 0.0
    %2740 = vmatpush1.xpose.msra.mxu0 0.0
    %2741 = vmatprep.subr.mxu0 0.0
    %2742 = vmatpush1.xpose.msra.mxu0 0.0
    %2743 = vmatprep.subr.mxu0 0.0
    %2744 = vmatpush1.xpose.msra.mxu0 0.0
    %2745 = vmatprep.subr.mxu0 0.0
    %2746 = vmatpush1.xpose.msra.mxu0 %v2713
    %2747 = vmatprep.subr.mxu0 0.0
    %2748 = vmatpush2.xpose.msra.mxu0 0.0
    %2749 = vmatprep.subr.mxu0 0.0
    %2750 = vmatpush2.xpose.msra.mxu0 0.0
    %2751 = vmatprep.subr.mxu0 0.0
    %2752 = vmatpush2.xpose.msra.mxu0 0.0
    %2753 = vmatprep.subr.mxu0 0.0
    %2754 = vmatpush2.xpose.msra.mxu0 0.0
    %2755 = vmatprep.subr.mxu0 0.0
    %2756 = vmatpush2.xpose.msra.mxu0 0.0
    %2757 = vmatprep.subr.mxu0 0.0
    %2758 = vmatpush2.xpose.msra.mxu0 0.0
    %2759 = vmatprep.subr.mxu0 0.0
    %2760 = vmatpush2.xpose.msra.mxu0 0.0
    %2761 = vmatprep.subr.mxu0 0.0
    %2762 = vmatpush2.xpose.msra.mxu0 0.0
    %2763 = vmatprep.subr.mxu0 0.0
    %2764 = vmatpush2.xpose.msra.mxu0 0.0
    %2765 = vmatprep.subr.mxu0 0.0
    %2766 = vmatpush2.xpose.msra.mxu0 0.0
    %2767 = vmatprep.subr.mxu0 0.0
    %2768 = vmatpush2.xpose.msra.mxu0 0.0
    %2769 = vmatprep.subr.mxu0 0.0
    %2770 = vmatpush2.xpose.msra.mxu0 0.0
    %2771 = vmatprep.subr.mxu0 0.0
    %2772 = vmatpush2.xpose.msra.mxu0 0.0
    %2773 = vmatprep.subr.mxu0 0.0
    %2774 = vmatpush2.xpose.msra.mxu0 0.0
    %2775 = vmatprep.subr.mxu0 0.0
    %2776 = vmatpush2.xpose.msra.mxu0 0.0
    %2777 = vmatprep.subr.mxu0 0.0
    %2778 = vmatpush2.xpose.msra.mxu0 0.0
    %2779 = vmatprep.mubr.f32.mxu0 0.0
    %2780 = vmatmul.mubr.f32.gmra.mxu0 %v2711
    %v2781 = vpop.f32.mrf.mxu0
    %v2782 = vadd.f32 0.0, %v2781
    %v2783 = vpop.f32.mrf.mxu0
    %2784 = vdwg.mxu0
    %v2785 = vsel %vm241, %v2704, -inf
    %2786 = vmax.xlane.f32.xlu0 %v2785
    %v2787 = vpop.xlane.xlu0 %2786
    %v2788 = vsel %vm241, %v2782, -inf
    %2789 = vmax.xlane.f32.xlu0 %v2788
    %v2790 = vpop.xlane.xlu0 %2789
    %v2791 = vsub.f32 %v2704, %v2787
    %v2792 = vsub.f32 %v2782, %v2790
    %v2793 = vmul.f32 %v2791, 1.442695
    %v2794 = vpow.pop %v2793
    %v2795 = vmul.f32 %v2792, 1.442695
    %v2796 = vpow.pop %v2795
    %v2797 = vsel %vm241, %v2794, 0.0
    %2798 = vadd.xlane.f32.xlu0 %v2797
    %v2799 = vpop.xlane.xlu0 %2798
    %v2800 = vsel %vm241, %v2796, 0.0
    %2801 = vadd.xlane.f32.xlu0 %v2800
    %v2802 = vpop.xlane.xlu0 %2801
    %v2803 = vrcp.pop %v2799
    %v2804 = vmul.f32 %v2794, %v2803
    %v2805 = vrcp.pop %v2802
    %v2806 = vmul.f32 %v2796, %v2805
    %2807 = vrot.lane.b32.xlu0 %v2293, 56
    %v2808 = vpop.permute.xlu0 %2807
    %v2811 = vsel %vm241, %v2804, 0
    %2813 = vmatprep.subr.mxu0 0.0
    %2814 = vmatpush1.msra.mxu0 0.0
    %2815 = vmatprep.subr.mxu0 0.0
    %2816 = vmatpush1.msra.mxu0 0.0
    %2817 = vmatprep.subr.mxu0 0.0
    %2818 = vmatpush1.msra.mxu0 0.0
    %2819 = vmatprep.subr.mxu0 0.0
    %2820 = vmatpush1.msra.mxu0 0.0
    %2821 = vmatprep.subr.mxu0 0.0
    %2822 = vmatpush1.msra.mxu0 0.0
    %2823 = vmatprep.subr.mxu0 0.0
    %2824 = vmatpush1.msra.mxu0 0.0
    %2825 = vmatprep.subr.mxu0 0.0
    %2826 = vmatpush1.msra.mxu0 0.0
    %2827 = vmatprep.subr.mxu0 0.0
    %2828 = vmatpush1.msra.mxu0 0.0
    %2829 = vmatprep.subr.mxu0 0.0
    %2830 = vmatpush1.msra.mxu0 0.0
    %2831 = vmatprep.subr.mxu0 0.0
    %2832 = vmatpush1.msra.mxu0 0.0
    %2833 = vmatprep.subr.mxu0 0.0
    %2834 = vmatpush1.msra.mxu0 0.0
    %2835 = vmatprep.subr.mxu0 0.0
    %2836 = vmatpush1.msra.mxu0 0.0
    %2837 = vmatprep.subr.mxu0 0.0
    %2838 = vmatpush1.msra.mxu0 0.0
    %2839 = vmatprep.subr.mxu0 0.0
    %2840 = vmatpush1.msra.mxu0 0.0
    %2841 = vmatprep.subr.mxu0 0.0
    %2842 = vmatpush1.msra.mxu0 0.0
    %2843 = vmatprep.subr.mxu0 0.0
    %2844 = vmatpush1.msra.mxu0 %v2808
    %2845 = vmatprep.subr.mxu0 0.0
    %2846 = vmatpush2.msra.mxu0 0.0
    %2847 = vmatprep.subr.mxu0 0.0
    %2848 = vmatpush2.msra.mxu0 0.0
    %2849 = vmatprep.subr.mxu0 0.0
    %2850 = vmatpush2.msra.mxu0 0.0
    %2851 = vmatprep.subr.mxu0 0.0
    %2852 = vmatpush2.msra.mxu0 0.0
    %2853 = vmatprep.subr.mxu0 0.0
    %2854 = vmatpush2.msra.mxu0 0.0
    %2855 = vmatprep.subr.mxu0 0.0
    %2856 = vmatpush2.msra.mxu0 0.0
    %2857 = vmatprep.subr.mxu0 0.0
    %2858 = vmatpush2.msra.mxu0 0.0
    %2859 = vmatprep.subr.mxu0 0.0
    %2860 = vmatpush2.msra.mxu0 0.0
    %2861 = vmatprep.subr.mxu0 0.0
    %2862 = vmatpush2.msra.mxu0 0.0
    %2863 = vmatprep.subr.mxu0 0.0
    %2864 = vmatpush2.msra.mxu0 0.0
    %2865 = vmatprep.subr.mxu0 0.0
    %2866 = vmatpush2.msra.mxu0 0.0
    %2867 = vmatprep.subr.mxu0 0.0
    %2868 = vmatpush2.msra.mxu0 0.0
    %2869 = vmatprep.subr.mxu0 0.0
    %2870 = vmatpush2.msra.mxu0 0.0
    %2871 = vmatprep.subr.mxu0 0.0
    %2872 = vmatpush2.msra.mxu0 0.0
    %2873 = vmatprep.subr.mxu0 0.0
    %2874 = vmatpush2.msra.mxu0 0.0
    %2875 = vmatprep.subr.mxu0 0.0
    %2876 = vmatpush2.msra.mxu0 0.0
    %2877 = vmatprep.mubr.f32.mxu0 0.0
    %2878 = vmatmul.mubr.f32.gmra.mxu0 %v2811
    %v2879 = vpop.f32.mrf.mxu0
    %v2880 = vadd.f32 0.0, %v2879
    %v2881 = vpop.f32.mrf.mxu0
    %2882 = vdwg.mxu0
    %2883 = vrot.lane.b32.xlu0 %v2298, 56
    %v2884 = vpop.permute.xlu0 %2883
    %v2887 = vsel %vm241, %v2806, 0
    %2889 = vmatprep.subr.mxu0 0.0
    %2890 = vmatpush1.msra.mxu0 0.0
    %2891 = vmatprep.subr.mxu0 0.0
    %2892 = vmatpush1.msra.mxu0 0.0
    %2893 = vmatprep.subr.mxu0 0.0
    %2894 = vmatpush1.msra.mxu0 0.0
    %2895 = vmatprep.subr.mxu0 0.0
    %2896 = vmatpush1.msra.mxu0 0.0
    %2897 = vmatprep.subr.mxu0 0.0
    %2898 = vmatpush1.msra.mxu0 0.0
    %2899 = vmatprep.subr.mxu0 0.0
    %2900 = vmatpush1.msra.mxu0 0.0
    %2901 = vmatprep.subr.mxu0 0.0
    %2902 = vmatpush1.msra.mxu0 0.0
    %2903 = vmatprep.subr.mxu0 0.0
    %2904 = vmatpush1.msra.mxu0 0.0
    %2905 = vmatprep.subr.mxu0 0.0
    %2906 = vmatpush1.msra.mxu0 0.0
    %2907 = vmatprep.subr.mxu0 0.0
    %2908 = vmatpush1.msra.mxu0 0.0
    %2909 = vmatprep.subr.mxu0 0.0
    %2910 = vmatpush1.msra.mxu0 0.0
    %2911 = vmatprep.subr.mxu0 0.0
    %2912 = vmatpush1.msra.mxu0 0.0
    %2913 = vmatprep.subr.mxu0 0.0
    %2914 = vmatpush1.msra.mxu0 0.0
    %2915 = vmatprep.subr.mxu0 0.0
    %2916 = vmatpush1.msra.mxu0 0.0
    %2917 = vmatprep.subr.mxu0 0.0
    %2918 = vmatpush1.msra.mxu0 0.0
    %2919 = vmatprep.subr.mxu0 0.0
    %2920 = vmatpush1.msra.mxu0 %v2884
    %2921 = vmatprep.subr.mxu0 0.0
    %2922 = vmatpush2.msra.mxu0 0.0
    %2923 = vmatprep.subr.mxu0 0.0
    %2924 = vmatpush2.msra.mxu0 0.0
    %2925 = vmatprep.subr.mxu0 0.0
    %2926 = vmatpush2.msra.mxu0 0.0
    %2927 = vmatprep.subr.mxu0 0.0
    %2928 = vmatpush2.msra.mxu0 0.0
    %2929 = vmatprep.subr.mxu0 0.0
    %2930 = vmatpush2.msra.mxu0 0.0
    %2931 = vmatprep.subr.mxu0 0.0
    %2932 = vmatpush2.msra.mxu0 0.0
    %2933 = vmatprep.subr.mxu0 0.0
    %2934 = vmatpush2.msra.mxu0 0.0
    %2935 = vmatprep.subr.mxu0 0.0
    %2936 = vmatpush2.msra.mxu0 0.0
    %2937 = vmatprep.subr.mxu0 0.0
    %2938 = vmatpush2.msra.mxu0 0.0
    %2939 = vmatprep.subr.mxu0 0.0
    %2940 = vmatpush2.msra.mxu0 0.0
    %2941 = vmatprep.subr.mxu0 0.0
    %2942 = vmatpush2.msra.mxu0 0.0
    %2943 = vmatprep.subr.mxu0 0.0
    %2944 = vmatpush2.msra.mxu0 0.0
    %2945 = vmatprep.subr.mxu0 0.0
    %2946 = vmatpush2.msra.mxu0 0.0
    %2947 = vmatprep.subr.mxu0 0.0
    %2948 = vmatpush2.msra.mxu0 0.0
    %2949 = vmatprep.subr.mxu0 0.0
    %2950 = vmatpush2.msra.mxu0 0.0
    %2951 = vmatprep.subr.mxu0 0.0
    %2952 = vmatpush2.msra.mxu0 0.0
    %2953 = vmatprep.mubr.f32.mxu0 0.0
    %2954 = vmatmul.mubr.f32.gmra.mxu0 %v2887
    %v2955 = vpop.f32.mrf.mxu0
    %v2956 = vadd.f32 0.0, %v2955
    %v2957 = vpop.f32.mrf.mxu0
    %2958 = vdwg.mxu0
    %v2960 = vsel %vm241, %v2880, 0
    %v2963 = vsel %vm241, %v2956, 0
    %2965 = vmatprep.subr.mxu0 0.0
    %2966 = vmatpush1.msra.mxu0 0.0
    %2967 = vmatprep.subr.mxu0 0.0
    %2968 = vmatpush1.msra.mxu0 0.0
    %2969 = vmatprep.subr.mxu0 0.0
    %2970 = vmatpush1.msra.mxu0 0.0
    %2971 = vmatprep.subr.mxu0 0.0
    %2972 = vmatpush1.msra.mxu0 0.0
    %2973 = vmatprep.subr.mxu0 0.0
    %2974 = vmatpush1.msra.mxu0 0.0
    %2975 = vmatprep.subr.mxu0 0.0
    %2976 = vmatpush1.msra.mxu0 0.0
    %2977 = vmatprep.subr.mxu0 0.0
    %2978 = vmatpush1.msra.mxu0 0.0
    %2979 = vmatprep.subr.mxu0 0.0
    %2980 = vmatpush1.msra.mxu0 0.0
    %2981 = vmatprep.subr.mxu0 0.0
    %2982 = vmatpush1.msra.mxu0 0.0
    %2983 = vmatprep.subr.mxu0 0.0
    %2984 = vmatpush1.msra.mxu0 0.0
    %2985 = vmatprep.subr.mxu0 0.0
    %2986 = vmatpush1.msra.mxu0 0.0
    %2987 = vmatprep.subr.mxu0 0.0
    %2988 = vmatpush1.msra.mxu0 0.0
    %2989 = vmatprep.subr.mxu0 0.0
    %2990 = vmatpush1.msra.mxu0 0.0
    %2991 = vmatprep.subr.mxu0 0.0
    %2992 = vmatpush1.msra.mxu0 0.0
    %2993 = vmatprep.subr.mxu0 0.0
    %2994 = vmatpush1.msra.mxu0 0.0
    %2995 = vmatprep.subr.mxu0 0.0
    %2996 = vmatpush1.msra.mxu0 %v2183
    %2997 = vmatprep.subr.mxu0 0.0
    %2998 = vmatpush2.msra.mxu0 0.0
    %2999 = vmatprep.subr.mxu0 0.0
    %3000 = vmatpush2.msra.mxu0 0.0
    %3001 = vmatprep.subr.mxu0 0.0
    %3002 = vmatpush2.msra.mxu0 0.0
    %3003 = vmatprep.subr.mxu0 0.0
    %3004 = vmatpush2.msra.mxu0 0.0
    %3005 = vmatprep.subr.mxu0 0.0
    %3006 = vmatpush2.msra.mxu0 0.0
    %3007 = vmatprep.subr.mxu0 0.0
    %3008 = vmatpush2.msra.mxu0 0.0
    %3009 = vmatprep.subr.mxu0 0.0
    %3010 = vmatpush2.msra.mxu0 0.0
    %3011 = vmatprep.subr.mxu0 0.0
    %3012 = vmatpush2.msra.mxu0 0.0
    %3013 = vmatprep.subr.mxu0 0.0
    %3014 = vmatpush2.msra.mxu0 0.0
    %3015 = vmatprep.subr.mxu0 0.0
    %3016 = vmatpush2.msra.mxu0 0.0
    %3017 = vmatprep.subr.mxu0 0.0
    %3018 = vmatpush2.msra.mxu0 0.0
    %3019 = vmatprep.subr.mxu0 0.0
    %3020 = vmatpush2.msra.mxu0 0.0
    %3021 = vmatprep.subr.mxu0 0.0
    %3022 = vmatpush2.msra.mxu0 0.0
    %3023 = vmatprep.subr.mxu0 0.0
    %3024 = vmatpush2.msra.mxu0 0.0
    %3025 = vmatprep.subr.mxu0 0.0
    %3026 = vmatpush2.msra.mxu0 0.0
    %3027 = vmatprep.subr.mxu0 0.0
    %3028 = vmatpush2.msra.mxu0 0.0
    %3029 = vmatprep.mubr.f32.mxu0 0.0
    %3030 = vmatmul.mubr.f32.gmra.mxu0 %v2960
    %v3031 = vpop.f32.mrf.mxu0
    %v3032 = vadd.f32 0.0, %v3031
    %v3033 = vpop.f32.mrf.mxu0
    %3034 = vmatprep.mubr.f32.mxu0 0.0
    %3035 = vmatmul.mubr.f32.gmra.mxu0 %v2963
    %v3036 = vpop.f32.mrf.mxu0
    %v3037 = vadd.f32 0.0, %v3036
    %v3038 = vpop.f32.mrf.mxu0
    %3039 = vdwg.mxu0
    %v3041 = vsel %vm241, %v2550, 0
    %v3044 = vsel %vm241, %v2626, 0
    %3046 = vmatprep.subr.mxu0 0.0
    %3047 = vmatpush1.msra.mxu0 0.0
    %3048 = vmatprep.subr.mxu0 0.0
    %3049 = vmatpush1.msra.mxu0 0.0
    %3050 = vmatprep.subr.mxu0 0.0
    %3051 = vmatpush1.msra.mxu0 0.0
    %3052 = vmatprep.subr.mxu0 0.0
    %3053 = vmatpush1.msra.mxu0 0.0
    %3054 = vmatprep.subr.mxu0 0.0
    %3055 = vmatpush1.msra.mxu0 0.0
    %3056 = vmatprep.subr.mxu0 0.0
    %3057 = vmatpush1.msra.mxu0 0.0
    %3058 = vmatprep.subr.mxu0 0.0
    %3059 = vmatpush1.msra.mxu0 0.0
    %3060 = vmatprep.subr.mxu0 0.0
    %3061 = vmatpush1.msra.mxu0 0.0
    %3062 = vmatprep.subr.mxu0 0.0
    %3063 = vmatpush1.msra.mxu0 0.0
    %3064 = vmatprep.subr.mxu0 0.0
    %3065 = vmatpush1.msra.mxu0 0.0
    %3066 = vmatprep.subr.mxu0 0.0
    %3067 = vmatpush1.msra.mxu0 0.0
    %3068 = vmatprep.subr.mxu0 0.0
    %3069 = vmatpush1.msra.mxu0 0.0
    %3070 = vmatprep.subr.mxu0 0.0
    %3071 = vmatpush1.msra.mxu0 0.0
    %3072 = vmatprep.subr.mxu0 0.0
    %3073 = vmatpush1.msra.mxu0 0.0
    %3074 = vmatprep.subr.mxu0 0.0
    %3075 = vmatpush1.msra.mxu0 0.0
    %3076 = vmatprep.subr.mxu0 0.0
    %3077 = vmatpush1.msra.mxu0 %v2182
    %3078 = vmatprep.subr.mxu0 0.0
    %3079 = vmatpush2.msra.mxu0 0.0
    %3080 = vmatprep.subr.mxu0 0.0
    %3081 = vmatpush2.msra.mxu0 0.0
    %3082 = vmatprep.subr.mxu0 0.0
    %3083 = vmatpush2.msra.mxu0 0.0
    %3084 = vmatprep.subr.mxu0 0.0
    %3085 = vmatpush2.msra.mxu0 0.0
    %3086 = vmatprep.subr.mxu0 0.0
    %3087 = vmatpush2.msra.mxu0 0.0
    %3088 = vmatprep.subr.mxu0 0.0
    %3089 = vmatpush2.msra.mxu0 0.0
    %3090 = vmatprep.subr.mxu0 0.0
    %3091 = vmatpush2.msra.mxu0 0.0
    %3092 = vmatprep.subr.mxu0 0.0
    %3093 = vmatpush2.msra.mxu0 0.0
    %3094 = vmatprep.subr.mxu0 0.0
    %3095 = vmatpush2.msra.mxu0 0.0
    %3096 = vmatprep.subr.mxu0 0.0
    %3097 = vmatpush2.msra.mxu0 0.0
    %3098 = vmatprep.subr.mxu0 0.0
    %3099 = vmatpush2.msra.mxu0 0.0
    %3100 = vmatprep.subr.mxu0 0.0
    %3101 = vmatpush2.msra.mxu0 0.0
    %3102 = vmatprep.subr.mxu0 0.0
    %3103 = vmatpush2.msra.mxu0 0.0
    %3104 = vmatprep.subr.mxu0 0.0
    %3105 = vmatpush2.msra.mxu0 0.0
    %3106 = vmatprep.subr.mxu0 0.0
    %3107 = vmatpush2.msra.mxu0 0.0
    %3108 = vmatprep.subr.mxu0 0.0
    %3109 = vmatpush2.msra.mxu0 0.0
    %3110 = vmatprep.mubr.f32.mxu0 0.0
    %3111 = vmatmul.mubr.f32.gmra.mxu0 %v3041
    %v3112 = vpop.f32.mrf.mxu0
    %v3113 = vadd.f32 %v3032, %v3112
    %v3114 = vpop.f32.mrf.mxu0
    %3115 = vmatprep.mubr.f32.mxu0 0.0
    %3116 = vmatmul.mubr.f32.gmra.mxu0 %v3044
    %v3117 = vpop.f32.mrf.mxu0
    %v3118 = vadd.f32 %v3037, %v3117
    %v3119 = vpop.f32.mrf.mxu0
    %3120 = vdwg.mxu0
    %3121 = vrot.lane.b32.xlu0 %v2293, 112
    %v3122 = vpop.permute.xlu0 %3121
    %3123 = vrot.lane.b32.xlu0 %v2293, 80
    %v3124 = vpop.permute.xlu0 %3123
    %v3125 = vsel %vm241, %v3122, 0
    %v3127 = vsel %vm241, %v3124, 0
    %3129 = vmatprep.subr.mxu0 0.0
    %3130 = vmatpush1.xpose.msra.mxu0 0.0
    %3131 = vmatprep.subr.mxu0 0.0
    %3132 = vmatpush1.xpose.msra.mxu0 0.0
    %3133 = vmatprep.subr.mxu0 0.0
    %3134 = vmatpush1.xpose.msra.mxu0 0.0
    %3135 = vmatprep.subr.mxu0 0.0
    %3136 = vmatpush1.xpose.msra.mxu0 0.0
    %3137 = vmatprep.subr.mxu0 0.0
    %3138 = vmatpush1.xpose.msra.mxu0 0.0
    %3139 = vmatprep.subr.mxu0 0.0
    %3140 = vmatpush1.xpose.msra.mxu0 0.0
    %3141 = vmatprep.subr.mxu0 0.0
    %3142 = vmatpush1.xpose.msra.mxu0 0.0
    %3143 = vmatprep.subr.mxu0 0.0
    %3144 = vmatpush1.xpose.msra.mxu0 0.0
    %3145 = vmatprep.subr.mxu0 0.0
    %3146 = vmatpush1.xpose.msra.mxu0 0.0
    %3147 = vmatprep.subr.mxu0 0.0
    %3148 = vmatpush1.xpose.msra.mxu0 0.0
    %3149 = vmatprep.subr.mxu0 0.0
    %3150 = vmatpush1.xpose.msra.mxu0 0.0
    %3151 = vmatprep.subr.mxu0 0.0
    %3152 = vmatpush1.xpose.msra.mxu0 0.0
    %3153 = vmatprep.subr.mxu0 0.0
    %3154 = vmatpush1.xpose.msra.mxu0 0.0
    %3155 = vmatprep.subr.mxu0 0.0
    %3156 = vmatpush1.xpose.msra.mxu0 0.0
    %3157 = vmatprep.subr.mxu0 0.0
    %3158 = vmatpush1.xpose.msra.mxu0 0.0
    %3159 = vmatprep.subr.mxu0 0.0
    %3160 = vmatpush1.xpose.msra.mxu0 %v3127
    %3161 = vmatprep.subr.mxu0 0.0
    %3162 = vmatpush2.xpose.msra.mxu0 0.0
    %3163 = vmatprep.subr.mxu0 0.0
    %3164 = vmatpush2.xpose.msra.mxu0 0.0
    %3165 = vmatprep.subr.mxu0 0.0
    %3166 = vmatpush2.xpose.msra.mxu0 0.0
    %3167 = vmatprep.subr.mxu0 0.0
    %3168 = vmatpush2.xpose.msra.mxu0 0.0
    %3169 = vmatprep.subr.mxu0 0.0
    %3170 = vmatpush2.xpose.msra.mxu0 0.0
    %3171 = vmatprep.subr.mxu0 0.0
    %3172 = vmatpush2.xpose.msra.mxu0 0.0
    %3173 = vmatprep.subr.mxu0 0.0
    %3174 = vmatpush2.xpose.msra.mxu0 0.0
    %3175 = vmatprep.subr.mxu0 0.0
    %3176 = vmatpush2.xpose.msra.mxu0 0.0
    %3177 = vmatprep.subr.mxu0 0.0
    %3178 = vmatpush2.xpose.msra.mxu0 0.0
    %3179 = vmatprep.subr.mxu0 0.0
    %3180 = vmatpush2.xpose.msra.mxu0 0.0
    %3181 = vmatprep.subr.mxu0 0.0
    %3182 = vmatpush2.xpose.msra.mxu0 0.0
    %3183 = vmatprep.subr.mxu0 0.0
    %3184 = vmatpush2.xpose.msra.mxu0 0.0
    %3185 = vmatprep.subr.mxu0 0.0
    %3186 = vmatpush2.xpose.msra.mxu0 0.0
    %3187 = vmatprep.subr.mxu0 0.0
    %3188 = vmatpush2.xpose.msra.mxu0 0.0
    %3189 = vmatprep.subr.mxu0 0.0
    %3190 = vmatpush2.xpose.msra.mxu0 0.0
    %3191 = vmatprep.subr.mxu0 0.0
    %3192 = vmatpush2.xpose.msra.mxu0 0.0
    %3193 = vmatprep.mubr.f32.mxu0 0.0
    %3194 = vmatmul.mubr.f32.gmra.mxu0 %v3125
    %v3195 = vpop.f32.mrf.mxu0
    %v3196 = vadd.f32 0.0, %v3195
    %v3197 = vpop.f32.mrf.mxu0
    %3198 = vdwg.mxu0
    %3199 = vrot.lane.b32.xlu0 %v2298, 112
    %v3200 = vpop.permute.xlu0 %3199
    %3201 = vrot.lane.b32.xlu0 %v2298, 80
    %v3202 = vpop.permute.xlu0 %3201
    %v3203 = vsel %vm241, %v3200, 0
    %v3205 = vsel %vm241, %v3202, 0
    %3207 = vmatprep.subr.mxu0 0.0
    %3208 = vmatpush1.xpose.msra.mxu0 0.0
    %3209 = vmatprep.subr.mxu0 0.0
    %3210 = vmatpush1.xpose.msra.mxu0 0.0
    %3211 = vmatprep.subr.mxu0 0.0
    %3212 = vmatpush1.xpose.msra.mxu0 0.0
    %3213 = vmatprep.subr.mxu0 0.0
    %3214 = vmatpush1.xpose.msra.mxu0 0.0
    %3215 = vmatprep.subr.mxu0 0.0
    %3216 = vmatpush1.xpose.msra.mxu0 0.0
    %3217 = vmatprep.subr.mxu0 0.0
    %3218 = vmatpush1.xpose.msra.mxu0 0.0
    %3219 = vmatprep.subr.mxu0 0.0
    %3220 = vmatpush1.xpose.msra.mxu0 0.0
    %3221 = vmatprep.subr.mxu0 0.0
    %3222 = vmatpush1.xpose.msra.mxu0 0.0
    %3223 = vmatprep.subr.mxu0 0.0
    %3224 = vmatpush1.xpose.msra.mxu0 0.0
    %3225 = vmatprep.subr.mxu0 0.0
    %3226 = vmatpush1.xpose.msra.mxu0 0.0
    %3227 = vmatprep.subr.mxu0 0.0
    %3228 = vmatpush1.xpose.msra.mxu0 0.0
    %3229 = vmatprep.subr.mxu0 0.0
    %3230 = vmatpush1.xpose.msra.mxu0 0.0
    %3231 = vmatprep.subr.mxu0 0.0
    %3232 = vmatpush1.xpose.msra.mxu0 0.0
    %3233 = vmatprep.subr.mxu0 0.0
    %3234 = vmatpush1.xpose.msra.mxu0 0.0
    %3235 = vmatprep.subr.mxu0 0.0
    %3236 = vmatpush1.xpose.msra.mxu0 0.0
    %3237 = vmatprep.subr.mxu0 0.0
    %3238 = vmatpush1.xpose.msra.mxu0 %v3205
    %3239 = vmatprep.subr.mxu0 0.0
    %3240 = vmatpush2.xpose.msra.mxu0 0.0
    %3241 = vmatprep.subr.mxu0 0.0
    %3242 = vmatpush2.xpose.msra.mxu0 0.0
    %3243 = vmatprep.subr.mxu0 0.0
    %3244 = vmatpush2.xpose.msra.mxu0 0.0
    %3245 = vmatprep.subr.mxu0 0.0
    %3246 = vmatpush2.xpose.msra.mxu0 0.0
    %3247 = vmatprep.subr.mxu0 0.0
    %3248 = vmatpush2.xpose.msra.mxu0 0.0
    %3249 = vmatprep.subr.mxu0 0.0
    %3250 = vmatpush2.xpose.msra.mxu0 0.0
    %3251 = vmatprep.subr.mxu0 0.0
    %3252 = vmatpush2.xpose.msra.mxu0 0.0
    %3253 = vmatprep.subr.mxu0 0.0
    %3254 = vmatpush2.xpose.msra.mxu0 0.0
    %3255 = vmatprep.subr.mxu0 0.0
    %3256 = vmatpush2.xpose.msra.mxu0 0.0
    %3257 = vmatprep.subr.mxu0 0.0
    %3258 = vmatpush2.xpose.msra.mxu0 0.0
    %3259 = vmatprep.subr.mxu0 0.0
    %3260 = vmatpush2.xpose.msra.mxu0 0.0
    %3261 = vmatprep.subr.mxu0 0.0
    %3262 = vmatpush2.xpose.msra.mxu0 0.0
    %3263 = vmatprep.subr.mxu0 0.0
    %3264 = vmatpush2.xpose.msra.mxu0 0.0
    %3265 = vmatprep.subr.mxu0 0.0
    %3266 = vmatpush2.xpose.msra.mxu0 0.0
    %3267 = vmatprep.subr.mxu0 0.0
    %3268 = vmatpush2.xpose.msra.mxu0 0.0
    %3269 = vmatprep.subr.mxu0 0.0
    %3270 = vmatpush2.xpose.msra.mxu0 0.0
    %3271 = vmatprep.mubr.f32.mxu0 0.0
    %3272 = vmatmul.mubr.f32.gmra.mxu0 %v3203
    %v3273 = vpop.f32.mrf.mxu0
    %v3274 = vadd.f32 0.0, %v3273
    %v3275 = vpop.f32.mrf.mxu0
    %3276 = vdwg.mxu0
    %v3277 = vsel %vm241, %v3196, -inf
    %3278 = vmax.xlane.f32.xlu0 %v3277
    %v3279 = vpop.xlane.xlu0 %3278
    %v3280 = vsel %vm241, %v3274, -inf
    %3281 = vmax.xlane.f32.xlu0 %v3280
    %v3282 = vpop.xlane.xlu0 %3281
    %v3283 = vsub.f32 %v3196, %v3279
    %v3284 = vsub.f32 %v3274, %v3282
    %v3285 = vmul.f32 %v3283, 1.442695
    %v3286 = vpow.pop %v3285
    %v3287 = vmul.f32 %v3284, 1.442695
    %v3288 = vpow.pop %v3287
    %v3289 = vsel %vm241, %v3286, 0.0
    %3290 = vadd.xlane.f32.xlu0 %v3289
    %v3291 = vpop.xlane.xlu0 %3290
    %v3292 = vsel %vm241, %v3288, 0.0
    %3293 = vadd.xlane.f32.xlu0 %v3292
    %v3294 = vpop.xlane.xlu0 %3293
    %v3295 = vrcp.pop %v3291
    %v3296 = vmul.f32 %v3286, %v3295
    %v3297 = vrcp.pop %v3294
    %v3298 = vmul.f32 %v3288, %v3297
    %3299 = vrot.lane.b32.xlu0 %v2293, 48
    %v3300 = vpop.permute.xlu0 %3299
    %v3303 = vsel %vm241, %v3296, 0
    %3305 = vmatprep.subr.mxu0 0.0
    %3306 = vmatpush1.msra.mxu0 0.0
    %3307 = vmatprep.subr.mxu0 0.0
    %3308 = vmatpush1.msra.mxu0 0.0
    %3309 = vmatprep.subr.mxu0 0.0
    %3310 = vmatpush1.msra.mxu0 0.0
    %3311 = vmatprep.subr.mxu0 0.0
    %3312 = vmatpush1.msra.mxu0 0.0
    %3313 = vmatprep.subr.mxu0 0.0
    %3314 = vmatpush1.msra.mxu0 0.0
    %3315 = vmatprep.subr.mxu0 0.0
    %3316 = vmatpush1.msra.mxu0 0.0
    %3317 = vmatprep.subr.mxu0 0.0
    %3318 = vmatpush1.msra.mxu0 0.0
    %3319 = vmatprep.subr.mxu0 0.0
    %3320 = vmatpush1.msra.mxu0 0.0
    %3321 = vmatprep.subr.mxu0 0.0
    %3322 = vmatpush1.msra.mxu0 0.0
    %3323 = vmatprep.subr.mxu0 0.0
    %3324 = vmatpush1.msra.mxu0 0.0
    %3325 = vmatprep.subr.mxu0 0.0
    %3326 = vmatpush1.msra.mxu0 0.0
    %3327 = vmatprep.subr.mxu0 0.0
    %3328 = vmatpush1.msra.mxu0 0.0
    %3329 = vmatprep.subr.mxu0 0.0
    %3330 = vmatpush1.msra.mxu0 0.0
    %3331 = vmatprep.subr.mxu0 0.0
    %3332 = vmatpush1.msra.mxu0 0.0
    %3333 = vmatprep.subr.mxu0 0.0
    %3334 = vmatpush1.msra.mxu0 0.0
    %3335 = vmatprep.subr.mxu0 0.0
    %3336 = vmatpush1.msra.mxu0 %v3300
    %3337 = vmatprep.subr.mxu0 0.0
    %3338 = vmatpush2.msra.mxu0 0.0
    %3339 = vmatprep.subr.mxu0 0.0
    %3340 = vmatpush2.msra.mxu0 0.0
    %3341 = vmatprep.subr.mxu0 0.0
    %3342 = vmatpush2.msra.mxu0 0.0
    %3343 = vmatprep.subr.mxu0 0.0
    %3344 = vmatpush2.msra.mxu0 0.0
    %3345 = vmatprep.subr.mxu0 0.0
    %3346 = vmatpush2.msra.mxu0 0.0
    %3347 = vmatprep.subr.mxu0 0.0
    %3348 = vmatpush2.msra.mxu0 0.0
    %3349 = vmatprep.subr.mxu0 0.0
    %3350 = vmatpush2.msra.mxu0 0.0
    %3351 = vmatprep.subr.mxu0 0.0
    %3352 = vmatpush2.msra.mxu0 0.0
    %3353 = vmatprep.subr.mxu0 0.0
    %3354 = vmatpush2.msra.mxu0 0.0
    %3355 = vmatprep.subr.mxu0 0.0
    %3356 = vmatpush2.msra.mxu0 0.0
    %3357 = vmatprep.subr.mxu0 0.0
    %3358 = vmatpush2.msra.mxu0 0.0
    %3359 = vmatprep.subr.mxu0 0.0
    %3360 = vmatpush2.msra.mxu0 0.0
    %3361 = vmatprep.subr.mxu0 0.0
    %3362 = vmatpush2.msra.mxu0 0.0
    %3363 = vmatprep.subr.mxu0 0.0
    %3364 = vmatpush2.msra.mxu0 0.0
    %3365 = vmatprep.subr.mxu0 0.0
    %3366 = vmatpush2.msra.mxu0 0.0
    %3367 = vmatprep.subr.mxu0 0.0
    %3368 = vmatpush2.msra.mxu0 0.0
    %3369 = vmatprep.mubr.f32.mxu0 0.0
    %3370 = vmatmul.mubr.f32.gmra.mxu0 %v3303
    %v3371 = vpop.f32.mrf.mxu0
    %v3372 = vadd.f32 0.0, %v3371
    %v3373 = vpop.f32.mrf.mxu0
    %3374 = vdwg.mxu0
    %3375 = vrot.lane.b32.xlu0 %v2298, 48
    %v3376 = vpop.permute.xlu0 %3375
    %v3379 = vsel %vm241, %v3298, 0
    %3381 = vmatprep.subr.mxu0 0.0
    %3382 = vmatpush1.msra.mxu0 0.0
    %3383 = vmatprep.subr.mxu0 0.0
    %3384 = vmatpush1.msra.mxu0 0.0
    %3385 = vmatprep.subr.mxu0 0.0
    %3386 = vmatpush1.msra.mxu0 0.0
    %3387 = vmatprep.subr.mxu0 0.0
    %3388 = vmatpush1.msra.mxu0 0.0
    %3389 = vmatprep.subr.mxu0 0.0
    %3390 = vmatpush1.msra.mxu0 0.0
    %3391 = vmatprep.subr.mxu0 0.0
    %3392 = vmatpush1.msra.mxu0 0.0
    %3393 = vmatprep.subr.mxu0 0.0
    %3394 = vmatpush1.msra.mxu0 0.0
    %3395 = vmatprep.subr.mxu0 0.0
    %3396 = vmatpush1.msra.mxu0 0.0
    %3397 = vmatprep.subr.mxu0 0.0
    %3398 = vmatpush1.msra.mxu0 0.0
    %3399 = vmatprep.subr.mxu0 0.0
    %3400 = vmatpush1.msra.mxu0 0.0
    %3401 = vmatprep.subr.mxu0 0.0
    %3402 = vmatpush1.msra.mxu0 0.0
    %3403 = vmatprep.subr.mxu0 0.0
    %3404 = vmatpush1.msra.mxu0 0.0
    %3405 = vmatprep.subr.mxu0 0.0
    %3406 = vmatpush1.msra.mxu0 0.0
    %3407 = vmatprep.subr.mxu0 0.0
    %3408 = vmatpush1.msra.mxu0 0.0
    %3409 = vmatprep.subr.mxu0 0.0
    %3410 = vmatpush1.msra.mxu0 0.0
    %3411 = vmatprep.subr.mxu0 0.0
    %3412 = vmatpush1.msra.mxu0 %v3376
    %3413 = vmatprep.subr.mxu0 0.0
    %3414 = vmatpush2.msra.mxu0 0.0
    %3415 = vmatprep.subr.mxu0 0.0
    %3416 = vmatpush2.msra.mxu0 0.0
    %3417 = vmatprep.subr.mxu0 0.0
    %3418 = vmatpush2.msra.mxu0 0.0
    %3419 = vmatprep.subr.mxu0 0.0
    %3420 = vmatpush2.msra.mxu0 0.0
    %3421 = vmatprep.subr.mxu0 0.0
    %3422 = vmatpush2.msra.mxu0 0.0
    %3423 = vmatprep.subr.mxu0 0.0
    %3424 = vmatpush2.msra.mxu0 0.0
    %3425 = vmatprep.subr.mxu0 0.0
    %3426 = vmatpush2.msra.mxu0 0.0
    %3427 = vmatprep.subr.mxu0 0.0
    %3428 = vmatpush2.msra.mxu0 0.0
    %3429 = vmatprep.subr.mxu0 0.0
    %3430 = vmatpush2.msra.mxu0 0.0
    %3431 = vmatprep.subr.mxu0 0.0
    %3432 = vmatpush2.msra.mxu0 0.0
    %3433 = vmatprep.subr.mxu0 0.0
    %3434 = vmatpush2.msra.mxu0 0.0
    %3435 = vmatprep.subr.mxu0 0.0
    %3436 = vmatpush2.msra.mxu0 0.0
    %3437 = vmatprep.subr.mxu0 0.0
    %3438 = vmatpush2.msra.mxu0 0.0
    %3439 = vmatprep.subr.mxu0 0.0
    %3440 = vmatpush2.msra.mxu0 0.0
    %3441 = vmatprep.subr.mxu0 0.0
    %3442 = vmatpush2.msra.mxu0 0.0
    %3443 = vmatprep.subr.mxu0 0.0
    %3444 = vmatpush2.msra.mxu0 0.0
    %3445 = vmatprep.mubr.f32.mxu0 0.0
    %3446 = vmatmul.mubr.f32.gmra.mxu0 %v3379
    %v3447 = vpop.f32.mrf.mxu0
    %v3448 = vadd.f32 0.0, %v3447
    %v3449 = vpop.f32.mrf.mxu0
    %3450 = vdwg.mxu0
    %v3452 = vsel %vm241, %v3372, 0
    %v3455 = vsel %vm241, %v3448, 0
    %3457 = vmatprep.subr.mxu0 0.0
    %3458 = vmatpush1.msra.mxu0 0.0
    %3459 = vmatprep.subr.mxu0 0.0
    %3460 = vmatpush1.msra.mxu0 0.0
    %3461 = vmatprep.subr.mxu0 0.0
    %3462 = vmatpush1.msra.mxu0 0.0
    %3463 = vmatprep.subr.mxu0 0.0
    %3464 = vmatpush1.msra.mxu0 0.0
    %3465 = vmatprep.subr.mxu0 0.0
    %3466 = vmatpush1.msra.mxu0 0.0
    %3467 = vmatprep.subr.mxu0 0.0
    %3468 = vmatpush1.msra.mxu0 0.0
    %3469 = vmatprep.subr.mxu0 0.0
    %3470 = vmatpush1.msra.mxu0 0.0
    %3471 = vmatprep.subr.mxu0 0.0
    %3472 = vmatpush1.msra.mxu0 0.0
    %3473 = vmatprep.subr.mxu0 0.0
    %3474 = vmatpush1.msra.mxu0 0.0
    %3475 = vmatprep.subr.mxu0 0.0
    %3476 = vmatpush1.msra.mxu0 0.0
    %3477 = vmatprep.subr.mxu0 0.0
    %3478 = vmatpush1.msra.mxu0 0.0
    %3479 = vmatprep.subr.mxu0 0.0
    %3480 = vmatpush1.msra.mxu0 0.0
    %3481 = vmatprep.subr.mxu0 0.0
    %3482 = vmatpush1.msra.mxu0 0.0
    %3483 = vmatprep.subr.mxu0 0.0
    %3484 = vmatpush1.msra.mxu0 0.0
    %3485 = vmatprep.subr.mxu0 0.0
    %3486 = vmatpush1.msra.mxu0 0.0
    %3487 = vmatprep.subr.mxu0 0.0
    %3488 = vmatpush1.msra.mxu0 %v2184
    %3489 = vmatprep.subr.mxu0 0.0
    %3490 = vmatpush2.msra.mxu0 0.0
    %3491 = vmatprep.subr.mxu0 0.0
    %3492 = vmatpush2.msra.mxu0 0.0
    %3493 = vmatprep.subr.mxu0 0.0
    %3494 = vmatpush2.msra.mxu0 0.0
    %3495 = vmatprep.subr.mxu0 0.0
    %3496 = vmatpush2.msra.mxu0 0.0
    %3497 = vmatprep.subr.mxu0 0.0
    %3498 = vmatpush2.msra.mxu0 0.0
    %3499 = vmatprep.subr.mxu0 0.0
    %3500 = vmatpush2.msra.mxu0 0.0
    %3501 = vmatprep.subr.mxu0 0.0
    %3502 = vmatpush2.msra.mxu0 0.0
    %3503 = vmatprep.subr.mxu0 0.0
    %3504 = vmatpush2.msra.mxu0 0.0
    %3505 = vmatprep.subr.mxu0 0.0
    %3506 = vmatpush2.msra.mxu0 0.0
    %3507 = vmatprep.subr.mxu0 0.0
    %3508 = vmatpush2.msra.mxu0 0.0
    %3509 = vmatprep.subr.mxu0 0.0
    %3510 = vmatpush2.msra.mxu0 0.0
    %3511 = vmatprep.subr.mxu0 0.0
    %3512 = vmatpush2.msra.mxu0 0.0
    %3513 = vmatprep.subr.mxu0 0.0
    %3514 = vmatpush2.msra.mxu0 0.0
    %3515 = vmatprep.subr.mxu0 0.0
    %3516 = vmatpush2.msra.mxu0 0.0
    %3517 = vmatprep.subr.mxu0 0.0
    %3518 = vmatpush2.msra.mxu0 0.0
    %3519 = vmatprep.subr.mxu0 0.0
    %3520 = vmatpush2.msra.mxu0 0.0
    %3521 = vmatprep.mubr.f32.mxu0 0.0
    %3522 = vmatmul.mubr.f32.gmra.mxu0 %v3452
    %v3523 = vpop.f32.mrf.mxu0
    %v3524 = vadd.f32 0.0, %v3523
    %v3525 = vpop.f32.mrf.mxu0
    %3526 = vmatprep.mubr.f32.mxu0 0.0
    %3527 = vmatmul.mubr.f32.gmra.mxu0 %v3455
    %v3528 = vpop.f32.mrf.mxu0
    %v3529 = vadd.f32 0.0, %v3528
    %v3530 = vpop.f32.mrf.mxu0
    %3531 = vdwg.mxu0
    %v3532 = vadd.f32 %v3113, %v3524
    %v3533 = vadd.f32 %v3118, %v3529
    %3534 = vrot.lane.b32.xlu0 %v2293, 104
    %v3535 = vpop.permute.xlu0 %3534
    %3536 = vrot.lane.b32.xlu0 %v2293, 72
    %v3537 = vpop.permute.xlu0 %3536
    %v3538 = vsel %vm241, %v3535, 0
    %v3540 = vsel %vm241, %v3537, 0
    %3542 = vmatprep.subr.mxu0 0.0
    %3543 = vmatpush1.xpose.msra.mxu0 0.0
    %3544 = vmatprep.subr.mxu0 0.0
    %3545 = vmatpush1.xpose.msra.mxu0 0.0
    %3546 = vmatprep.subr.mxu0 0.0
    %3547 = vmatpush1.xpose.msra.mxu0 0.0
    %3548 = vmatprep.subr.mxu0 0.0
    %3549 = vmatpush1.xpose.msra.mxu0 0.0
    %3550 = vmatprep.subr.mxu0 0.0
    %3551 = vmatpush1.xpose.msra.mxu0 0.0
    %3552 = vmatprep.subr.mxu0 0.0
    %3553 = vmatpush1.xpose.msra.mxu0 0.0
    %3554 = vmatprep.subr.mxu0 0.0
    %3555 = vmatpush1.xpose.msra.mxu0 0.0
    %3556 = vmatprep.subr.mxu0 0.0
    %3557 = vmatpush1.xpose.msra.mxu0 0.0
    %3558 = vmatprep.subr.mxu0 0.0
    %3559 = vmatpush1.xpose.msra.mxu0 0.0
    %3560 = vmatprep.subr.mxu0 0.0
    %3561 = vmatpush1.xpose.msra.mxu0 0.0
    %3562 = vmatprep.subr.mxu0 0.0
    %3563 = vmatpush1.xpose.msra.mxu0 0.0
    %3564 = vmatprep.subr.mxu0 0.0
    %3565 = vmatpush1.xpose.msra.mxu0 0.0
    %3566 = vmatprep.subr.mxu0 0.0
    %3567 = vmatpush1.xpose.msra.mxu0 0.0
    %3568 = vmatprep.subr.mxu0 0.0
    %3569 = vmatpush1.xpose.msra.mxu0 0.0
    %3570 = vmatprep.subr.mxu0 0.0
    %3571 = vmatpush1.xpose.msra.mxu0 0.0
    %3572 = vmatprep.subr.mxu0 0.0
    %3573 = vmatpush1.xpose.msra.mxu0 %v3540
    %3574 = vmatprep.subr.mxu0 0.0
    %3575 = vmatpush2.xpose.msra.mxu0 0.0
    %3576 = vmatprep.subr.mxu0 0.0
    %3577 = vmatpush2.xpose.msra.mxu0 0.0
    %3578 = vmatprep.subr.mxu0 0.0
    %3579 = vmatpush2.xpose.msra.mxu0 0.0
    %3580 = vmatprep.subr.mxu0 0.0
    %3581 = vmatpush2.xpose.msra.mxu0 0.0
    %3582 = vmatprep.subr.mxu0 0.0
    %3583 = vmatpush2.xpose.msra.mxu0 0.0
    %3584 = vmatprep.subr.mxu0 0.0
    %3585 = vmatpush2.xpose.msra.mxu0 0.0
    %3586 = vmatprep.subr.mxu0 0.0
    %3587 = vmatpush2.xpose.msra.mxu0 0.0
    %3588 = vmatprep.subr.mxu0 0.0
    %3589 = vmatpush2.xpose.msra.mxu0 0.0
    %3590 = vmatprep.subr.mxu0 0.0
    %3591 = vmatpush2.xpose.msra.mxu0 0.0
    %3592 = vmatprep.subr.mxu0 0.0
    %3593 = vmatpush2.xpose.msra.mxu0 0.0
    %3594 = vmatprep.subr.mxu0 0.0
    %3595 = vmatpush2.xpose.msra.mxu0 0.0
    %3596 = vmatprep.subr.mxu0 0.0
    %3597 = vmatpush2.xpose.msra.mxu0 0.0
    %3598 = vmatprep.subr.mxu0 0.0
    %3599 = vmatpush2.xpose.msra.mxu0 0.0
    %3600 = vmatprep.subr.mxu0 0.0
    %3601 = vmatpush2.xpose.msra.mxu0 0.0
    %3602 = vmatprep.subr.mxu0 0.0
    %3603 = vmatpush2.xpose.msra.mxu0 0.0
    %3604 = vmatprep.subr.mxu0 0.0
    %3605 = vmatpush2.xpose.msra.mxu0 0.0
    %3606 = vmatprep.mubr.f32.mxu0 0.0
    %3607 = vmatmul.mubr.f32.gmra.mxu0 %v3538
    %v3608 = vpop.f32.mrf.mxu0
    %v3609 = vadd.f32 0.0, %v3608
    %v3610 = vpop.f32.mrf.mxu0
    %3611 = vdwg.mxu0
    %3612 = vrot.lane.b32.xlu0 %v2298, 104
    %v3613 = vpop.permute.xlu0 %3612
    %3614 = vrot.lane.b32.xlu0 %v2298, 72
    %v3615 = vpop.permute.xlu0 %3614
    %v3616 = vsel %vm241, %v3613, 0
    %v3618 = vsel %vm241, %v3615, 0
    %3620 = vmatprep.subr.mxu0 0.0
    %3621 = vmatpush1.xpose.msra.mxu0 0.0
    %3622 = vmatprep.subr.mxu0 0.0
    %3623 = vmatpush1.xpose.msra.mxu0 0.0
    %3624 = vmatprep.subr.mxu0 0.0
    %3625 = vmatpush1.xpose.msra.mxu0 0.0
    %3626 = vmatprep.subr.mxu0 0.0
    %3627 = vmatpush1.xpose.msra.mxu0 0.0
    %3628 = vmatprep.subr.mxu0 0.0
    %3629 = vmatpush1.xpose.msra.mxu0 0.0
    %3630 = vmatprep.subr.mxu0 0.0
    %3631 = vmatpush1.xpose.msra.mxu0 0.0
    %3632 = vmatprep.subr.mxu0 0.0
    %3633 = vmatpush1.xpose.msra.mxu0 0.0
    %3634 = vmatprep.subr.mxu0 0.0
    %3635 = vmatpush1.xpose.msra.mxu0 0.0
    %3636 = vmatprep.subr.mxu0 0.0
    %3637 = vmatpush1.xpose.msra.mxu0 0.0
    %3638 = vmatprep.subr.mxu0 0.0
    %3639 = vmatpush1.xpose.msra.mxu0 0.0
    %3640 = vmatprep.subr.mxu0 0.0
    %3641 = vmatpush1.xpose.msra.mxu0 0.0
    %3642 = vmatprep.subr.mxu0 0.0
    %3643 = vmatpush1.xpose.msra.mxu0 0.0
    %3644 = vmatprep.subr.mxu0 0.0
    %3645 = vmatpush1.xpose.msra.mxu0 0.0
    %3646 = vmatprep.subr.mxu0 0.0
    %3647 = vmatpush1.xpose.msra.mxu0 0.0
    %3648 = vmatprep.subr.mxu0 0.0
    %3649 = vmatpush1.xpose.msra.mxu0 0.0
    %3650 = vmatprep.subr.mxu0 0.0
    %3651 = vmatpush1.xpose.msra.mxu0 %v3618
    %3652 = vmatprep.subr.mxu0 0.0
    %3653 = vmatpush2.xpose.msra.mxu0 0.0
    %3654 = vmatprep.subr.mxu0 0.0
    %3655 = vmatpush2.xpose.msra.mxu0 0.0
    %3656 = vmatprep.subr.mxu0 0.0
    %3657 = vmatpush2.xpose.msra.mxu0 0.0
    %3658 = vmatprep.subr.mxu0 0.0
    %3659 = vmatpush2.xpose.msra.mxu0 0.0
    %3660 = vmatprep.subr.mxu0 0.0
    %3661 = vmatpush2.xpose.msra.mxu0 0.0
    %3662 = vmatprep.subr.mxu0 0.0
    %3663 = vmatpush2.xpose.msra.mxu0 0.0
    %3664 = vmatprep.subr.mxu0 0.0
    %3665 = vmatpush2.xpose.msra.mxu0 0.0
    %3666 = vmatprep.subr.mxu0 0.0
    %3667 = vmatpush2.xpose.msra.mxu0 0.0
    %3668 = vmatprep.subr.mxu0 0.0
    %3669 = vmatpush2.xpose.msra.mxu0 0.0
    %3670 = vmatprep.subr.mxu0 0.0
    %3671 = vmatpush2.xpose.msra.mxu0 0.0
    %3672 = vmatprep.subr.mxu0 0.0
    %3673 = vmatpush2.xpose.msra.mxu0 0.0
    %3674 = vmatprep.subr.mxu0 0.0
    %3675 = vmatpush2.xpose.msra.mxu0 0.0
    %3676 = vmatprep.subr.mxu0 0.0
    %3677 = vmatpush2.xpose.msra.mxu0 0.0
    %3678 = vmatprep.subr.mxu0 0.0
    %3679 = vmatpush2.xpose.msra.mxu0 0.0
    %3680 = vmatprep.subr.mxu0 0.0
    %3681 = vmatpush2.xpose.msra.mxu0 0.0
    %3682 = vmatprep.subr.mxu0 0.0
    %3683 = vmatpush2.xpose.msra.mxu0 0.0
    %3684 = vmatprep.mubr.f32.mxu0 0.0
    %3685 = vmatmul.mubr.f32.gmra.mxu0 %v3616
    %v3686 = vpop.f32.mrf.mxu0
    %v3687 = vadd.f32 0.0, %v3686
    %v3688 = vpop.f32.mrf.mxu0
    %3689 = vdwg.mxu0
    %v3690 = vsel %vm241, %v3609, -inf
    %3691 = vmax.xlane.f32.xlu0 %v3690
    %v3692 = vpop.xlane.xlu0 %3691
    %v3693 = vsel %vm241, %v3687, -inf
    %3694 = vmax.xlane.f32.xlu0 %v3693
    %v3695 = vpop.xlane.xlu0 %3694
    %v3696 = vsub.f32 %v3609, %v3692
    %v3697 = vsub.f32 %v3687, %v3695
    %v3698 = vmul.f32 %v3696, 1.442695
    %v3699 = vpow.pop %v3698
    %v3700 = vmul.f32 %v3697, 1.442695
    %v3701 = vpow.pop %v3700
    %v3702 = vsel %vm241, %v3699, 0.0
    %3703 = vadd.xlane.f32.xlu0 %v3702
    %v3704 = vpop.xlane.xlu0 %3703
    %v3705 = vsel %vm241, %v3701, 0.0
    %3706 = vadd.xlane.f32.xlu0 %v3705
    %v3707 = vpop.xlane.xlu0 %3706
    %v3708 = vrcp.pop %v3704
    %v3709 = vmul.f32 %v3699, %v3708
    %v3710 = vrcp.pop %v3707
    %v3711 = vmul.f32 %v3701, %v3710
    %3712 = vrot.lane.b32.xlu0 %v2293, 40
    %v3713 = vpop.permute.xlu0 %3712
    %v3716 = vsel %vm241, %v3709, 0
    %3718 = vmatprep.subr.mxu0 0.0
    %3719 = vmatpush1.msra.mxu0 0.0
    %3720 = vmatprep.subr.mxu0 0.0
    %3721 = vmatpush1.msra.mxu0 0.0
    %3722 = vmatprep.subr.mxu0 0.0
    %3723 = vmatpush1.msra.mxu0 0.0
    %3724 = vmatprep.subr.mxu0 0.0
    %3725 = vmatpush1.msra.mxu0 0.0
    %3726 = vmatprep.subr.mxu0 0.0
    %3727 = vmatpush1.msra.mxu0 0.0
    %3728 = vmatprep.subr.mxu0 0.0
    %3729 = vmatpush1.msra.mxu0 0.0
    %3730 = vmatprep.subr.mxu0 0.0
    %3731 = vmatpush1.msra.mxu0 0.0
    %3732 = vmatprep.subr.mxu0 0.0
    %3733 = vmatpush1.msra.mxu0 0.0
    %3734 = vmatprep.subr.mxu0 0.0
    %3735 = vmatpush1.msra.mxu0 0.0
    %3736 = vmatprep.subr.mxu0 0.0
    %3737 = vmatpush1.msra.mxu0 0.0
    %3738 = vmatprep.subr.mxu0 0.0
    %3739 = vmatpush1.msra.mxu0 0.0
    %3740 = vmatprep.subr.mxu0 0.0
    %3741 = vmatpush1.msra.mxu0 0.0
    %3742 = vmatprep.subr.mxu0 0.0
    %3743 = vmatpush1.msra.mxu0 0.0
    %3744 = vmatprep.subr.mxu0 0.0
    %3745 = vmatpush1.msra.mxu0 0.0
    %3746 = vmatprep.subr.mxu0 0.0
    %3747 = vmatpush1.msra.mxu0 0.0
    %3748 = vmatprep.subr.mxu0 0.0
    %3749 = vmatpush1.msra.mxu0 %v3713
    %3750 = vmatprep.subr.mxu0 0.0
    %3751 = vmatpush2.msra.mxu0 0.0
    %3752 = vmatprep.subr.mxu0 0.0
    %3753 = vmatpush2.msra.mxu0 0.0
    %3754 = vmatprep.subr.mxu0 0.0
    %3755 = vmatpush2.msra.mxu0 0.0
    %3756 = vmatprep.subr.mxu0 0.0
    %3757 = vmatpush2.msra.mxu0 0.0
    %3758 = vmatprep.subr.mxu0 0.0
    %3759 = vmatpush2.msra.mxu0 0.0
    %3760 = vmatprep.subr.mxu0 0.0
    %3761 = vmatpush2.msra.mxu0 0.0
    %3762 = vmatprep.subr.mxu0 0.0
    %3763 = vmatpush2.msra.mxu0 0.0
    %3764 = vmatprep.subr.mxu0 0.0
    %3765 = vmatpush2.msra.mxu0 0.0
    %3766 = vmatprep.subr.mxu0 0.0
    %3767 = vmatpush2.msra.mxu0 0.0
    %3768 = vmatprep.subr.mxu0 0.0
    %3769 = vmatpush2.msra.mxu0 0.0
    %3770 = vmatprep.subr.mxu0 0.0
    %3771 = vmatpush2.msra.mxu0 0.0
    %3772 = vmatprep.subr.mxu0 0.0
    %3773 = vmatpush2.msra.mxu0 0.0
    %3774 = vmatprep.subr.mxu0 0.0
    %3775 = vmatpush2.msra.mxu0 0.0
    %3776 = vmatprep.subr.mxu0 0.0
    %3777 = vmatpush2.msra.mxu0 0.0
    %3778 = vmatprep.subr.mxu0 0.0
    %3779 = vmatpush2.msra.mxu0 0.0
    %3780 = vmatprep.subr.mxu0 0.0
    %3781 = vmatpush2.msra.mxu0 0.0
    %3782 = vmatprep.mubr.f32.mxu0 0.0
    %3783 = vmatmul.mubr.f32.gmra.mxu0 %v3716
    %v3784 = vpop.f32.mrf.mxu0
    %v3785 = vadd.f32 0.0, %v3784
    %v3786 = vpop.f32.mrf.mxu0
    %3787 = vdwg.mxu0
    %3788 = vrot.lane.b32.xlu0 %v2298, 40
    %v3789 = vpop.permute.xlu0 %3788
    %v3792 = vsel %vm241, %v3711, 0
    %3794 = vmatprep.subr.mxu0 0.0
    %3795 = vmatpush1.msra.mxu0 0.0
    %3796 = vmatprep.subr.mxu0 0.0
    %3797 = vmatpush1.msra.mxu0 0.0
    %3798 = vmatprep.subr.mxu0 0.0
    %3799 = vmatpush1.msra.mxu0 0.0
    %3800 = vmatprep.subr.mxu0 0.0
    %3801 = vmatpush1.msra.mxu0 0.0
    %3802 = vmatprep.subr.mxu0 0.0
    %3803 = vmatpush1.msra.mxu0 0.0
    %3804 = vmatprep.subr.mxu0 0.0
    %3805 = vmatpush1.msra.mxu0 0.0
    %3806 = vmatprep.subr.mxu0 0.0
    %3807 = vmatpush1.msra.mxu0 0.0
    %3808 = vmatprep.subr.mxu0 0.0
    %3809 = vmatpush1.msra.mxu0 0.0
    %3810 = vmatprep.subr.mxu0 0.0
    %3811 = vmatpush1.msra.mxu0 0.0
    %3812 = vmatprep.subr.mxu0 0.0
    %3813 = vmatpush1.msra.mxu0 0.0
    %3814 = vmatprep.subr.mxu0 0.0
    %3815 = vmatpush1.msra.mxu0 0.0
    %3816 = vmatprep.subr.mxu0 0.0
    %3817 = vmatpush1.msra.mxu0 0.0
    %3818 = vmatprep.subr.mxu0 0.0
    %3819 = vmatpush1.msra.mxu0 0.0
    %3820 = vmatprep.subr.mxu0 0.0
    %3821 = vmatpush1.msra.mxu0 0.0
    %3822 = vmatprep.subr.mxu0 0.0
    %3823 = vmatpush1.msra.mxu0 0.0
    %3824 = vmatprep.subr.mxu0 0.0
    %3825 = vmatpush1.msra.mxu0 %v3789
    %3826 = vmatprep.subr.mxu0 0.0
    %3827 = vmatpush2.msra.mxu0 0.0
    %3828 = vmatprep.subr.mxu0 0.0
    %3829 = vmatpush2.msra.mxu0 0.0
    %3830 = vmatprep.subr.mxu0 0.0
    %3831 = vmatpush2.msra.mxu0 0.0
    %3832 = vmatprep.subr.mxu0 0.0
    %3833 = vmatpush2.msra.mxu0 0.0
    %3834 = vmatprep.subr.mxu0 0.0
    %3835 = vmatpush2.msra.mxu0 0.0
    %3836 = vmatprep.subr.mxu0 0.0
    %3837 = vmatpush2.msra.mxu0 0.0
    %3838 = vmatprep.subr.mxu0 0.0
    %3839 = vmatpush2.msra.mxu0 0.0
    %3840 = vmatprep.subr.mxu0 0.0
    %3841 = vmatpush2.msra.mxu0 0.0
    %3842 = vmatprep.subr.mxu0 0.0
    %3843 = vmatpush2.msra.mxu0 0.0
    %3844 = vmatprep.subr.mxu0 0.0
    %3845 = vmatpush2.msra.mxu0 0.0
    %3846 = vmatprep.subr.mxu0 0.0
    %3847 = vmatpush2.msra.mxu0 0.0
    %3848 = vmatprep.subr.mxu0 0.0
    %3849 = vmatpush2.msra.mxu0 0.0
    %3850 = vmatprep.subr.mxu0 0.0
    %3851 = vmatpush2.msra.mxu0 0.0
    %3852 = vmatprep.subr.mxu0 0.0
    %3853 = vmatpush2.msra.mxu0 0.0
    %3854 = vmatprep.subr.mxu0 0.0
    %3855 = vmatpush2.msra.mxu0 0.0
    %3856 = vmatprep.subr.mxu0 0.0
    %3857 = vmatpush2.msra.mxu0 0.0
    %3858 = vmatprep.mubr.f32.mxu0 0.0
    %3859 = vmatmul.mubr.f32.gmra.mxu0 %v3792
    %v3860 = vpop.f32.mrf.mxu0
    %v3861 = vadd.f32 0.0, %v3860
    %v3862 = vpop.f32.mrf.mxu0
    %3863 = vdwg.mxu0
    %v3865 = vsel %vm241, %v3785, 0
    %v3868 = vsel %vm241, %v3861, 0
    %3870 = vmatprep.subr.mxu0 0.0
    %3871 = vmatpush1.msra.mxu0 0.0
    %3872 = vmatprep.subr.mxu0 0.0
    %3873 = vmatpush1.msra.mxu0 0.0
    %3874 = vmatprep.subr.mxu0 0.0
    %3875 = vmatpush1.msra.mxu0 0.0
    %3876 = vmatprep.subr.mxu0 0.0
    %3877 = vmatpush1.msra.mxu0 0.0
    %3878 = vmatprep.subr.mxu0 0.0
    %3879 = vmatpush1.msra.mxu0 0.0
    %3880 = vmatprep.subr.mxu0 0.0
    %3881 = vmatpush1.msra.mxu0 0.0
    %3882 = vmatprep.subr.mxu0 0.0
    %3883 = vmatpush1.msra.mxu0 0.0
    %3884 = vmatprep.subr.mxu0 0.0
    %3885 = vmatpush1.msra.mxu0 0.0
    %3886 = vmatprep.subr.mxu0 0.0
    %3887 = vmatpush1.msra.mxu0 0.0
    %3888 = vmatprep.subr.mxu0 0.0
    %3889 = vmatpush1.msra.mxu0 0.0
    %3890 = vmatprep.subr.mxu0 0.0
    %3891 = vmatpush1.msra.mxu0 0.0
    %3892 = vmatprep.subr.mxu0 0.0
    %3893 = vmatpush1.msra.mxu0 0.0
    %3894 = vmatprep.subr.mxu0 0.0
    %3895 = vmatpush1.msra.mxu0 0.0
    %3896 = vmatprep.subr.mxu0 0.0
    %3897 = vmatpush1.msra.mxu0 0.0
    %3898 = vmatprep.subr.mxu0 0.0
    %3899 = vmatpush1.msra.mxu0 0.0
    %3900 = vmatprep.subr.mxu0 0.0
    %3901 = vmatpush1.msra.mxu0 %v2185
    %3902 = vmatprep.subr.mxu0 0.0
    %3903 = vmatpush2.msra.mxu0 0.0
    %3904 = vmatprep.subr.mxu0 0.0
    %3905 = vmatpush2.msra.mxu0 0.0
    %3906 = vmatprep.subr.mxu0 0.0
    %3907 = vmatpush2.msra.mxu0 0.0
    %3908 = vmatprep.subr.mxu0 0.0
    %3909 = vmatpush2.msra.mxu0 0.0
    %3910 = vmatprep.subr.mxu0 0.0
    %3911 = vmatpush2.msra.mxu0 0.0
    %3912 = vmatprep.subr.mxu0 0.0
    %3913 = vmatpush2.msra.mxu0 0.0
    %3914 = vmatprep.subr.mxu0 0.0
    %3915 = vmatpush2.msra.mxu0 0.0
    %3916 = vmatprep.subr.mxu0 0.0
    %3917 = vmatpush2.msra.mxu0 0.0
    %3918 = vmatprep.subr.mxu0 0.0
    %3919 = vmatpush2.msra.mxu0 0.0
    %3920 = vmatprep.subr.mxu0 0.0
    %3921 = vmatpush2.msra.mxu0 0.0
    %3922 = vmatprep.subr.mxu0 0.0
    %3923 = vmatpush2.msra.mxu0 0.0
    %3924 = vmatprep.subr.mxu0 0.0
    %3925 = vmatpush2.msra.mxu0 0.0
    %3926 = vmatprep.subr.mxu0 0.0
    %3927 = vmatpush2.msra.mxu0 0.0
    %3928 = vmatprep.subr.mxu0 0.0
    %3929 = vmatpush2.msra.mxu0 0.0
    %3930 = vmatprep.subr.mxu0 0.0
    %3931 = vmatpush2.msra.mxu0 0.0
    %3932 = vmatprep.subr.mxu0 0.0
    %3933 = vmatpush2.msra.mxu0 0.0
    %3934 = vmatprep.mubr.f32.mxu0 0.0
    %3935 = vmatmul.mubr.f32.gmra.mxu0 %v3865
    %v3936 = vpop.f32.mrf.mxu0
    %v3937 = vadd.f32 0.0, %v3936
    %v3938 = vpop.f32.mrf.mxu0
    %3939 = vmatprep.mubr.f32.mxu0 0.0
    %3940 = vmatmul.mubr.f32.gmra.mxu0 %v3868
    %v3941 = vpop.f32.mrf.mxu0
    %v3942 = vadd.f32 0.0, %v3941
    %v3943 = vpop.f32.mrf.mxu0
    %3944 = vdwg.mxu0
    %v3945 = vadd.f32 %v3532, %v3937
    %v3946 = vadd.f32 %v3533, %v3942
    %v3947 = vadd.f32 %v2172, %v3945
    %v3948 = vadd.f32 %v2173, %v3946
    %v3950 = vlaneseq
    %v3951 = vshrl.u32 %v3950, 7
    %v3952 = vsub.s32 0, %v3951
    %v3953 = vrot.slane %v2187, %v3952
    %v3955 = vadd.f32 %v3947, %v3953
    %v3956 = vadd.f32 %v3948, %v3953
    %v3957 = vsel %vm79, %v3955, 0.0
    %3958 = vadd.xlane.f32.xlu0 %v3957
    %v3959 = vpop.xlane.xlu0 %3958
    %v3960 = vsel %vm79, %v3956, 0.0
    %3961 = vadd.xlane.f32.xlu0 %v3960
    %v3962 = vpop.xlane.xlu0 %3961
    %v3963 = vmul.f32 %v3959, %v86
    %v3964 = vmul.f32 %v3962, %v86
    %v3965 = vsub.f32 %v3955, %v3963
    %v3966 = vsub.f32 %v3956, %v3964
    %v3967 = vmul.f32 %v3965, %v3965
    %v3968 = vmul.f32 %v3966, %v3966
    %v3969 = vsel %vm79, %v3967, 0.0
    %3970 = vadd.xlane.f32.xlu0 %v3969
    %v3971 = vpop.xlane.xlu0 %3970
    %v3972 = vsel %vm79, %v3968, 0.0
    %3973 = vadd.xlane.f32.xlu0 %v3972
    %v3974 = vpop.xlane.xlu0 %3973
    %v3975 = vmul.f32 %v3971, %v86
    %v3976 = vmul.f32 %v3974, %v86
    %v3977 = vadd.f32 %v3975, 1e-12
    %v3978 = vadd.f32 %v3976, 1e-12
    %v3979 = vrsqrt.pop %v3977
    %v3980 = vrsqrt.pop %v3978
    %v3981 = vmul.f32 %v3965, %v3979
    %v3982 = vmul.f32 %v3966, %v3980
    %v3984 = vlaneseq
    %v3985 = vshrl.u32 %v3984, 7
    %v3986 = vsub.s32 0, %v3985
    %v3987 = vrot.slane %v2189, %v3986
    %v3989 = vmul.f32 %v3981, %v3987
    %v3990 = vmul.f32 %v3982, %v3987
    %v3992 = vlaneseq
    %v3993 = vshrl.u32 %v3992, 7
    %v3994 = vsub.s32 0, %v3993
    %v3995 = vrot.slane %v2191, %v3994
    %v3997 = vadd.f32 %v3989, %v3995
    %v3998 = vadd.f32 %v3990, %v3995
    %v4000 = vlaneseq
    %v4001 = vshrl.u32 %v4000, 7
    %v4002 = vsub.s32 0, %v4001
    %v4003 = vrot.slane %v2198, %v4002
    %v4006 = vsel %vm79, %v3997, 0
    %v4009 = vsel %vm79, %v3998, 0
    %4011 = vmatprep.subr.mxu0 0.0
    %4012 = vmatpush1.msra.mxu0 0.0
    %4013 = vmatprep.subr.mxu0 0.0
    %4014 = vmatpush1.msra.mxu0 0.0
    %4015 = vmatprep.subr.mxu0 0.0
    %4016 = vmatpush1.msra.mxu0 0.0
    %4017 = vmatprep.subr.mxu0 0.0
    %4018 = vmatpush1.msra.mxu0 0.0
    %4019 = vmatprep.subr.mxu0 0.0
    %4020 = vmatpush1.msra.mxu0 0.0
    %4021 = vmatprep.subr.mxu0 0.0
    %4022 = vmatpush1.msra.mxu0 0.0
    %4023 = vmatprep.subr.mxu0 0.0
    %4024 = vmatpush1.msra.mxu0 0.0
    %4025 = vmatprep.subr.mxu0 0.0
    %4026 = vmatpush1.msra.mxu0 0.0
    %4027 = vmatprep.subr.mxu0 0.0
    %4028 = vmatpush1.msra.mxu0 0.0
    %4029 = vmatprep.subr.mxu0 0.0
    %4030 = vmatpush1.msra.mxu0 0.0
    %4031 = vmatprep.subr.mxu0 0.0
    %4032 = vmatpush1.msra.mxu0 0.0
    %4033 = vmatprep.subr.mxu0 0.0
    %4034 = vmatpush1.msra.mxu0 0.0
    %4035 = vmatprep.subr.mxu0 0.0
    %4036 = vmatpush1.msra.mxu0 %v2196
    %4037 = vmatprep.subr.mxu0 0.0
    %4038 = vmatpush1.msra.mxu0 %v2195
    %4039 = vmatprep.subr.mxu0 0.0
    %4040 = vmatpush1.msra.mxu0 %v2194
    %4041 = vmatprep.subr.mxu0 0.0
    %4042 = vmatpush1.msra.mxu0 %v2193
    %4043 = vmatprep.subr.mxu0 0.0
    %4044 = vmatpush2.msra.mxu0 0.0
    %4045 = vmatprep.subr.mxu0 0.0
    %4046 = vmatpush2.msra.mxu0 0.0
    %4047 = vmatprep.subr.mxu0 0.0
    %4048 = vmatpush2.msra.mxu0 0.0
    %4049 = vmatprep.subr.mxu0 0.0
    %4050 = vmatpush2.msra.mxu0 0.0
    %4051 = vmatprep.subr.mxu0 0.0
    %4052 = vmatpush2.msra.mxu0 0.0
    %4053 = vmatprep.subr.mxu0 0.0
    %4054 = vmatpush2.msra.mxu0 0.0
    %4055 = vmatprep.subr.mxu0 0.0
    %4056 = vmatpush2.msra.mxu0 0.0
    %4057 = vmatprep.subr.mxu0 0.0
    %4058 = vmatpush2.msra.mxu0 0.0
    %4059 = vmatprep.subr.mxu0 0.0
    %4060 = vmatpush2.msra.mxu0 0.0
    %4061 = vmatprep.subr.mxu0 0.0
    %4062 = vmatpush2.msra.mxu0 0.0
    %4063 = vmatprep.subr.mxu0 0.0
    %4064 = vmatpush2.msra.mxu0 0.0
    %4065 = vmatprep.subr.mxu0 0.0
    %4066 = vmatpush2.msra.mxu0 0.0
    %4067 = vmatprep.subr.mxu0 0.0
    %4068 = vmatpush2.msra.mxu0 0.0
    %4069 = vmatprep.subr.mxu0 0.0
    %4070 = vmatpush2.msra.mxu0 0.0
    %4071 = vmatprep.subr.mxu0 0.0
    %4072 = vmatpush2.msra.mxu0 0.0
    %4073 = vmatprep.subr.mxu0 0.0
    %4074 = vmatpush2.msra.mxu0 0.0
    %4075 = vmatprep.mubr.f32.mxu0 0.0
    %4076 = vmatmul.mubr.f32.gmra.mxu0 %v4006
    %v4077 = vpop.f32.mrf.mxu0
    %v4078 = vadd.f32 %v4003, %v4077
    %v4079 = vpop.f32.mrf.mxu0
    %4080 = vmatprep.mubr.f32.mxu0 0.0
    %4081 = vmatmul.mubr.f32.gmra.mxu0 %v4009
    %v4082 = vpop.f32.mrf.mxu0
    %v4083 = vadd.f32 %v4003, %v4082
    %v4084 = vpop.f32.mrf.mxu0
    %4085 = vdwg.mxu0
    %v4086 = vmul.f32 %v4078, %v4078
    %v4087 = vmul.f32 %v4083, %v4083
    %v4088 = vmul.f32 %v4078, %v4086
    %v4089 = vmul.f32 %v4083, %v4087
    %v4090 = vmul.f32 %v4088, 0.044715
    %v4091 = vmul.f32 %v4089, 0.044715
    %v4092 = vadd.f32 %v4078, %v4090
    %v4093 = vadd.f32 %v4083, %v4091
    %v4094 = vmul.f32 %v4092, 0.7978846
    %v4095 = vmul.f32 %v4093, 0.7978846
    %v4096 = vtanh.pop %v4094
    %v4097 = vtanh.pop %v4095
    %v4098 = vadd.f32 %v4096, 1.0
    %v4099 = vadd.f32 %v4097, 1.0
    %v4100 = vmul.f32 %v4098, 0.5
    %v4101 = vmul.f32 %v4099, 0.5
    %v4102 = vmul.f32 %v4078, %v4100
    %v4103 = vmul.f32 %v4083, %v4101
    %v4105 = vlaneseq
    %v4106 = vshrl.u32 %v4105, 7
    %v4107 = vsub.s32 0, %v4106
    %v4108 = vrot.slane %v2209, %v4107
    %v4111 = vsel %vm2048, %v4102, 0
    %v4114 = vsel %vm2048, %v4103, 0
    %4116 = vmatprep.subr.mxu0 0.0
    %4117 = vmatpush1.msra.mxu0 0.0
    %4118 = vmatprep.subr.mxu0 0.0
    %4119 = vmatpush1.msra.mxu0 0.0
    %4120 = vmatprep.subr.mxu0 0.0
    %4121 = vmatpush1.msra.mxu0 0.0
    %4122 = vmatprep.subr.mxu0 0.0
    %4123 = vmatpush1.msra.mxu0 0.0
    %4124 = vmatprep.subr.mxu0 0.0
    %4125 = vmatpush1.msra.mxu0 0.0
    %4126 = vmatprep.subr.mxu0 0.0
    %4127 = vmatpush1.msra.mxu0 0.0
    %4128 = vmatprep.subr.mxu0 0.0
    %4129 = vmatpush1.msra.mxu0 0.0
    %4130 = vmatprep.subr.mxu0 0.0
    %4131 = vmatpush1.msra.mxu0 0.0
    %4132 = vmatprep.subr.mxu0 0.0
    %4133 = vmatpush1.msra.mxu0 %v2207
    %4134 = vmatprep.subr.mxu0 0.0
    %4135 = vmatpush1.msra.mxu0 %v2206
    %4136 = vmatprep.subr.mxu0 0.0
    %4137 = vmatpush1.msra.mxu0 %v2205
    %4138 = vmatprep.subr.mxu0 0.0
    %4139 = vmatpush1.msra.mxu0 %v2204
    %4140 = vmatprep.subr.mxu0 0.0
    %4141 = vmatpush1.msra.mxu0 %v2203
    %4142 = vmatprep.subr.mxu0 0.0
    %4143 = vmatpush1.msra.mxu0 %v2202
    %4144 = vmatprep.subr.mxu0 0.0
    %4145 = vmatpush1.msra.mxu0 %v2201
    %4146 = vmatprep.subr.mxu0 0.0
    %4147 = vmatpush1.msra.mxu0 %v2200
    %4148 = vmatprep.subr.mxu0 0.0
    %4149 = vmatpush2.msra.mxu0 0.0
    %4150 = vmatprep.subr.mxu0 0.0
    %4151 = vmatpush2.msra.mxu0 0.0
    %4152 = vmatprep.subr.mxu0 0.0
    %4153 = vmatpush2.msra.mxu0 0.0
    %4154 = vmatprep.subr.mxu0 0.0
    %4155 = vmatpush2.msra.mxu0 0.0
    %4156 = vmatprep.subr.mxu0 0.0
    %4157 = vmatpush2.msra.mxu0 0.0
    %4158 = vmatprep.subr.mxu0 0.0
    %4159 = vmatpush2.msra.mxu0 0.0
    %4160 = vmatprep.subr.mxu0 0.0
    %4161 = vmatpush2.msra.mxu0 0.0
    %4162 = vmatprep.subr.mxu0 0.0
    %4163 = vmatpush2.msra.mxu0 0.0
    %4164 = vmatprep.subr.mxu0 0.0
    %4165 = vmatpush2.msra.mxu0 0.0
    %4166 = vmatprep.subr.mxu0 0.0
    %4167 = vmatpush2.msra.mxu0 0.0
    %4168 = vmatprep.subr.mxu0 0.0
    %4169 = vmatpush2.msra.mxu0 0.0
    %4170 = vmatprep.subr.mxu0 0.0
    %4171 = vmatpush2.msra.mxu0 0.0
    %4172 = vmatprep.subr.mxu0 0.0
    %4173 = vmatpush2.msra.mxu0 0.0
    %4174 = vmatprep.subr.mxu0 0.0
    %4175 = vmatpush2.msra.mxu0 0.0
    %4176 = vmatprep.subr.mxu0 0.0
    %4177 = vmatpush2.msra.mxu0 0.0
    %4178 = vmatprep.subr.mxu0 0.0
    %4179 = vmatpush2.msra.mxu0 0.0
    %4180 = vmatprep.mubr.f32.mxu0 0.0
    %4181 = vmatmul.mubr.f32.gmra.mxu0 %v4111
    %v4182 = vpop.f32.mrf.mxu0
    %v4183 = vadd.f32 %v4108, %v4182
    %v4184 = vpop.f32.mrf.mxu0
    %4185 = vmatprep.mubr.f32.mxu0 0.0
    %4186 = vmatmul.mubr.f32.gmra.mxu0 %v4114
    %v4187 = vpop.f32.mrf.mxu0
    %v4188 = vadd.f32 %v4108, %v4187
    %v4189 = vpop.f32.mrf.mxu0
    %4190 = vdwg.mxu0
    %v4191 = vadd.f32 %v3997, %v4183
    %v4192 = vadd.f32 %v3998, %v4188
    %v4193 = vsel %vm79, %v4191, 0.0
    %4194 = vadd.xlane.f32.xlu0 %v4193
    %v4195 = vpop.xlane.xlu0 %4194
    %v4196 = vsel %vm79, %v4192, 0.0
    %4197 = vadd.xlane.f32.xlu0 %v4196
    %v4198 = vpop.xlane.xlu0 %4197
    %v4199 = vmul.f32 %v4195, %v86
    %v4200 = vmul.f32 %v4198, %v86
    %v4201 = vsub.f32 %v4191, %v4199
    %v4202 = vsub.f32 %v4192, %v4200
    %v4203 = vmul.f32 %v4201, %v4201
    %v4204 = vmul.f32 %v4202, %v4202
    %v4205 = vsel %vm79, %v4203, 0.0
    %4206 = vadd.xlane.f32.xlu0 %v4205
    %v4207 = vpop.xlane.xlu0 %4206
    %v4208 = vsel %vm79, %v4204, 0.0
    %4209 = vadd.xlane.f32.xlu0 %v4208
    %v4210 = vpop.xlane.xlu0 %4209
    %v4211 = vmul.f32 %v4207, %v86
    %v4212 = vmul.f32 %v4210, %v86
    %v4213 = vadd.f32 %v4211, 1e-12
    %v4214 = vadd.f32 %v4212, 1e-12
    %v4215 = vrsqrt.pop %v4213
    %v4216 = vrsqrt.pop %v4214
    %v4217 = vmul.f32 %v4201, %v4215
    %v4218 = vmul.f32 %v4202, %v4216
    %v4220 = vlaneseq
    %v4221 = vshrl.u32 %v4220, 7
    %v4222 = vsub.s32 0, %v4221
    %v4223 = vrot.slane %v2211, %v4222
    %v4225 = vmul.f32 %v4217, %v4223
    %v4226 = vmul.f32 %v4218, %v4223
    %v4228 = vlaneseq
    %v4229 = vshrl.u32 %v4228, 7
    %v4230 = vsub.s32 0, %v4229
    %v4231 = vrot.slane %v2213, %v4230
    %v4233 = vadd.f32 %v4225, %v4231
    %v4234 = vadd.f32 %v4226, %v4231
    %v4235 = vtanh.pop %v4233
    %v4236 = vtanh.pop %v4234
    %v4237 = vld [vmem:[%s16] sm:$0xff]
    %v4238 = vld [vmem:[%s16 + $0x8] sm:$0xff]
    %v4239 = vld [vmem:[%s16 + $0x10] sm:$0xff]
    %v4240 = vld [vmem:[%s16 + $0x18] sm:$0xff]
    %v4241 = vld [vmem:[%s17] sm:$0x1]
    %v4243 = vlaneseq
    %v4244 = vshrl.u32 %v4243, 7
    %v4245 = vsub.s32 0, %v4244
    %v4246 = vrot.slane %v4241, %v4245
    %v4250 = vrot.slane %v4236, 7
    %vm4251 = vcmask 1041409
    %v4252 = vsel %vm4251, %v4250, %v4235
    %v4253 = vsel %vm79, %v4252, 0
    %4255 = vmatprep.subr.mxu0 0.0
    %4256 = vmatpush1.msra.mxu0 0.0
    %4257 = vmatprep.subr.mxu0 0.0
    %4258 = vmatpush1.msra.mxu0 0.0
    %4259 = vmatprep.subr.mxu0 0.0
    %4260 = vmatpush1.msra.mxu0 0.0
    %4261 = vmatprep.subr.mxu0 0.0
    %4262 = vmatpush1.msra.mxu0 0.0
    %4263 = vmatprep.subr.mxu0 0.0
    %4264 = vmatpush1.msra.mxu0 0.0
    %4265 = vmatprep.subr.mxu0 0.0
    %4266 = vmatpush1.msra.mxu0 0.0
    %4267 = vmatprep.subr.mxu0 0.0
    %4268 = vmatpush1.msra.mxu0 0.0
    %4269 = vmatprep.subr.mxu0 0.0
    %4270 = vmatpush1.msra.mxu0 0.0
    %4271 = vmatprep.subr.mxu0 0.0
    %4272 = vmatpush1.msra.mxu0 0.0
    %4273 = vmatprep.subr.mxu0 0.0
    %4274 = vmatpush1.msra.mxu0 0.0
    %4275 = vmatprep.subr.mxu0 0.0
    %4276 = vmatpush1.msra.mxu0 0.0
    %4277 = vmatprep.subr.mxu0 0.0
    %4278 = vmatpush1.msra.mxu0 0.0
    %4279 = vmatprep.subr.mxu0 0.0
    %4280 = vmatpush1.msra.mxu0 %v4240
    %4281 = vmatprep.subr.mxu0 0.0
    %4282 = vmatpush1.msra.mxu0 %v4239
    %4283 = vmatprep.subr.mxu0 0.0
    %4284 = vmatpush1.msra.mxu0 %v4238
    %4285 = vmatprep.subr.mxu0 0.0
    %4286 = vmatpush1.msra.mxu0 %v4237
    %4287 = vmatprep.subr.mxu0 0.0
    %4288 = vmatpush2.msra.mxu0 0.0
    %4289 = vmatprep.subr.mxu0 0.0
    %4290 = vmatpush2.msra.mxu0 0.0
    %4291 = vmatprep.subr.mxu0 0.0
    %4292 = vmatpush2.msra.mxu0 0.0
    %4293 = vmatprep.subr.mxu0 0.0
    %4294 = vmatpush2.msra.mxu0 0.0
    %4295 = vmatprep.subr.mxu0 0.0
    %4296 = vmatpush2.msra.mxu0 0.0
    %4297 = vmatprep.subr.mxu0 0.0
    %4298 = vmatpush2.msra.mxu0 0.0
    %4299 = vmatprep.subr.mxu0 0.0
    %4300 = vmatpush2.msra.mxu0 0.0
    %4301 = vmatprep.subr.mxu0 0.0
    %4302 = vmatpush2.msra.mxu0 0.0
    %4303 = vmatprep.subr.mxu0 0.0
    %4304 = vmatpush2.msra.mxu0 0.0
    %4305 = vmatprep.subr.mxu0 0.0
    %4306 = vmatpush2.msra.mxu0 0.0
    %4307 = vmatprep.subr.mxu0 0.0
    %4308 = vmatpush2.msra.mxu0 0.0
    %4309 = vmatprep.subr.mxu0 0.0
    %4310 = vmatpush2.msra.mxu0 0.0
    %4311 = vmatprep.subr.mxu0 0.0
    %4312 = vmatpush2.msra.mxu0 0.0
    %4313 = vmatprep.subr.mxu0 0.0
    %4314 = vmatpush2.msra.mxu0 0.0
    %4315 = vmatprep.subr.mxu0 0.0
    %4316 = vmatpush2.msra.mxu0 0.0
    %4317 = vmatprep.subr.mxu0 0.0
    %4318 = vmatpush2.msra.mxu0 0.0
    %4319 = vmatprep.mubr.f32.mxu0 0.0
    %4320 = vmatmul.mubr.f32.gmra.mxu0 %v4253
    %v4321 = vpop.f32.mrf.mxu0
    %v4322 = vadd.f32 %v4246, %v4321
    %v4323 = vpop.f32.mrf.mxu0
    %4324 = vdwg.mxu0
    %vm4325 = vcmask 25600
    %4326 = vst.msk [vmem:[#allocation5] sm:$0x3] %vm4325, %v4322
    // Predicated region
    $region78: #{tpu_custom_call.1} parent=1 // pred_check
      _
    $region79: #{tpu_custom_call.1} parent=1 // pred_check_branch
      %4328 = sbr.rel (0) target = $region81
    $region80: #{tpu_custom_call.1} parent=1 // pred_region
      %s4330 = ssub.s32 32, 32
      %4331 = vsyncadd [#allocation4], %s4330
      %s4333 = sshll.u32 [#allocation5], 4
      %s4334 = int_to_ptr.vmem [resolvable:$true] %s4333
      %4336 = dma.vmem_to_hbm [thread:$0]  %s4334, 32, %s18, [#allocation4]
    $region81: #{tpu_custom_call.1} parent=1 // pred_fallthru
      _
    // Predicated region
    $region82: #{tpu_custom_call.1} parent=1 // pred_check
      _
    $region83: #{tpu_custom_call.1} parent=1 // pred_check_branch
      %4338 = sbr.rel (0) target = $region85
    $region84: #{tpu_custom_call.1} parent=1 // pred_region
      %4339 = dma.done [#allocation4], 32
    $region85: #{tpu_custom_call.1} parent=1 // pred_fallthru
      _
    %4340 = vsyncpa [#allocation3], 1
    %4341 = vsyncpa [#allocation4], 1

</llo_original>
